<compile_context>
chip_gen: v6e
topology: v6e:2x2x1
jax: 0.10.0
libtpu: 0.0.40
codegen_flags: <defaults>
</compile_context>

<pallas_src>
import numpy as np
import jax
import jax.numpy as jnp
from jax.experimental import pallas as pl
from jax.experimental.pallas import tpu as pltpu

VMIN, VMAX, N = -5.0, 5.0, 100   # module defaults
LANES = 128
SUBLANES = 8


def _pwl_kernel(eps_ref, pts_ref, k_ref, c_ref, o_ref):
    """eps_ref: (rows, 128) f32 VMEM; pts_ref: (n,) f32 SMEM; k_ref/c_ref: (n+1,) f32 SMEM."""
    eps = eps_ref[...]                                   # (rows, 128) f32
    n = pts_ref.shape[0]

    # index = #{j : eps >= points[j]}  — exact compare-count, matches the PyTorch forward.
    idx = jnp.zeros(eps.shape, jnp.int32)
    for j in range(n):                                   # static unroll, scalar SMEM reads
        idx = idx + (eps >= pts_ref[j]).astype(jnp.int32)

    # Gather k[idx], c[idx] via a select-scan over the (n+1)-entry tables.
    k_sel = jnp.zeros_like(eps)
    c_sel = jnp.zeros_like(eps)
    for i in range(n + 1):                               # static unroll
        hit = idx == i
        k_sel = jnp.where(hit, k_ref[i], k_sel)
        c_sel = jnp.where(hit, c_ref[i], c_sel)

    # o = (eps - points[start]) * k + delta_bias[start]  ==  eps * k + c
    o_ref[...] = eps * k_sel + c_sel


def _build_tables(p, b, points, vmin, vmax):
    """Per-segment slope k[i] and intercept c[i], indexed by the compare-count index."""
    p = p.reshape(-1).astype(jnp.float32)                # (n+1,)
    pts = points.reshape(-1).astype(jnp.float32)         # (n,)
    b = jnp.reshape(jnp.asarray(b, jnp.float32), (1,))   # (1,)
    n = pts.shape[0]

    k_tab = jnp.exp(p) + 0.001                           # (n+1,)  to_positive(p)
    int_length = (vmax - vmin) / (n - 1)
    delta_bias = jnp.concatenate(
        [b, b + jnp.cumsum(int_length * k_tab[1:n])])    # (n,)  serial recurrence as cumsum
    start = jnp.maximum(jnp.arange(n + 1) - 1, 0)        # (n+1,)
    c_tab = delta_bias[start] - pts[start] * k_tab       # (n+1,) intercept per index
    return pts, k_tab, c_tab


def invertible_pwl_forward(eps, p, b, points, *, vmin=VMIN, vmax=VMAX, block_rows=64):
    """eps: (B, 1) f32; p: (n+1,) f32; b: (1,) f32; points: (1, n) or (n,) f32 -> (B, 1) f32."""
    B = eps.shape[0]
    pts, k_tab, c_tab = _build_tables(p, b, points, vmin, vmax)

    # Lane-dense layout: flatten to rows of 128 lanes, pad to a whole number of blocks.
    eps_flat = eps.reshape(-1).astype(jnp.float32)
    rows = pl.cdiv(B, LANES)
    block_rows = max(SUBLANES,
                     min(block_rows, ((rows + SUBLANES - 1) // SUBLANES) * SUBLANES))
    grid = pl.cdiv(rows, block_rows)
    total = grid * block_rows * LANES
    eps2d = jnp.pad(eps_flat, (0, total - B)).reshape(grid * block_rows, LANES)

    out2d = pl.pallas_call(
        _pwl_kernel,
        out_shape=jax.ShapeDtypeStruct((grid * block_rows, LANES), jnp.float32),
        grid=(grid,),
        in_specs=[
            pl.BlockSpec((block_rows, LANES), lambda i: (i, 0)),        # eps tile (VMEM)
            pl.BlockSpec(memory_space=pltpu.MemorySpace.SMEM),          # points table
            pl.BlockSpec(memory_space=pltpu.MemorySpace.SMEM),          # slope table k
            pl.BlockSpec(memory_space=pltpu.MemorySpace.SMEM),          # intercept table c
        ],
        out_specs=pl.BlockSpec((block_rows, LANES), lambda i: (i, 0)),
        compiler_params=pltpu.CompilerParams(dimension_semantics=("parallel",)),
    )(eps2d, pts, k_tab, c_tab)

    return out2d.reshape(-1)[:B].reshape(B, 1)


def _reference(eps, p, b, points, vmin=VMIN, vmax=VMAX):
    """Pure-JAX replica of the PyTorch forward, for verification."""
    points = points.reshape(-1)
    n = points.shape[-1]
    int_length = (vmax - vmin) / (n - 1)
    delta_h = int_length * (jnp.exp(p[1:n]) + 0.001)
    delta_bias = jnp.concatenate([b.reshape(1), b.reshape(1) + jnp.cumsum(delta_h)])
    index = jnp.sum((eps - points.reshape(1, n) >= 0).astype(jnp.int32), axis=1)
    start = jnp.maximum(index - 1, 0)
    db = delta_bias[start]
    spt = points[start]
    k = jnp.exp(p[index]) + 0.001
    return (eps - spt[:, None]) * k[:, None] + db[:, None]


# TODO(synk): only forward() is implemented; inverse() (same structure, o -> eps) was not requested.

if __name__ == "__main__":
    key = jax.random.PRNGKey(0)
    k_p, k_b, k_eps = jax.random.split(key, 3)

    # Deterministic parameter init matching the module's __init__ shapes:
    #   p ~ randn(n+1)/5, b ~ randn(1)+vmin, points = linspace(vmin, vmax, n).view(1, n)
    p = jax.random.normal(k_p, (N + 1,), jnp.float32) / 5.0
    b = jax.random.normal(k_b, (1,), jnp.float32) + VMIN
    points = jnp.asarray(np.linspace(VMIN, VMAX, N).astype(np.float32)).reshape(1, N)

    B = 256
    eps = jax.random.normal(k_eps, (B, 1), jnp.float32) * 3.0  # spread over [vmin, vmax]

    out = invertible_pwl_forward(eps, p, b, points)
    out = jax.block_until_ready(out)

    ref = jax.block_until_ready(_reference(eps, p, b, points))
    np.testing.assert_allclose(np.asarray(out), np.asarray(ref), rtol=1e-5, atol=2e-5)

    print("KERNEL_OK")
</pallas_src>

<mosaic_0001>
module attributes {stable_mosaic.version = 11 : i64} {
  func.func @_pwl_kernel(%arg0: i32, %arg1: memref<8x128xf32, #tpu.memory_space<vmem>>, %arg2: memref<100xf32, #tpu.memory_space<smem>>, %arg3: memref<101xf32, #tpu.memory_space<smem>>, %arg4: memref<101xf32, #tpu.memory_space<smem>>, %arg5: memref<8x128xf32, #tpu.memory_space<vmem>>) attributes {dimension_semantics = [#tpu.dimension_semantics<parallel>], iteration_bounds = array<i64: 1>, scalar_prefetch = 0 : i64, scratch_operands = 0 : i64, tpu.core_type = #tpu.core_type<tc>, window_params = [{transform_indices = @transform_0, window_bounds = array<i64: 8, 128>}, {transform_indices = @transform_1, window_bounds = array<i64: 100>}, {transform_indices = @transform_2, window_bounds = array<i64: 101>}, {transform_indices = @transform_3, window_bounds = array<i64: 101>}, {transform_indices = @transform_4, window_bounds = array<i64: 8, 128>}]} {
    %c0 = arith.constant 0 : index
    %c0_0 = arith.constant 0 : index
    %0 = vector.load %arg1[%c0, %c0_0] : memref<8x128xf32, #tpu.memory_space<vmem>>, vector<8x128xf32>
    %c0_i32 = arith.constant 0 : i32
    %1 = vector.broadcast %c0_i32 : i32 to vector<8x128xi32>
    %c0_1 = arith.constant 0 : index
    %2 = memref.load %arg2[%c0_1] : memref<100xf32, #tpu.memory_space<smem>>
    %3 = vector.broadcast %2 : f32 to vector<8x128xf32>
    %4 = arith.cmpf oge, %0, %3 : vector<8x128xf32>
    %5 = arith.extui %4 : vector<8x128xi1> to vector<8x128xi32>
    %6 = arith.addi %1, %5 : vector<8x128xi32>
    %c1 = arith.constant 1 : index
    %7 = memref.load %arg2[%c1] : memref<100xf32, #tpu.memory_space<smem>>
    %8 = vector.broadcast %7 : f32 to vector<8x128xf32>
    %9 = arith.cmpf oge, %0, %8 : vector<8x128xf32>
    %10 = arith.extui %9 : vector<8x128xi1> to vector<8x128xi32>
    %11 = arith.addi %6, %10 : vector<8x128xi32>
    %c2 = arith.constant 2 : index
    %12 = memref.load %arg2[%c2] : memref<100xf32, #tpu.memory_space<smem>>
    %13 = vector.broadcast %12 : f32 to vector<8x128xf32>
    %14 = arith.cmpf oge, %0, %13 : vector<8x128xf32>
    %15 = arith.extui %14 : vector<8x128xi1> to vector<8x128xi32>
    %16 = arith.addi %11, %15 : vector<8x128xi32>
    %c3 = arith.constant 3 : index
    %17 = memref.load %arg2[%c3] : memref<100xf32, #tpu.memory_space<smem>>
    %18 = vector.broadcast %17 : f32 to vector<8x128xf32>
    %19 = arith.cmpf oge, %0, %18 : vector<8x128xf32>
    %20 = arith.extui %19 : vector<8x128xi1> to vector<8x128xi32>
    %21 = arith.addi %16, %20 : vector<8x128xi32>
    %c4 = arith.constant 4 : index
    %22 = memref.load %arg2[%c4] : memref<100xf32, #tpu.memory_space<smem>>
    %23 = vector.broadcast %22 : f32 to vector<8x128xf32>
    %24 = arith.cmpf oge, %0, %23 : vector<8x128xf32>
    %25 = arith.extui %24 : vector<8x128xi1> to vector<8x128xi32>
    %26 = arith.addi %21, %25 : vector<8x128xi32>
    %c5 = arith.constant 5 : index
    %27 = memref.load %arg2[%c5] : memref<100xf32, #tpu.memory_space<smem>>
    %28 = vector.broadcast %27 : f32 to vector<8x128xf32>
    %29 = arith.cmpf oge, %0, %28 : vector<8x128xf32>
    %30 = arith.extui %29 : vector<8x128xi1> to vector<8x128xi32>
    %31 = arith.addi %26, %30 : vector<8x128xi32>
    %c6 = arith.constant 6 : index
    %32 = memref.load %arg2[%c6] : memref<100xf32, #tpu.memory_space<smem>>
    %33 = vector.broadcast %32 : f32 to vector<8x128xf32>
    %34 = arith.cmpf oge, %0, %33 : vector<8x128xf32>
    %35 = arith.extui %34 : vector<8x128xi1> to vector<8x128xi32>
    %36 = arith.addi %31, %35 : vector<8x128xi32>
    %c7 = arith.constant 7 : index
    %37 = memref.load %arg2[%c7] : memref<100xf32, #tpu.memory_space<smem>>
    %38 = vector.broadcast %37 : f32 to vector<8x128xf32>
    %39 = arith.cmpf oge, %0, %38 : vector<8x128xf32>
    %40 = arith.extui %39 : vector<8x128xi1> to vector<8x128xi32>
    %41 = arith.addi %36, %40 : vector<8x128xi32>
    %c8 = arith.constant 8 : index
    %42 = memref.load %arg2[%c8] : memref<100xf32, #tpu.memory_space<smem>>
    %43 = vector.broadcast %42 : f32 to vector<8x128xf32>
    %44 = arith.cmpf oge, %0, %43 : vector<8x128xf32>
    %45 = arith.extui %44 : vector<8x128xi1> to vector<8x128xi32>
    %46 = arith.addi %41, %45 : vector<8x128xi32>
    %c9 = arith.constant 9 : index
    %47 = memref.load %arg2[%c9] : memref<100xf32, #tpu.memory_space<smem>>
    %48 = vector.broadcast %47 : f32 to vector<8x128xf32>
    %49 = arith.cmpf oge, %0, %48 : vector<8x128xf32>
    %50 = arith.extui %49 : vector<8x128xi1> to vector<8x128xi32>
    %51 = arith.addi %46, %50 : vector<8x128xi32>
    %c10 = arith.constant 10 : index
    %52 = memref.load %arg2[%c10] : memref<100xf32, #tpu.memory_space<smem>>
    %53 = vector.broadcast %52 : f32 to vector<8x128xf32>
    %54 = arith.cmpf oge, %0, %53 : vector<8x128xf32>
    %55 = arith.extui %54 : vector<8x128xi1> to vector<8x128xi32>
    %56 = arith.addi %51, %55 : vector<8x128xi32>
    %c11 = arith.constant 11 : index
    %57 = memref.load %arg2[%c11] : memref<100xf32, #tpu.memory_space<smem>>
    %58 = vector.broadcast %57 : f32 to vector<8x128xf32>
    %59 = arith.cmpf oge, %0, %58 : vector<8x128xf32>
    %60 = arith.extui %59 : vector<8x128xi1> to vector<8x128xi32>
    %61 = arith.addi %56, %60 : vector<8x128xi32>
    %c12 = arith.constant 12 : index
    %62 = memref.load %arg2[%c12] : memref<100xf32, #tpu.memory_space<smem>>
    %63 = vector.broadcast %62 : f32 to vector<8x128xf32>
    %64 = arith.cmpf oge, %0, %63 : vector<8x128xf32>
    %65 = arith.extui %64 : vector<8x128xi1> to vector<8x128xi32>
    %66 = arith.addi %61, %65 : vector<8x128xi32>
    %c13 = arith.constant 13 : index
    %67 = memref.load %arg2[%c13] : memref<100xf32, #tpu.memory_space<smem>>
    %68 = vector.broadcast %67 : f32 to vector<8x128xf32>
    %69 = arith.cmpf oge, %0, %68 : vector<8x128xf32>
    %70 = arith.extui %69 : vector<8x128xi1> to vector<8x128xi32>
    %71 = arith.addi %66, %70 : vector<8x128xi32>
    %c14 = arith.constant 14 : index
    %72 = memref.load %arg2[%c14] : memref<100xf32, #tpu.memory_space<smem>>
    %73 = vector.broadcast %72 : f32 to vector<8x128xf32>
    %74 = arith.cmpf oge, %0, %73 : vector<8x128xf32>
    %75 = arith.extui %74 : vector<8x128xi1> to vector<8x128xi32>
    %76 = arith.addi %71, %75 : vector<8x128xi32>
    %c15 = arith.constant 15 : index
    %77 = memref.load %arg2[%c15] : memref<100xf32, #tpu.memory_space<smem>>
    %78 = vector.broadcast %77 : f32 to vector<8x128xf32>
    %79 = arith.cmpf oge, %0, %78 : vector<8x128xf32>
    %80 = arith.extui %79 : vector<8x128xi1> to vector<8x128xi32>
    %81 = arith.addi %76, %80 : vector<8x128xi32>
    %c16 = arith.constant 16 : index
    %82 = memref.load %arg2[%c16] : memref<100xf32, #tpu.memory_space<smem>>
    %83 = vector.broadcast %82 : f32 to vector<8x128xf32>
    %84 = arith.cmpf oge, %0, %83 : vector<8x128xf32>
    %85 = arith.extui %84 : vector<8x128xi1> to vector<8x128xi32>
    %86 = arith.addi %81, %85 : vector<8x128xi32>
    %c17 = arith.constant 17 : index
    %87 = memref.load %arg2[%c17] : memref<100xf32, #tpu.memory_space<smem>>
    %88 = vector.broadcast %87 : f32 to vector<8x128xf32>
    %89 = arith.cmpf oge, %0, %88 : vector<8x128xf32>
    %90 = arith.extui %89 : vector<8x128xi1> to vector<8x128xi32>
    %91 = arith.addi %86, %90 : vector<8x128xi32>
    %c18 = arith.constant 18 : index
    %92 = memref.load %arg2[%c18] : memref<100xf32, #tpu.memory_space<smem>>
    %93 = vector.broadcast %92 : f32 to vector<8x128xf32>
    %94 = arith.cmpf oge, %0, %93 : vector<8x128xf32>
    %95 = arith.extui %94 : vector<8x128xi1> to vector<8x128xi32>
    %96 = arith.addi %91, %95 : vector<8x128xi32>
    %c19 = arith.constant 19 : index
    %97 = memref.load %arg2[%c19] : memref<100xf32, #tpu.memory_space<smem>>
    %98 = vector.broadcast %97 : f32 to vector<8x128xf32>
    %99 = arith.cmpf oge, %0, %98 : vector<8x128xf32>
    %100 = arith.extui %99 : vector<8x128xi1> to vector<8x128xi32>
    %101 = arith.addi %96, %100 : vector<8x128xi32>
    %c20 = arith.constant 20 : index
    %102 = memref.load %arg2[%c20] : memref<100xf32, #tpu.memory_space<smem>>
    %103 = vector.broadcast %102 : f32 to vector<8x128xf32>
    %104 = arith.cmpf oge, %0, %103 : vector<8x128xf32>
    %105 = arith.extui %104 : vector<8x128xi1> to vector<8x128xi32>
    %106 = arith.addi %101, %105 : vector<8x128xi32>
    %c21 = arith.constant 21 : index
    %107 = memref.load %arg2[%c21] : memref<100xf32, #tpu.memory_space<smem>>
    %108 = vector.broadcast %107 : f32 to vector<8x128xf32>
    %109 = arith.cmpf oge, %0, %108 : vector<8x128xf32>
    %110 = arith.extui %109 : vector<8x128xi1> to vector<8x128xi32>
    %111 = arith.addi %106, %110 : vector<8x128xi32>
    %c22 = arith.constant 22 : index
    %112 = memref.load %arg2[%c22] : memref<100xf32, #tpu.memory_space<smem>>
    %113 = vector.broadcast %112 : f32 to vector<8x128xf32>
    %114 = arith.cmpf oge, %0, %113 : vector<8x128xf32>
    %115 = arith.extui %114 : vector<8x128xi1> to vector<8x128xi32>
    %116 = arith.addi %111, %115 : vector<8x128xi32>
    %c23 = arith.constant 23 : index
    %117 = memref.load %arg2[%c23] : memref<100xf32, #tpu.memory_space<smem>>
    %118 = vector.broadcast %117 : f32 to vector<8x128xf32>
    %119 = arith.cmpf oge, %0, %118 : vector<8x128xf32>
    %120 = arith.extui %119 : vector<8x128xi1> to vector<8x128xi32>
    %121 = arith.addi %116, %120 : vector<8x128xi32>
    %c24 = arith.constant 24 : index
    %122 = memref.load %arg2[%c24] : memref<100xf32, #tpu.memory_space<smem>>
    %123 = vector.broadcast %122 : f32 to vector<8x128xf32>
    %124 = arith.cmpf oge, %0, %123 : vector<8x128xf32>
    %125 = arith.extui %124 : vector<8x128xi1> to vector<8x128xi32>
    %126 = arith.addi %121, %125 : vector<8x128xi32>
    %c25 = arith.constant 25 : index
    %127 = memref.load %arg2[%c25] : memref<100xf32, #tpu.memory_space<smem>>
    %128 = vector.broadcast %127 : f32 to vector<8x128xf32>
    %129 = arith.cmpf oge, %0, %128 : vector<8x128xf32>
    %130 = arith.extui %129 : vector<8x128xi1> to vector<8x128xi32>
    %131 = arith.addi %126, %130 : vector<8x128xi32>
    %c26 = arith.constant 26 : index
    %132 = memref.load %arg2[%c26] : memref<100xf32, #tpu.memory_space<smem>>
    %133 = vector.broadcast %132 : f32 to vector<8x128xf32>
    %134 = arith.cmpf oge, %0, %133 : vector<8x128xf32>
    %135 = arith.extui %134 : vector<8x128xi1> to vector<8x128xi32>
    %136 = arith.addi %131, %135 : vector<8x128xi32>
    %c27 = arith.constant 27 : index
    %137 = memref.load %arg2[%c27] : memref<100xf32, #tpu.memory_space<smem>>
    %138 = vector.broadcast %137 : f32 to vector<8x128xf32>
    %139 = arith.cmpf oge, %0, %138 : vector<8x128xf32>
    %140 = arith.extui %139 : vector<8x128xi1> to vector<8x128xi32>
    %141 = arith.addi %136, %140 : vector<8x128xi32>
    %c28 = arith.constant 28 : index
    %142 = memref.load %arg2[%c28] : memref<100xf32, #tpu.memory_space<smem>>
    %143 = vector.broadcast %142 : f32 to vector<8x128xf32>
    %144 = arith.cmpf oge, %0, %143 : vector<8x128xf32>
    %145 = arith.extui %144 : vector<8x128xi1> to vector<8x128xi32>
    %146 = arith.addi %141, %145 : vector<8x128xi32>
    %c29 = arith.constant 29 : index
    %147 = memref.load %arg2[%c29] : memref<100xf32, #tpu.memory_space<smem>>
    %148 = vector.broadcast %147 : f32 to vector<8x128xf32>
    %149 = arith.cmpf oge, %0, %148 : vector<8x128xf32>
    %150 = arith.extui %149 : vector<8x128xi1> to vector<8x128xi32>
    %151 = arith.addi %146, %150 : vector<8x128xi32>
    %c30 = arith.constant 30 : index
    %152 = memref.load %arg2[%c30] : memref<100xf32, #tpu.memory_space<smem>>
    %153 = vector.broadcast %152 : f32 to vector<8x128xf32>
    %154 = arith.cmpf oge, %0, %153 : vector<8x128xf32>
    %155 = arith.extui %154 : vector<8x128xi1> to vector<8x128xi32>
    %156 = arith.addi %151, %155 : vector<8x128xi32>
    %c31 = arith.constant 31 : index
    %157 = memref.load %arg2[%c31] : memref<100xf32, #tpu.memory_space<smem>>
    %158 = vector.broadcast %157 : f32 to vector<8x128xf32>
    %159 = arith.cmpf oge, %0, %158 : vector<8x128xf32>
    %160 = arith.extui %159 : vector<8x128xi1> to vector<8x128xi32>
    %161 = arith.addi %156, %160 : vector<8x128xi32>
    %c32 = arith.constant 32 : index
    %162 = memref.load %arg2[%c32] : memref<100xf32, #tpu.memory_space<smem>>
    %163 = vector.broadcast %162 : f32 to vector<8x128xf32>
    %164 = arith.cmpf oge, %0, %163 : vector<8x128xf32>
    %165 = arith.extui %164 : vector<8x128xi1> to vector<8x128xi32>
    %166 = arith.addi %161, %165 : vector<8x128xi32>
    %c33 = arith.constant 33 : index
    %167 = memref.load %arg2[%c33] : memref<100xf32, #tpu.memory_space<smem>>
    %168 = vector.broadcast %167 : f32 to vector<8x128xf32>
    %169 = arith.cmpf oge, %0, %168 : vector<8x128xf32>
    %170 = arith.extui %169 : vector<8x128xi1> to vector<8x128xi32>
    %171 = arith.addi %166, %170 : vector<8x128xi32>
    %c34 = arith.constant 34 : index
    %172 = memref.load %arg2[%c34] : memref<100xf32, #tpu.memory_space<smem>>
    %173 = vector.broadcast %172 : f32 to vector<8x128xf32>
    %174 = arith.cmpf oge, %0, %173 : vector<8x128xf32>
    %175 = arith.extui %174 : vector<8x128xi1> to vector<8x128xi32>
    %176 = arith.addi %171, %175 : vector<8x128xi32>
    %c35 = arith.constant 35 : index
    %177 = memref.load %arg2[%c35] : memref<100xf32, #tpu.memory_space<smem>>
    %178 = vector.broadcast %177 : f32 to vector<8x128xf32>
    %179 = arith.cmpf oge, %0, %178 : vector<8x128xf32>
    %180 = arith.extui %179 : vector<8x128xi1> to vector<8x128xi32>
    %181 = arith.addi %176, %180 : vector<8x128xi32>
    %c36 = arith.constant 36 : index
    %182 = memref.load %arg2[%c36] : memref<100xf32, #tpu.memory_space<smem>>
    %183 = vector.broadcast %182 : f32 to vector<8x128xf32>
    %184 = arith.cmpf oge, %0, %183 : vector<8x128xf32>
    %185 = arith.extui %184 : vector<8x128xi1> to vector<8x128xi32>
    %186 = arith.addi %181, %185 : vector<8x128xi32>
    %c37 = arith.constant 37 : index
    %187 = memref.load %arg2[%c37] : memref<100xf32, #tpu.memory_space<smem>>
    %188 = vector.broadcast %187 : f32 to vector<8x128xf32>
    %189 = arith.cmpf oge, %0, %188 : vector<8x128xf32>
    %190 = arith.extui %189 : vector<8x128xi1> to vector<8x128xi32>
    %191 = arith.addi %186, %190 : vector<8x128xi32>
    %c38 = arith.constant 38 : index
    %192 = memref.load %arg2[%c38] : memref<100xf32, #tpu.memory_space<smem>>
    %193 = vector.broadcast %192 : f32 to vector<8x128xf32>
    %194 = arith.cmpf oge, %0, %193 : vector<8x128xf32>
    %195 = arith.extui %194 : vector<8x128xi1> to vector<8x128xi32>
    %196 = arith.addi %191, %195 : vector<8x128xi32>
    %c39 = arith.constant 39 : index
    %197 = memref.load %arg2[%c39] : memref<100xf32, #tpu.memory_space<smem>>
    %198 = vector.broadcast %197 : f32 to vector<8x128xf32>
    %199 = arith.cmpf oge, %0, %198 : vector<8x128xf32>
    %200 = arith.extui %199 : vector<8x128xi1> to vector<8x128xi32>
    %201 = arith.addi %196, %200 : vector<8x128xi32>
    %c40 = arith.constant 40 : index
    %202 = memref.load %arg2[%c40] : memref<100xf32, #tpu.memory_space<smem>>
    %203 = vector.broadcast %202 : f32 to vector<8x128xf32>
    %204 = arith.cmpf oge, %0, %203 : vector<8x128xf32>
    %205 = arith.extui %204 : vector<8x128xi1> to vector<8x128xi32>
    %206 = arith.addi %201, %205 : vector<8x128xi32>
    %c41 = arith.constant 41 : index
    %207 = memref.load %arg2[%c41] : memref<100xf32, #tpu.memory_space<smem>>
    %208 = vector.broadcast %207 : f32 to vector<8x128xf32>
    %209 = arith.cmpf oge, %0, %208 : vector<8x128xf32>
    %210 = arith.extui %209 : vector<8x128xi1> to vector<8x128xi32>
    %211 = arith.addi %206, %210 : vector<8x128xi32>
    %c42 = arith.constant 42 : index
    %212 = memref.load %arg2[%c42] : memref<100xf32, #tpu.memory_space<smem>>
    %213 = vector.broadcast %212 : f32 to vector<8x128xf32>
    %214 = arith.cmpf oge, %0, %213 : vector<8x128xf32>
    %215 = arith.extui %214 : vector<8x128xi1> to vector<8x128xi32>
    %216 = arith.addi %211, %215 : vector<8x128xi32>
    %c43 = arith.constant 43 : index
    %217 = memref.load %arg2[%c43] : memref<100xf32, #tpu.memory_space<smem>>
    %218 = vector.broadcast %217 : f32 to vector<8x128xf32>
    %219 = arith.cmpf oge, %0, %218 : vector<8x128xf32>
    %220 = arith.extui %219 : vector<8x128xi1> to vector<8x128xi32>
    %221 = arith.addi %216, %220 : vector<8x128xi32>
    %c44 = arith.constant 44 : index
    %222 = memref.load %arg2[%c44] : memref<100xf32, #tpu.memory_space<smem>>
    %223 = vector.broadcast %222 : f32 to vector<8x128xf32>
    %224 = arith.cmpf oge, %0, %223 : vector<8x128xf32>
    %225 = arith.extui %224 : vector<8x128xi1> to vector<8x128xi32>
    %226 = arith.addi %221, %225 : vector<8x128xi32>
    %c45 = arith.constant 45 : index
    %227 = memref.load %arg2[%c45] : memref<100xf32, #tpu.memory_space<smem>>
    %228 = vector.broadcast %227 : f32 to vector<8x128xf32>
    %229 = arith.cmpf oge, %0, %228 : vector<8x128xf32>
    %230 = arith.extui %229 : vector<8x128xi1> to vector<8x128xi32>
    %231 = arith.addi %226, %230 : vector<8x128xi32>
    %c46 = arith.constant 46 : index
    %232 = memref.load %arg2[%c46] : memref<100xf32, #tpu.memory_space<smem>>
    %233 = vector.broadcast %232 : f32 to vector<8x128xf32>
    %234 = arith.cmpf oge, %0, %233 : vector<8x128xf32>
    %235 = arith.extui %234 : vector<8x128xi1> to vector<8x128xi32>
    %236 = arith.addi %231, %235 : vector<8x128xi32>
    %c47 = arith.constant 47 : index
    %237 = memref.load %arg2[%c47] : memref<100xf32, #tpu.memory_space<smem>>
    %238 = vector.broadcast %237 : f32 to vector<8x128xf32>
    %239 = arith.cmpf oge, %0, %238 : vector<8x128xf32>
    %240 = arith.extui %239 : vector<8x128xi1> to vector<8x128xi32>
    %241 = arith.addi %236, %240 : vector<8x128xi32>
    %c48 = arith.constant 48 : index
    %242 = memref.load %arg2[%c48] : memref<100xf32, #tpu.memory_space<smem>>
    %243 = vector.broadcast %242 : f32 to vector<8x128xf32>
    %244 = arith.cmpf oge, %0, %243 : vector<8x128xf32>
    %245 = arith.extui %244 : vector<8x128xi1> to vector<8x128xi32>
    %246 = arith.addi %241, %245 : vector<8x128xi32>
    %c49 = arith.constant 49 : index
    %247 = memref.load %arg2[%c49] : memref<100xf32, #tpu.memory_space<smem>>
    %248 = vector.broadcast %247 : f32 to vector<8x128xf32>
    %249 = arith.cmpf oge, %0, %248 : vector<8x128xf32>
    %250 = arith.extui %249 : vector<8x128xi1> to vector<8x128xi32>
    %251 = arith.addi %246, %250 : vector<8x128xi32>
    %c50 = arith.constant 50 : index
    %252 = memref.load %arg2[%c50] : memref<100xf32, #tpu.memory_space<smem>>
    %253 = vector.broadcast %252 : f32 to vector<8x128xf32>
    %254 = arith.cmpf oge, %0, %253 : vector<8x128xf32>
    %255 = arith.extui %254 : vector<8x128xi1> to vector<8x128xi32>
    %256 = arith.addi %251, %255 : vector<8x128xi32>
    %c51 = arith.constant 51 : index
    %257 = memref.load %arg2[%c51] : memref<100xf32, #tpu.memory_space<smem>>
    %258 = vector.broadcast %257 : f32 to vector<8x128xf32>
    %259 = arith.cmpf oge, %0, %258 : vector<8x128xf32>
    %260 = arith.extui %259 : vector<8x128xi1> to vector<8x128xi32>
    %261 = arith.addi %256, %260 : vector<8x128xi32>
    %c52 = arith.constant 52 : index
    %262 = memref.load %arg2[%c52] : memref<100xf32, #tpu.memory_space<smem>>
    %263 = vector.broadcast %262 : f32 to vector<8x128xf32>
    %264 = arith.cmpf oge, %0, %263 : vector<8x128xf32>
    %265 = arith.extui %264 : vector<8x128xi1> to vector<8x128xi32>
    %266 = arith.addi %261, %265 : vector<8x128xi32>
    %c53 = arith.constant 53 : index
    %267 = memref.load %arg2[%c53] : memref<100xf32, #tpu.memory_space<smem>>
    %268 = vector.broadcast %267 : f32 to vector<8x128xf32>
    %269 = arith.cmpf oge, %0, %268 : vector<8x128xf32>
    %270 = arith.extui %269 : vector<8x128xi1> to vector<8x128xi32>
    %271 = arith.addi %266, %270 : vector<8x128xi32>
    %c54 = arith.constant 54 : index
    %272 = memref.load %arg2[%c54] : memref<100xf32, #tpu.memory_space<smem>>
    %273 = vector.broadcast %272 : f32 to vector<8x128xf32>
    %274 = arith.cmpf oge, %0, %273 : vector<8x128xf32>
    %275 = arith.extui %274 : vector<8x128xi1> to vector<8x128xi32>
    %276 = arith.addi %271, %275 : vector<8x128xi32>
    %c55 = arith.constant 55 : index
    %277 = memref.load %arg2[%c55] : memref<100xf32, #tpu.memory_space<smem>>
    %278 = vector.broadcast %277 : f32 to vector<8x128xf32>
    %279 = arith.cmpf oge, %0, %278 : vector<8x128xf32>
    %280 = arith.extui %279 : vector<8x128xi1> to vector<8x128xi32>
    %281 = arith.addi %276, %280 : vector<8x128xi32>
    %c56 = arith.constant 56 : index
    %282 = memref.load %arg2[%c56] : memref<100xf32, #tpu.memory_space<smem>>
    %283 = vector.broadcast %282 : f32 to vector<8x128xf32>
    %284 = arith.cmpf oge, %0, %283 : vector<8x128xf32>
    %285 = arith.extui %284 : vector<8x128xi1> to vector<8x128xi32>
    %286 = arith.addi %281, %285 : vector<8x128xi32>
    %c57 = arith.constant 57 : index
    %287 = memref.load %arg2[%c57] : memref<100xf32, #tpu.memory_space<smem>>
    %288 = vector.broadcast %287 : f32 to vector<8x128xf32>
    %289 = arith.cmpf oge, %0, %288 : vector<8x128xf32>
    %290 = arith.extui %289 : vector<8x128xi1> to vector<8x128xi32>
    %291 = arith.addi %286, %290 : vector<8x128xi32>
    %c58 = arith.constant 58 : index
    %292 = memref.load %arg2[%c58] : memref<100xf32, #tpu.memory_space<smem>>
    %293 = vector.broadcast %292 : f32 to vector<8x128xf32>
    %294 = arith.cmpf oge, %0, %293 : vector<8x128xf32>
    %295 = arith.extui %294 : vector<8x128xi1> to vector<8x128xi32>
    %296 = arith.addi %291, %295 : vector<8x128xi32>
    %c59 = arith.constant 59 : index
    %297 = memref.load %arg2[%c59] : memref<100xf32, #tpu.memory_space<smem>>
    %298 = vector.broadcast %297 : f32 to vector<8x128xf32>
    %299 = arith.cmpf oge, %0, %298 : vector<8x128xf32>
    %300 = arith.extui %299 : vector<8x128xi1> to vector<8x128xi32>
    %301 = arith.addi %296, %300 : vector<8x128xi32>
    %c60 = arith.constant 60 : index
    %302 = memref.load %arg2[%c60] : memref<100xf32, #tpu.memory_space<smem>>
    %303 = vector.broadcast %302 : f32 to vector<8x128xf32>
    %304 = arith.cmpf oge, %0, %303 : vector<8x128xf32>
    %305 = arith.extui %304 : vector<8x128xi1> to vector<8x128xi32>
    %306 = arith.addi %301, %305 : vector<8x128xi32>
    %c61 = arith.constant 61 : index
    %307 = memref.load %arg2[%c61] : memref<100xf32, #tpu.memory_space<smem>>
    %308 = vector.broadcast %307 : f32 to vector<8x128xf32>
    %309 = arith.cmpf oge, %0, %308 : vector<8x128xf32>
    %310 = arith.extui %309 : vector<8x128xi1> to vector<8x128xi32>
    %311 = arith.addi %306, %310 : vector<8x128xi32>
    %c62 = arith.constant 62 : index
    %312 = memref.load %arg2[%c62] : memref<100xf32, #tpu.memory_space<smem>>
    %313 = vector.broadcast %312 : f32 to vector<8x128xf32>
    %314 = arith.cmpf oge, %0, %313 : vector<8x128xf32>
    %315 = arith.extui %314 : vector<8x128xi1> to vector<8x128xi32>
    %316 = arith.addi %311, %315 : vector<8x128xi32>
    %c63 = arith.constant 63 : index
    %317 = memref.load %arg2[%c63] : memref<100xf32, #tpu.memory_space<smem>>
    %318 = vector.broadcast %317 : f32 to vector<8x128xf32>
    %319 = arith.cmpf oge, %0, %318 : vector<8x128xf32>
    %320 = arith.extui %319 : vector<8x128xi1> to vector<8x128xi32>
    %321 = arith.addi %316, %320 : vector<8x128xi32>
    %c64 = arith.constant 64 : index
    %322 = memref.load %arg2[%c64] : memref<100xf32, #tpu.memory_space<smem>>
    %323 = vector.broadcast %322 : f32 to vector<8x128xf32>
    %324 = arith.cmpf oge, %0, %323 : vector<8x128xf32>
    %325 = arith.extui %324 : vector<8x128xi1> to vector<8x128xi32>
    %326 = arith.addi %321, %325 : vector<8x128xi32>
    %c65 = arith.constant 65 : index
    %327 = memref.load %arg2[%c65] : memref<100xf32, #tpu.memory_space<smem>>
    %328 = vector.broadcast %327 : f32 to vector<8x128xf32>
    %329 = arith.cmpf oge, %0, %328 : vector<8x128xf32>
    %330 = arith.extui %329 : vector<8x128xi1> to vector<8x128xi32>
    %331 = arith.addi %326, %330 : vector<8x128xi32>
    %c66 = arith.constant 66 : index
    %332 = memref.load %arg2[%c66] : memref<100xf32, #tpu.memory_space<smem>>
    %333 = vector.broadcast %332 : f32 to vector<8x128xf32>
    %334 = arith.cmpf oge, %0, %333 : vector<8x128xf32>
    %335 = arith.extui %334 : vector<8x128xi1> to vector<8x128xi32>
    %336 = arith.addi %331, %335 : vector<8x128xi32>
    %c67 = arith.constant 67 : index
    %337 = memref.load %arg2[%c67] : memref<100xf32, #tpu.memory_space<smem>>
    %338 = vector.broadcast %337 : f32 to vector<8x128xf32>
    %339 = arith.cmpf oge, %0, %338 : vector<8x128xf32>
    %340 = arith.extui %339 : vector<8x128xi1> to vector<8x128xi32>
    %341 = arith.addi %336, %340 : vector<8x128xi32>
    %c68 = arith.constant 68 : index
    %342 = memref.load %arg2[%c68] : memref<100xf32, #tpu.memory_space<smem>>
    %343 = vector.broadcast %342 : f32 to vector<8x128xf32>
    %344 = arith.cmpf oge, %0, %343 : vector<8x128xf32>
    %345 = arith.extui %344 : vector<8x128xi1> to vector<8x128xi32>
    %346 = arith.addi %341, %345 : vector<8x128xi32>
    %c69 = arith.constant 69 : index
    %347 = memref.load %arg2[%c69] : memref<100xf32, #tpu.memory_space<smem>>
    %348 = vector.broadcast %347 : f32 to vector<8x128xf32>
    %349 = arith.cmpf oge, %0, %348 : vector<8x128xf32>
    %350 = arith.extui %349 : vector<8x128xi1> to vector<8x128xi32>
    %351 = arith.addi %346, %350 : vector<8x128xi32>
    %c70 = arith.constant 70 : index
    %352 = memref.load %arg2[%c70] : memref<100xf32, #tpu.memory_space<smem>>
    %353 = vector.broadcast %352 : f32 to vector<8x128xf32>
    %354 = arith.cmpf oge, %0, %353 : vector<8x128xf32>
    %355 = arith.extui %354 : vector<8x128xi1> to vector<8x128xi32>
    %356 = arith.addi %351, %355 : vector<8x128xi32>
    %c71 = arith.constant 71 : index
    %357 = memref.load %arg2[%c71] : memref<100xf32, #tpu.memory_space<smem>>
    %358 = vector.broadcast %357 : f32 to vector<8x128xf32>
    %359 = arith.cmpf oge, %0, %358 : vector<8x128xf32>
    %360 = arith.extui %359 : vector<8x128xi1> to vector<8x128xi32>
    %361 = arith.addi %356, %360 : vector<8x128xi32>
    %c72 = arith.constant 72 : index
    %362 = memref.load %arg2[%c72] : memref<100xf32, #tpu.memory_space<smem>>
    %363 = vector.broadcast %362 : f32 to vector<8x128xf32>
    %364 = arith.cmpf oge, %0, %363 : vector<8x128xf32>
    %365 = arith.extui %364 : vector<8x128xi1> to vector<8x128xi32>
    %366 = arith.addi %361, %365 : vector<8x128xi32>
    %c73 = arith.constant 73 : index
    %367 = memref.load %arg2[%c73] : memref<100xf32, #tpu.memory_space<smem>>
    %368 = vector.broadcast %367 : f32 to vector<8x128xf32>
    %369 = arith.cmpf oge, %0, %368 : vector<8x128xf32>
    %370 = arith.extui %369 : vector<8x128xi1> to vector<8x128xi32>
    %371 = arith.addi %366, %370 : vector<8x128xi32>
    %c74 = arith.constant 74 : index
    %372 = memref.load %arg2[%c74] : memref<100xf32, #tpu.memory_space<smem>>
    %373 = vector.broadcast %372 : f32 to vector<8x128xf32>
    %374 = arith.cmpf oge, %0, %373 : vector<8x128xf32>
    %375 = arith.extui %374 : vector<8x128xi1> to vector<8x128xi32>
    %376 = arith.addi %371, %375 : vector<8x128xi32>
    %c75 = arith.constant 75 : index
    %377 = memref.load %arg2[%c75] : memref<100xf32, #tpu.memory_space<smem>>
    %378 = vector.broadcast %377 : f32 to vector<8x128xf32>
    %379 = arith.cmpf oge, %0, %378 : vector<8x128xf32>
    %380 = arith.extui %379 : vector<8x128xi1> to vector<8x128xi32>
    %381 = arith.addi %376, %380 : vector<8x128xi32>
    %c76 = arith.constant 76 : index
    %382 = memref.load %arg2[%c76] : memref<100xf32, #tpu.memory_space<smem>>
    %383 = vector.broadcast %382 : f32 to vector<8x128xf32>
    %384 = arith.cmpf oge, %0, %383 : vector<8x128xf32>
    %385 = arith.extui %384 : vector<8x128xi1> to vector<8x128xi32>
    %386 = arith.addi %381, %385 : vector<8x128xi32>
    %c77 = arith.constant 77 : index
    %387 = memref.load %arg2[%c77] : memref<100xf32, #tpu.memory_space<smem>>
    %388 = vector.broadcast %387 : f32 to vector<8x128xf32>
    %389 = arith.cmpf oge, %0, %388 : vector<8x128xf32>
    %390 = arith.extui %389 : vector<8x128xi1> to vector<8x128xi32>
    %391 = arith.addi %386, %390 : vector<8x128xi32>
    %c78 = arith.constant 78 : index
    %392 = memref.load %arg2[%c78] : memref<100xf32, #tpu.memory_space<smem>>
    %393 = vector.broadcast %392 : f32 to vector<8x128xf32>
    %394 = arith.cmpf oge, %0, %393 : vector<8x128xf32>
    %395 = arith.extui %394 : vector<8x128xi1> to vector<8x128xi32>
    %396 = arith.addi %391, %395 : vector<8x128xi32>
    %c79 = arith.constant 79 : index
    %397 = memref.load %arg2[%c79] : memref<100xf32, #tpu.memory_space<smem>>
    %398 = vector.broadcast %397 : f32 to vector<8x128xf32>
    %399 = arith.cmpf oge, %0, %398 : vector<8x128xf32>
    %400 = arith.extui %399 : vector<8x128xi1> to vector<8x128xi32>
    %401 = arith.addi %396, %400 : vector<8x128xi32>
    %c80 = arith.constant 80 : index
    %402 = memref.load %arg2[%c80] : memref<100xf32, #tpu.memory_space<smem>>
    %403 = vector.broadcast %402 : f32 to vector<8x128xf32>
    %404 = arith.cmpf oge, %0, %403 : vector<8x128xf32>
    %405 = arith.extui %404 : vector<8x128xi1> to vector<8x128xi32>
    %406 = arith.addi %401, %405 : vector<8x128xi32>
    %c81 = arith.constant 81 : index
    %407 = memref.load %arg2[%c81] : memref<100xf32, #tpu.memory_space<smem>>
    %408 = vector.broadcast %407 : f32 to vector<8x128xf32>
    %409 = arith.cmpf oge, %0, %408 : vector<8x128xf32>
    %410 = arith.extui %409 : vector<8x128xi1> to vector<8x128xi32>
    %411 = arith.addi %406, %410 : vector<8x128xi32>
    %c82 = arith.constant 82 : index
    %412 = memref.load %arg2[%c82] : memref<100xf32, #tpu.memory_space<smem>>
    %413 = vector.broadcast %412 : f32 to vector<8x128xf32>
    %414 = arith.cmpf oge, %0, %413 : vector<8x128xf32>
    %415 = arith.extui %414 : vector<8x128xi1> to vector<8x128xi32>
    %416 = arith.addi %411, %415 : vector<8x128xi32>
    %c83 = arith.constant 83 : index
    %417 = memref.load %arg2[%c83] : memref<100xf32, #tpu.memory_space<smem>>
    %418 = vector.broadcast %417 : f32 to vector<8x128xf32>
    %419 = arith.cmpf oge, %0, %418 : vector<8x128xf32>
    %420 = arith.extui %419 : vector<8x128xi1> to vector<8x128xi32>
    %421 = arith.addi %416, %420 : vector<8x128xi32>
    %c84 = arith.constant 84 : index
    %422 = memref.load %arg2[%c84] : memref<100xf32, #tpu.memory_space<smem>>
    %423 = vector.broadcast %422 : f32 to vector<8x128xf32>
    %424 = arith.cmpf oge, %0, %423 : vector<8x128xf32>
    %425 = arith.extui %424 : vector<8x128xi1> to vector<8x128xi32>
    %426 = arith.addi %421, %425 : vector<8x128xi32>
    %c85 = arith.constant 85 : index
    %427 = memref.load %arg2[%c85] : memref<100xf32, #tpu.memory_space<smem>>
    %428 = vector.broadcast %427 : f32 to vector<8x128xf32>
    %429 = arith.cmpf oge, %0, %428 : vector<8x128xf32>
    %430 = arith.extui %429 : vector<8x128xi1> to vector<8x128xi32>
    %431 = arith.addi %426, %430 : vector<8x128xi32>
    %c86 = arith.constant 86 : index
    %432 = memref.load %arg2[%c86] : memref<100xf32, #tpu.memory_space<smem>>
    %433 = vector.broadcast %432 : f32 to vector<8x128xf32>
    %434 = arith.cmpf oge, %0, %433 : vector<8x128xf32>
    %435 = arith.extui %434 : vector<8x128xi1> to vector<8x128xi32>
    %436 = arith.addi %431, %435 : vector<8x128xi32>
    %c87 = arith.constant 87 : index
    %437 = memref.load %arg2[%c87] : memref<100xf32, #tpu.memory_space<smem>>
    %438 = vector.broadcast %437 : f32 to vector<8x128xf32>
    %439 = arith.cmpf oge, %0, %438 : vector<8x128xf32>
    %440 = arith.extui %439 : vector<8x128xi1> to vector<8x128xi32>
    %441 = arith.addi %436, %440 : vector<8x128xi32>
    %c88 = arith.constant 88 : index
    %442 = memref.load %arg2[%c88] : memref<100xf32, #tpu.memory_space<smem>>
    %443 = vector.broadcast %442 : f32 to vector<8x128xf32>
    %444 = arith.cmpf oge, %0, %443 : vector<8x128xf32>
    %445 = arith.extui %444 : vector<8x128xi1> to vector<8x128xi32>
    %446 = arith.addi %441, %445 : vector<8x128xi32>
    %c89 = arith.constant 89 : index
    %447 = memref.load %arg2[%c89] : memref<100xf32, #tpu.memory_space<smem>>
    %448 = vector.broadcast %447 : f32 to vector<8x128xf32>
    %449 = arith.cmpf oge, %0, %448 : vector<8x128xf32>
    %450 = arith.extui %449 : vector<8x128xi1> to vector<8x128xi32>
    %451 = arith.addi %446, %450 : vector<8x128xi32>
    %c90 = arith.constant 90 : index
    %452 = memref.load %arg2[%c90] : memref<100xf32, #tpu.memory_space<smem>>
    %453 = vector.broadcast %452 : f32 to vector<8x128xf32>
    %454 = arith.cmpf oge, %0, %453 : vector<8x128xf32>
    %455 = arith.extui %454 : vector<8x128xi1> to vector<8x128xi32>
    %456 = arith.addi %451, %455 : vector<8x128xi32>
    %c91 = arith.constant 91 : index
    %457 = memref.load %arg2[%c91] : memref<100xf32, #tpu.memory_space<smem>>
    %458 = vector.broadcast %457 : f32 to vector<8x128xf32>
    %459 = arith.cmpf oge, %0, %458 : vector<8x128xf32>
    %460 = arith.extui %459 : vector<8x128xi1> to vector<8x128xi32>
    %461 = arith.addi %456, %460 : vector<8x128xi32>
    %c92 = arith.constant 92 : index
    %462 = memref.load %arg2[%c92] : memref<100xf32, #tpu.memory_space<smem>>
    %463 = vector.broadcast %462 : f32 to vector<8x128xf32>
    %464 = arith.cmpf oge, %0, %463 : vector<8x128xf32>
    %465 = arith.extui %464 : vector<8x128xi1> to vector<8x128xi32>
    %466 = arith.addi %461, %465 : vector<8x128xi32>
    %c93 = arith.constant 93 : index
    %467 = memref.load %arg2[%c93] : memref<100xf32, #tpu.memory_space<smem>>
    %468 = vector.broadcast %467 : f32 to vector<8x128xf32>
    %469 = arith.cmpf oge, %0, %468 : vector<8x128xf32>
    %470 = arith.extui %469 : vector<8x128xi1> to vector<8x128xi32>
    %471 = arith.addi %466, %470 : vector<8x128xi32>
    %c94 = arith.constant 94 : index
    %472 = memref.load %arg2[%c94] : memref<100xf32, #tpu.memory_space<smem>>
    %473 = vector.broadcast %472 : f32 to vector<8x128xf32>
    %474 = arith.cmpf oge, %0, %473 : vector<8x128xf32>
    %475 = arith.extui %474 : vector<8x128xi1> to vector<8x128xi32>
    %476 = arith.addi %471, %475 : vector<8x128xi32>
    %c95 = arith.constant 95 : index
    %477 = memref.load %arg2[%c95] : memref<100xf32, #tpu.memory_space<smem>>
    %478 = vector.broadcast %477 : f32 to vector<8x128xf32>
    %479 = arith.cmpf oge, %0, %478 : vector<8x128xf32>
    %480 = arith.extui %479 : vector<8x128xi1> to vector<8x128xi32>
    %481 = arith.addi %476, %480 : vector<8x128xi32>
    %c96 = arith.constant 96 : index
    %482 = memref.load %arg2[%c96] : memref<100xf32, #tpu.memory_space<smem>>
    %483 = vector.broadcast %482 : f32 to vector<8x128xf32>
    %484 = arith.cmpf oge, %0, %483 : vector<8x128xf32>
    %485 = arith.extui %484 : vector<8x128xi1> to vector<8x128xi32>
    %486 = arith.addi %481, %485 : vector<8x128xi32>
    %c97 = arith.constant 97 : index
    %487 = memref.load %arg2[%c97] : memref<100xf32, #tpu.memory_space<smem>>
    %488 = vector.broadcast %487 : f32 to vector<8x128xf32>
    %489 = arith.cmpf oge, %0, %488 : vector<8x128xf32>
    %490 = arith.extui %489 : vector<8x128xi1> to vector<8x128xi32>
    %491 = arith.addi %486, %490 : vector<8x128xi32>
    %c98 = arith.constant 98 : index
    %492 = memref.load %arg2[%c98] : memref<100xf32, #tpu.memory_space<smem>>
    %493 = vector.broadcast %492 : f32 to vector<8x128xf32>
    %494 = arith.cmpf oge, %0, %493 : vector<8x128xf32>
    %495 = arith.extui %494 : vector<8x128xi1> to vector<8x128xi32>
    %496 = arith.addi %491, %495 : vector<8x128xi32>
    %c99 = arith.constant 99 : index
    %497 = memref.load %arg2[%c99] : memref<100xf32, #tpu.memory_space<smem>>
    %498 = vector.broadcast %497 : f32 to vector<8x128xf32>
    %499 = arith.cmpf oge, %0, %498 : vector<8x128xf32>
    %500 = arith.extui %499 : vector<8x128xi1> to vector<8x128xi32>
    %501 = arith.addi %496, %500 : vector<8x128xi32>
    %cst = arith.constant 0.000000e+00 : f32
    %502 = vector.broadcast %cst : f32 to vector<8x128xf32>
    %cst_2 = arith.constant 0.000000e+00 : f32
    %503 = vector.broadcast %cst_2 : f32 to vector<8x128xf32>
    %c0_i32_3 = arith.constant 0 : i32
    %504 = vector.broadcast %c0_i32_3 : i32 to vector<8x128xi32>
    %505 = arith.cmpi eq, %501, %504 : vector<8x128xi32>
    %c0_4 = arith.constant 0 : index
    %506 = memref.load %arg3[%c0_4] : memref<101xf32, #tpu.memory_space<smem>>
    %507 = vector.broadcast %506 : f32 to vector<8x128xf32>
    %508 = arith.select %505, %507, %502 : vector<8x128xi1>, vector<8x128xf32>
    %c0_5 = arith.constant 0 : index
    %509 = memref.load %arg4[%c0_5] : memref<101xf32, #tpu.memory_space<smem>>
    %510 = vector.broadcast %509 : f32 to vector<8x128xf32>
    %511 = arith.select %505, %510, %503 : vector<8x128xi1>, vector<8x128xf32>
    %c1_i32 = arith.constant 1 : i32
    %512 = vector.broadcast %c1_i32 : i32 to vector<8x128xi32>
    %513 = arith.cmpi eq, %501, %512 : vector<8x128xi32>
    %c1_6 = arith.constant 1 : index
    %514 = memref.load %arg3[%c1_6] : memref<101xf32, #tpu.memory_space<smem>>
    %515 = vector.broadcast %514 : f32 to vector<8x128xf32>
    %516 = arith.select %513, %515, %508 : vector<8x128xi1>, vector<8x128xf32>
    %c1_7 = arith.constant 1 : index
    %517 = memref.load %arg4[%c1_7] : memref<101xf32, #tpu.memory_space<smem>>
    %518 = vector.broadcast %517 : f32 to vector<8x128xf32>
    %519 = arith.select %513, %518, %511 : vector<8x128xi1>, vector<8x128xf32>
    %c2_i32 = arith.constant 2 : i32
    %520 = vector.broadcast %c2_i32 : i32 to vector<8x128xi32>
    %521 = arith.cmpi eq, %501, %520 : vector<8x128xi32>
    %c2_8 = arith.constant 2 : index
    %522 = memref.load %arg3[%c2_8] : memref<101xf32, #tpu.memory_space<smem>>
    %523 = vector.broadcast %522 : f32 to vector<8x128xf32>
    %524 = arith.select %521, %523, %516 : vector<8x128xi1>, vector<8x128xf32>
    %c2_9 = arith.constant 2 : index
    %525 = memref.load %arg4[%c2_9] : memref<101xf32, #tpu.memory_space<smem>>
    %526 = vector.broadcast %525 : f32 to vector<8x128xf32>
    %527 = arith.select %521, %526, %519 : vector<8x128xi1>, vector<8x128xf32>
    %c3_i32 = arith.constant 3 : i32
    %528 = vector.broadcast %c3_i32 : i32 to vector<8x128xi32>
    %529 = arith.cmpi eq, %501, %528 : vector<8x128xi32>
    %c3_10 = arith.constant 3 : index
    %530 = memref.load %arg3[%c3_10] : memref<101xf32, #tpu.memory_space<smem>>
    %531 = vector.broadcast %530 : f32 to vector<8x128xf32>
    %532 = arith.select %529, %531, %524 : vector<8x128xi1>, vector<8x128xf32>
    %c3_11 = arith.constant 3 : index
    %533 = memref.load %arg4[%c3_11] : memref<101xf32, #tpu.memory_space<smem>>
    %534 = vector.broadcast %533 : f32 to vector<8x128xf32>
    %535 = arith.select %529, %534, %527 : vector<8x128xi1>, vector<8x128xf32>
    %c4_i32 = arith.constant 4 : i32
    %536 = vector.broadcast %c4_i32 : i32 to vector<8x128xi32>
    %537 = arith.cmpi eq, %501, %536 : vector<8x128xi32>
    %c4_12 = arith.constant 4 : index
    %538 = memref.load %arg3[%c4_12] : memref<101xf32, #tpu.memory_space<smem>>
    %539 = vector.broadcast %538 : f32 to vector<8x128xf32>
    %540 = arith.select %537, %539, %532 : vector<8x128xi1>, vector<8x128xf32>
    %c4_13 = arith.constant 4 : index
    %541 = memref.load %arg4[%c4_13] : memref<101xf32, #tpu.memory_space<smem>>
    %542 = vector.broadcast %541 : f32 to vector<8x128xf32>
    %543 = arith.select %537, %542, %535 : vector<8x128xi1>, vector<8x128xf32>
    %c5_i32 = arith.constant 5 : i32
    %544 = vector.broadcast %c5_i32 : i32 to vector<8x128xi32>
    %545 = arith.cmpi eq, %501, %544 : vector<8x128xi32>
    %c5_14 = arith.constant 5 : index
    %546 = memref.load %arg3[%c5_14] : memref<101xf32, #tpu.memory_space<smem>>
    %547 = vector.broadcast %546 : f32 to vector<8x128xf32>
    %548 = arith.select %545, %547, %540 : vector<8x128xi1>, vector<8x128xf32>
    %c5_15 = arith.constant 5 : index
    %549 = memref.load %arg4[%c5_15] : memref<101xf32, #tpu.memory_space<smem>>
    %550 = vector.broadcast %549 : f32 to vector<8x128xf32>
    %551 = arith.select %545, %550, %543 : vector<8x128xi1>, vector<8x128xf32>
    %c6_i32 = arith.constant 6 : i32
    %552 = vector.broadcast %c6_i32 : i32 to vector<8x128xi32>
    %553 = arith.cmpi eq, %501, %552 : vector<8x128xi32>
    %c6_16 = arith.constant 6 : index
    %554 = memref.load %arg3[%c6_16] : memref<101xf32, #tpu.memory_space<smem>>
    %555 = vector.broadcast %554 : f32 to vector<8x128xf32>
    %556 = arith.select %553, %555, %548 : vector<8x128xi1>, vector<8x128xf32>
    %c6_17 = arith.constant 6 : index
    %557 = memref.load %arg4[%c6_17] : memref<101xf32, #tpu.memory_space<smem>>
    %558 = vector.broadcast %557 : f32 to vector<8x128xf32>
    %559 = arith.select %553, %558, %551 : vector<8x128xi1>, vector<8x128xf32>
    %c7_i32 = arith.constant 7 : i32
    %560 = vector.broadcast %c7_i32 : i32 to vector<8x128xi32>
    %561 = arith.cmpi eq, %501, %560 : vector<8x128xi32>
    %c7_18 = arith.constant 7 : index
    %562 = memref.load %arg3[%c7_18] : memref<101xf32, #tpu.memory_space<smem>>
    %563 = vector.broadcast %562 : f32 to vector<8x128xf32>
    %564 = arith.select %561, %563, %556 : vector<8x128xi1>, vector<8x128xf32>
    %c7_19 = arith.constant 7 : index
    %565 = memref.load %arg4[%c7_19] : memref<101xf32, #tpu.memory_space<smem>>
    %566 = vector.broadcast %565 : f32 to vector<8x128xf32>
    %567 = arith.select %561, %566, %559 : vector<8x128xi1>, vector<8x128xf32>
    %c8_i32 = arith.constant 8 : i32
    %568 = vector.broadcast %c8_i32 : i32 to vector<8x128xi32>
    %569 = arith.cmpi eq, %501, %568 : vector<8x128xi32>
    %c8_20 = arith.constant 8 : index
    %570 = memref.load %arg3[%c8_20] : memref<101xf32, #tpu.memory_space<smem>>
    %571 = vector.broadcast %570 : f32 to vector<8x128xf32>
    %572 = arith.select %569, %571, %564 : vector<8x128xi1>, vector<8x128xf32>
    %c8_21 = arith.constant 8 : index
    %573 = memref.load %arg4[%c8_21] : memref<101xf32, #tpu.memory_space<smem>>
    %574 = vector.broadcast %573 : f32 to vector<8x128xf32>
    %575 = arith.select %569, %574, %567 : vector<8x128xi1>, vector<8x128xf32>
    %c9_i32 = arith.constant 9 : i32
    %576 = vector.broadcast %c9_i32 : i32 to vector<8x128xi32>
    %577 = arith.cmpi eq, %501, %576 : vector<8x128xi32>
    %c9_22 = arith.constant 9 : index
    %578 = memref.load %arg3[%c9_22] : memref<101xf32, #tpu.memory_space<smem>>
    %579 = vector.broadcast %578 : f32 to vector<8x128xf32>
    %580 = arith.select %577, %579, %572 : vector<8x128xi1>, vector<8x128xf32>
    %c9_23 = arith.constant 9 : index
    %581 = memref.load %arg4[%c9_23] : memref<101xf32, #tpu.memory_space<smem>>
    %582 = vector.broadcast %581 : f32 to vector<8x128xf32>
    %583 = arith.select %577, %582, %575 : vector<8x128xi1>, vector<8x128xf32>
    %c10_i32 = arith.constant 10 : i32
    %584 = vector.broadcast %c10_i32 : i32 to vector<8x128xi32>
    %585 = arith.cmpi eq, %501, %584 : vector<8x128xi32>
    %c10_24 = arith.constant 10 : index
    %586 = memref.load %arg3[%c10_24] : memref<101xf32, #tpu.memory_space<smem>>
    %587 = vector.broadcast %586 : f32 to vector<8x128xf32>
    %588 = arith.select %585, %587, %580 : vector<8x128xi1>, vector<8x128xf32>
    %c10_25 = arith.constant 10 : index
    %589 = memref.load %arg4[%c10_25] : memref<101xf32, #tpu.memory_space<smem>>
    %590 = vector.broadcast %589 : f32 to vector<8x128xf32>
    %591 = arith.select %585, %590, %583 : vector<8x128xi1>, vector<8x128xf32>
    %c11_i32 = arith.constant 11 : i32
    %592 = vector.broadcast %c11_i32 : i32 to vector<8x128xi32>
    %593 = arith.cmpi eq, %501, %592 : vector<8x128xi32>
    %c11_26 = arith.constant 11 : index
    %594 = memref.load %arg3[%c11_26] : memref<101xf32, #tpu.memory_space<smem>>
    %595 = vector.broadcast %594 : f32 to vector<8x128xf32>
    %596 = arith.select %593, %595, %588 : vector<8x128xi1>, vector<8x128xf32>
    %c11_27 = arith.constant 11 : index
    %597 = memref.load %arg4[%c11_27] : memref<101xf32, #tpu.memory_space<smem>>
    %598 = vector.broadcast %597 : f32 to vector<8x128xf32>
    %599 = arith.select %593, %598, %591 : vector<8x128xi1>, vector<8x128xf32>
    %c12_i32 = arith.constant 12 : i32
    %600 = vector.broadcast %c12_i32 : i32 to vector<8x128xi32>
    %601 = arith.cmpi eq, %501, %600 : vector<8x128xi32>
    %c12_28 = arith.constant 12 : index
    %602 = memref.load %arg3[%c12_28] : memref<101xf32, #tpu.memory_space<smem>>
    %603 = vector.broadcast %602 : f32 to vector<8x128xf32>
    %604 = arith.select %601, %603, %596 : vector<8x128xi1>, vector<8x128xf32>
    %c12_29 = arith.constant 12 : index
    %605 = memref.load %arg4[%c12_29] : memref<101xf32, #tpu.memory_space<smem>>
    %606 = vector.broadcast %605 : f32 to vector<8x128xf32>
    %607 = arith.select %601, %606, %599 : vector<8x128xi1>, vector<8x128xf32>
    %c13_i32 = arith.constant 13 : i32
    %608 = vector.broadcast %c13_i32 : i32 to vector<8x128xi32>
    %609 = arith.cmpi eq, %501, %608 : vector<8x128xi32>
    %c13_30 = arith.constant 13 : index
    %610 = memref.load %arg3[%c13_30] : memref<101xf32, #tpu.memory_space<smem>>
    %611 = vector.broadcast %610 : f32 to vector<8x128xf32>
    %612 = arith.select %609, %611, %604 : vector<8x128xi1>, vector<8x128xf32>
    %c13_31 = arith.constant 13 : index
    %613 = memref.load %arg4[%c13_31] : memref<101xf32, #tpu.memory_space<smem>>
    %614 = vector.broadcast %613 : f32 to vector<8x128xf32>
    %615 = arith.select %609, %614, %607 : vector<8x128xi1>, vector<8x128xf32>
    %c14_i32 = arith.constant 14 : i32
    %616 = vector.broadcast %c14_i32 : i32 to vector<8x128xi32>
    %617 = arith.cmpi eq, %501, %616 : vector<8x128xi32>
    %c14_32 = arith.constant 14 : index
    %618 = memref.load %arg3[%c14_32] : memref<101xf32, #tpu.memory_space<smem>>
    %619 = vector.broadcast %618 : f32 to vector<8x128xf32>
    %620 = arith.select %617, %619, %612 : vector<8x128xi1>, vector<8x128xf32>
    %c14_33 = arith.constant 14 : index
    %621 = memref.load %arg4[%c14_33] : memref<101xf32, #tpu.memory_space<smem>>
    %622 = vector.broadcast %621 : f32 to vector<8x128xf32>
    %623 = arith.select %617, %622, %615 : vector<8x128xi1>, vector<8x128xf32>
    %c15_i32 = arith.constant 15 : i32
    %624 = vector.broadcast %c15_i32 : i32 to vector<8x128xi32>
    %625 = arith.cmpi eq, %501, %624 : vector<8x128xi32>
    %c15_34 = arith.constant 15 : index
    %626 = memref.load %arg3[%c15_34] : memref<101xf32, #tpu.memory_space<smem>>
    %627 = vector.broadcast %626 : f32 to vector<8x128xf32>
    %628 = arith.select %625, %627, %620 : vector<8x128xi1>, vector<8x128xf32>
    %c15_35 = arith.constant 15 : index
    %629 = memref.load %arg4[%c15_35] : memref<101xf32, #tpu.memory_space<smem>>
    %630 = vector.broadcast %629 : f32 to vector<8x128xf32>
    %631 = arith.select %625, %630, %623 : vector<8x128xi1>, vector<8x128xf32>
    %c16_i32 = arith.constant 16 : i32
    %632 = vector.broadcast %c16_i32 : i32 to vector<8x128xi32>
    %633 = arith.cmpi eq, %501, %632 : vector<8x128xi32>
    %c16_36 = arith.constant 16 : index
    %634 = memref.load %arg3[%c16_36] : memref<101xf32, #tpu.memory_space<smem>>
    %635 = vector.broadcast %634 : f32 to vector<8x128xf32>
    %636 = arith.select %633, %635, %628 : vector<8x128xi1>, vector<8x128xf32>
    %c16_37 = arith.constant 16 : index
    %637 = memref.load %arg4[%c16_37] : memref<101xf32, #tpu.memory_space<smem>>
    %638 = vector.broadcast %637 : f32 to vector<8x128xf32>
    %639 = arith.select %633, %638, %631 : vector<8x128xi1>, vector<8x128xf32>
    %c17_i32 = arith.constant 17 : i32
    %640 = vector.broadcast %c17_i32 : i32 to vector<8x128xi32>
    %641 = arith.cmpi eq, %501, %640 : vector<8x128xi32>
    %c17_38 = arith.constant 17 : index
    %642 = memref.load %arg3[%c17_38] : memref<101xf32, #tpu.memory_space<smem>>
    %643 = vector.broadcast %642 : f32 to vector<8x128xf32>
    %644 = arith.select %641, %643, %636 : vector<8x128xi1>, vector<8x128xf32>
    %c17_39 = arith.constant 17 : index
    %645 = memref.load %arg4[%c17_39] : memref<101xf32, #tpu.memory_space<smem>>
    %646 = vector.broadcast %645 : f32 to vector<8x128xf32>
    %647 = arith.select %641, %646, %639 : vector<8x128xi1>, vector<8x128xf32>
    %c18_i32 = arith.constant 18 : i32
    %648 = vector.broadcast %c18_i32 : i32 to vector<8x128xi32>
    %649 = arith.cmpi eq, %501, %648 : vector<8x128xi32>
    %c18_40 = arith.constant 18 : index
    %650 = memref.load %arg3[%c18_40] : memref<101xf32, #tpu.memory_space<smem>>
    %651 = vector.broadcast %650 : f32 to vector<8x128xf32>
    %652 = arith.select %649, %651, %644 : vector<8x128xi1>, vector<8x128xf32>
    %c18_41 = arith.constant 18 : index
    %653 = memref.load %arg4[%c18_41] : memref<101xf32, #tpu.memory_space<smem>>
    %654 = vector.broadcast %653 : f32 to vector<8x128xf32>
    %655 = arith.select %649, %654, %647 : vector<8x128xi1>, vector<8x128xf32>
    %c19_i32 = arith.constant 19 : i32
    %656 = vector.broadcast %c19_i32 : i32 to vector<8x128xi32>
    %657 = arith.cmpi eq, %501, %656 : vector<8x128xi32>
    %c19_42 = arith.constant 19 : index
    %658 = memref.load %arg3[%c19_42] : memref<101xf32, #tpu.memory_space<smem>>
    %659 = vector.broadcast %658 : f32 to vector<8x128xf32>
    %660 = arith.select %657, %659, %652 : vector<8x128xi1>, vector<8x128xf32>
    %c19_43 = arith.constant 19 : index
    %661 = memref.load %arg4[%c19_43] : memref<101xf32, #tpu.memory_space<smem>>
    %662 = vector.broadcast %661 : f32 to vector<8x128xf32>
    %663 = arith.select %657, %662, %655 : vector<8x128xi1>, vector<8x128xf32>
    %c20_i32 = arith.constant 20 : i32
    %664 = vector.broadcast %c20_i32 : i32 to vector<8x128xi32>
    %665 = arith.cmpi eq, %501, %664 : vector<8x128xi32>
    %c20_44 = arith.constant 20 : index
    %666 = memref.load %arg3[%c20_44] : memref<101xf32, #tpu.memory_space<smem>>
    %667 = vector.broadcast %666 : f32 to vector<8x128xf32>
    %668 = arith.select %665, %667, %660 : vector<8x128xi1>, vector<8x128xf32>
    %c20_45 = arith.constant 20 : index
    %669 = memref.load %arg4[%c20_45] : memref<101xf32, #tpu.memory_space<smem>>
    %670 = vector.broadcast %669 : f32 to vector<8x128xf32>
    %671 = arith.select %665, %670, %663 : vector<8x128xi1>, vector<8x128xf32>
    %c21_i32 = arith.constant 21 : i32
    %672 = vector.broadcast %c21_i32 : i32 to vector<8x128xi32>
    %673 = arith.cmpi eq, %501, %672 : vector<8x128xi32>
    %c21_46 = arith.constant 21 : index
    %674 = memref.load %arg3[%c21_46] : memref<101xf32, #tpu.memory_space<smem>>
    %675 = vector.broadcast %674 : f32 to vector<8x128xf32>
    %676 = arith.select %673, %675, %668 : vector<8x128xi1>, vector<8x128xf32>
    %c21_47 = arith.constant 21 : index
    %677 = memref.load %arg4[%c21_47] : memref<101xf32, #tpu.memory_space<smem>>
    %678 = vector.broadcast %677 : f32 to vector<8x128xf32>
    %679 = arith.select %673, %678, %671 : vector<8x128xi1>, vector<8x128xf32>
    %c22_i32 = arith.constant 22 : i32
    %680 = vector.broadcast %c22_i32 : i32 to vector<8x128xi32>
    %681 = arith.cmpi eq, %501, %680 : vector<8x128xi32>
    %c22_48 = arith.constant 22 : index
    %682 = memref.load %arg3[%c22_48] : memref<101xf32, #tpu.memory_space<smem>>
    %683 = vector.broadcast %682 : f32 to vector<8x128xf32>
    %684 = arith.select %681, %683, %676 : vector<8x128xi1>, vector<8x128xf32>
    %c22_49 = arith.constant 22 : index
    %685 = memref.load %arg4[%c22_49] : memref<101xf32, #tpu.memory_space<smem>>
    %686 = vector.broadcast %685 : f32 to vector<8x128xf32>
    %687 = arith.select %681, %686, %679 : vector<8x128xi1>, vector<8x128xf32>
    %c23_i32 = arith.constant 23 : i32
    %688 = vector.broadcast %c23_i32 : i32 to vector<8x128xi32>
    %689 = arith.cmpi eq, %501, %688 : vector<8x128xi32>
    %c23_50 = arith.constant 23 : index
    %690 = memref.load %arg3[%c23_50] : memref<101xf32, #tpu.memory_space<smem>>
    %691 = vector.broadcast %690 : f32 to vector<8x128xf32>
    %692 = arith.select %689, %691, %684 : vector<8x128xi1>, vector<8x128xf32>
    %c23_51 = arith.constant 23 : index
    %693 = memref.load %arg4[%c23_51] : memref<101xf32, #tpu.memory_space<smem>>
    %694 = vector.broadcast %693 : f32 to vector<8x128xf32>
    %695 = arith.select %689, %694, %687 : vector<8x128xi1>, vector<8x128xf32>
    %c24_i32 = arith.constant 24 : i32
    %696 = vector.broadcast %c24_i32 : i32 to vector<8x128xi32>
    %697 = arith.cmpi eq, %501, %696 : vector<8x128xi32>
    %c24_52 = arith.constant 24 : index
    %698 = memref.load %arg3[%c24_52] : memref<101xf32, #tpu.memory_space<smem>>
    %699 = vector.broadcast %698 : f32 to vector<8x128xf32>
    %700 = arith.select %697, %699, %692 : vector<8x128xi1>, vector<8x128xf32>
    %c24_53 = arith.constant 24 : index
    %701 = memref.load %arg4[%c24_53] : memref<101xf32, #tpu.memory_space<smem>>
    %702 = vector.broadcast %701 : f32 to vector<8x128xf32>
    %703 = arith.select %697, %702, %695 : vector<8x128xi1>, vector<8x128xf32>
    %c25_i32 = arith.constant 25 : i32
    %704 = vector.broadcast %c25_i32 : i32 to vector<8x128xi32>
    %705 = arith.cmpi eq, %501, %704 : vector<8x128xi32>
    %c25_54 = arith.constant 25 : index
    %706 = memref.load %arg3[%c25_54] : memref<101xf32, #tpu.memory_space<smem>>
    %707 = vector.broadcast %706 : f32 to vector<8x128xf32>
    %708 = arith.select %705, %707, %700 : vector<8x128xi1>, vector<8x128xf32>
    %c25_55 = arith.constant 25 : index
    %709 = memref.load %arg4[%c25_55] : memref<101xf32, #tpu.memory_space<smem>>
    %710 = vector.broadcast %709 : f32 to vector<8x128xf32>
    %711 = arith.select %705, %710, %703 : vector<8x128xi1>, vector<8x128xf32>
    %c26_i32 = arith.constant 26 : i32
    %712 = vector.broadcast %c26_i32 : i32 to vector<8x128xi32>
    %713 = arith.cmpi eq, %501, %712 : vector<8x128xi32>
    %c26_56 = arith.constant 26 : index
    %714 = memref.load %arg3[%c26_56] : memref<101xf32, #tpu.memory_space<smem>>
    %715 = vector.broadcast %714 : f32 to vector<8x128xf32>
    %716 = arith.select %713, %715, %708 : vector<8x128xi1>, vector<8x128xf32>
    %c26_57 = arith.constant 26 : index
    %717 = memref.load %arg4[%c26_57] : memref<101xf32, #tpu.memory_space<smem>>
    %718 = vector.broadcast %717 : f32 to vector<8x128xf32>
    %719 = arith.select %713, %718, %711 : vector<8x128xi1>, vector<8x128xf32>
    %c27_i32 = arith.constant 27 : i32
    %720 = vector.broadcast %c27_i32 : i32 to vector<8x128xi32>
    %721 = arith.cmpi eq, %501, %720 : vector<8x128xi32>
    %c27_58 = arith.constant 27 : index
    %722 = memref.load %arg3[%c27_58] : memref<101xf32, #tpu.memory_space<smem>>
    %723 = vector.broadcast %722 : f32 to vector<8x128xf32>
    %724 = arith.select %721, %723, %716 : vector<8x128xi1>, vector<8x128xf32>
    %c27_59 = arith.constant 27 : index
    %725 = memref.load %arg4[%c27_59] : memref<101xf32, #tpu.memory_space<smem>>
    %726 = vector.broadcast %725 : f32 to vector<8x128xf32>
    %727 = arith.select %721, %726, %719 : vector<8x128xi1>, vector<8x128xf32>
    %c28_i32 = arith.constant 28 : i32
    %728 = vector.broadcast %c28_i32 : i32 to vector<8x128xi32>
    %729 = arith.cmpi eq, %501, %728 : vector<8x128xi32>
    %c28_60 = arith.constant 28 : index
    %730 = memref.load %arg3[%c28_60] : memref<101xf32, #tpu.memory_space<smem>>
    %731 = vector.broadcast %730 : f32 to vector<8x128xf32>
    %732 = arith.select %729, %731, %724 : vector<8x128xi1>, vector<8x128xf32>
    %c28_61 = arith.constant 28 : index
    %733 = memref.load %arg4[%c28_61] : memref<101xf32, #tpu.memory_space<smem>>
    %734 = vector.broadcast %733 : f32 to vector<8x128xf32>
    %735 = arith.select %729, %734, %727 : vector<8x128xi1>, vector<8x128xf32>
    %c29_i32 = arith.constant 29 : i32
    %736 = vector.broadcast %c29_i32 : i32 to vector<8x128xi32>
    %737 = arith.cmpi eq, %501, %736 : vector<8x128xi32>
    %c29_62 = arith.constant 29 : index
    %738 = memref.load %arg3[%c29_62] : memref<101xf32, #tpu.memory_space<smem>>
    %739 = vector.broadcast %738 : f32 to vector<8x128xf32>
    %740 = arith.select %737, %739, %732 : vector<8x128xi1>, vector<8x128xf32>
    %c29_63 = arith.constant 29 : index
    %741 = memref.load %arg4[%c29_63] : memref<101xf32, #tpu.memory_space<smem>>
    %742 = vector.broadcast %741 : f32 to vector<8x128xf32>
    %743 = arith.select %737, %742, %735 : vector<8x128xi1>, vector<8x128xf32>
    %c30_i32 = arith.constant 30 : i32
    %744 = vector.broadcast %c30_i32 : i32 to vector<8x128xi32>
    %745 = arith.cmpi eq, %501, %744 : vector<8x128xi32>
    %c30_64 = arith.constant 30 : index
    %746 = memref.load %arg3[%c30_64] : memref<101xf32, #tpu.memory_space<smem>>
    %747 = vector.broadcast %746 : f32 to vector<8x128xf32>
    %748 = arith.select %745, %747, %740 : vector<8x128xi1>, vector<8x128xf32>
    %c30_65 = arith.constant 30 : index
    %749 = memref.load %arg4[%c30_65] : memref<101xf32, #tpu.memory_space<smem>>
    %750 = vector.broadcast %749 : f32 to vector<8x128xf32>
    %751 = arith.select %745, %750, %743 : vector<8x128xi1>, vector<8x128xf32>
    %c31_i32 = arith.constant 31 : i32
    %752 = vector.broadcast %c31_i32 : i32 to vector<8x128xi32>
    %753 = arith.cmpi eq, %501, %752 : vector<8x128xi32>
    %c31_66 = arith.constant 31 : index
    %754 = memref.load %arg3[%c31_66] : memref<101xf32, #tpu.memory_space<smem>>
    %755 = vector.broadcast %754 : f32 to vector<8x128xf32>
    %756 = arith.select %753, %755, %748 : vector<8x128xi1>, vector<8x128xf32>
    %c31_67 = arith.constant 31 : index
    %757 = memref.load %arg4[%c31_67] : memref<101xf32, #tpu.memory_space<smem>>
    %758 = vector.broadcast %757 : f32 to vector<8x128xf32>
    %759 = arith.select %753, %758, %751 : vector<8x128xi1>, vector<8x128xf32>
    %c32_i32 = arith.constant 32 : i32
    %760 = vector.broadcast %c32_i32 : i32 to vector<8x128xi32>
    %761 = arith.cmpi eq, %501, %760 : vector<8x128xi32>
    %c32_68 = arith.constant 32 : index
    %762 = memref.load %arg3[%c32_68] : memref<101xf32, #tpu.memory_space<smem>>
    %763 = vector.broadcast %762 : f32 to vector<8x128xf32>
    %764 = arith.select %761, %763, %756 : vector<8x128xi1>, vector<8x128xf32>
    %c32_69 = arith.constant 32 : index
    %765 = memref.load %arg4[%c32_69] : memref<101xf32, #tpu.memory_space<smem>>
    %766 = vector.broadcast %765 : f32 to vector<8x128xf32>
    %767 = arith.select %761, %766, %759 : vector<8x128xi1>, vector<8x128xf32>
    %c33_i32 = arith.constant 33 : i32
    %768 = vector.broadcast %c33_i32 : i32 to vector<8x128xi32>
    %769 = arith.cmpi eq, %501, %768 : vector<8x128xi32>
    %c33_70 = arith.constant 33 : index
    %770 = memref.load %arg3[%c33_70] : memref<101xf32, #tpu.memory_space<smem>>
    %771 = vector.broadcast %770 : f32 to vector<8x128xf32>
    %772 = arith.select %769, %771, %764 : vector<8x128xi1>, vector<8x128xf32>
    %c33_71 = arith.constant 33 : index
    %773 = memref.load %arg4[%c33_71] : memref<101xf32, #tpu.memory_space<smem>>
    %774 = vector.broadcast %773 : f32 to vector<8x128xf32>
    %775 = arith.select %769, %774, %767 : vector<8x128xi1>, vector<8x128xf32>
    %c34_i32 = arith.constant 34 : i32
    %776 = vector.broadcast %c34_i32 : i32 to vector<8x128xi32>
    %777 = arith.cmpi eq, %501, %776 : vector<8x128xi32>
    %c34_72 = arith.constant 34 : index
    %778 = memref.load %arg3[%c34_72] : memref<101xf32, #tpu.memory_space<smem>>
    %779 = vector.broadcast %778 : f32 to vector<8x128xf32>
    %780 = arith.select %777, %779, %772 : vector<8x128xi1>, vector<8x128xf32>
    %c34_73 = arith.constant 34 : index
    %781 = memref.load %arg4[%c34_73] : memref<101xf32, #tpu.memory_space<smem>>
    %782 = vector.broadcast %781 : f32 to vector<8x128xf32>
    %783 = arith.select %777, %782, %775 : vector<8x128xi1>, vector<8x128xf32>
    %c35_i32 = arith.constant 35 : i32
    %784 = vector.broadcast %c35_i32 : i32 to vector<8x128xi32>
    %785 = arith.cmpi eq, %501, %784 : vector<8x128xi32>
    %c35_74 = arith.constant 35 : index
    %786 = memref.load %arg3[%c35_74] : memref<101xf32, #tpu.memory_space<smem>>
    %787 = vector.broadcast %786 : f32 to vector<8x128xf32>
    %788 = arith.select %785, %787, %780 : vector<8x128xi1>, vector<8x128xf32>
    %c35_75 = arith.constant 35 : index
    %789 = memref.load %arg4[%c35_75] : memref<101xf32, #tpu.memory_space<smem>>
    %790 = vector.broadcast %789 : f32 to vector<8x128xf32>
    %791 = arith.select %785, %790, %783 : vector<8x128xi1>, vector<8x128xf32>
    %c36_i32 = arith.constant 36 : i32
    %792 = vector.broadcast %c36_i32 : i32 to vector<8x128xi32>
    %793 = arith.cmpi eq, %501, %792 : vector<8x128xi32>
    %c36_76 = arith.constant 36 : index
    %794 = memref.load %arg3[%c36_76] : memref<101xf32, #tpu.memory_space<smem>>
    %795 = vector.broadcast %794 : f32 to vector<8x128xf32>
    %796 = arith.select %793, %795, %788 : vector<8x128xi1>, vector<8x128xf32>
    %c36_77 = arith.constant 36 : index
    %797 = memref.load %arg4[%c36_77] : memref<101xf32, #tpu.memory_space<smem>>
    %798 = vector.broadcast %797 : f32 to vector<8x128xf32>
    %799 = arith.select %793, %798, %791 : vector<8x128xi1>, vector<8x128xf32>
    %c37_i32 = arith.constant 37 : i32
    %800 = vector.broadcast %c37_i32 : i32 to vector<8x128xi32>
    %801 = arith.cmpi eq, %501, %800 : vector<8x128xi32>
    %c37_78 = arith.constant 37 : index
    %802 = memref.load %arg3[%c37_78] : memref<101xf32, #tpu.memory_space<smem>>
    %803 = vector.broadcast %802 : f32 to vector<8x128xf32>
    %804 = arith.select %801, %803, %796 : vector<8x128xi1>, vector<8x128xf32>
    %c37_79 = arith.constant 37 : index
    %805 = memref.load %arg4[%c37_79] : memref<101xf32, #tpu.memory_space<smem>>
    %806 = vector.broadcast %805 : f32 to vector<8x128xf32>
    %807 = arith.select %801, %806, %799 : vector<8x128xi1>, vector<8x128xf32>
    %c38_i32 = arith.constant 38 : i32
    %808 = vector.broadcast %c38_i32 : i32 to vector<8x128xi32>
    %809 = arith.cmpi eq, %501, %808 : vector<8x128xi32>
    %c38_80 = arith.constant 38 : index
    %810 = memref.load %arg3[%c38_80] : memref<101xf32, #tpu.memory_space<smem>>
    %811 = vector.broadcast %810 : f32 to vector<8x128xf32>
    %812 = arith.select %809, %811, %804 : vector<8x128xi1>, vector<8x128xf32>
    %c38_81 = arith.constant 38 : index
    %813 = memref.load %arg4[%c38_81] : memref<101xf32, #tpu.memory_space<smem>>
    %814 = vector.broadcast %813 : f32 to vector<8x128xf32>
    %815 = arith.select %809, %814, %807 : vector<8x128xi1>, vector<8x128xf32>
    %c39_i32 = arith.constant 39 : i32
    %816 = vector.broadcast %c39_i32 : i32 to vector<8x128xi32>
    %817 = arith.cmpi eq, %501, %816 : vector<8x128xi32>
    %c39_82 = arith.constant 39 : index
    %818 = memref.load %arg3[%c39_82] : memref<101xf32, #tpu.memory_space<smem>>
    %819 = vector.broadcast %818 : f32 to vector<8x128xf32>
    %820 = arith.select %817, %819, %812 : vector<8x128xi1>, vector<8x128xf32>
    %c39_83 = arith.constant 39 : index
    %821 = memref.load %arg4[%c39_83] : memref<101xf32, #tpu.memory_space<smem>>
    %822 = vector.broadcast %821 : f32 to vector<8x128xf32>
    %823 = arith.select %817, %822, %815 : vector<8x128xi1>, vector<8x128xf32>
    %c40_i32 = arith.constant 40 : i32
    %824 = vector.broadcast %c40_i32 : i32 to vector<8x128xi32>
    %825 = arith.cmpi eq, %501, %824 : vector<8x128xi32>
    %c40_84 = arith.constant 40 : index
    %826 = memref.load %arg3[%c40_84] : memref<101xf32, #tpu.memory_space<smem>>
    %827 = vector.broadcast %826 : f32 to vector<8x128xf32>
    %828 = arith.select %825, %827, %820 : vector<8x128xi1>, vector<8x128xf32>
    %c40_85 = arith.constant 40 : index
    %829 = memref.load %arg4[%c40_85] : memref<101xf32, #tpu.memory_space<smem>>
    %830 = vector.broadcast %829 : f32 to vector<8x128xf32>
    %831 = arith.select %825, %830, %823 : vector<8x128xi1>, vector<8x128xf32>
    %c41_i32 = arith.constant 41 : i32
    %832 = vector.broadcast %c41_i32 : i32 to vector<8x128xi32>
    %833 = arith.cmpi eq, %501, %832 : vector<8x128xi32>
    %c41_86 = arith.constant 41 : index
    %834 = memref.load %arg3[%c41_86] : memref<101xf32, #tpu.memory_space<smem>>
    %835 = vector.broadcast %834 : f32 to vector<8x128xf32>
    %836 = arith.select %833, %835, %828 : vector<8x128xi1>, vector<8x128xf32>
    %c41_87 = arith.constant 41 : index
    %837 = memref.load %arg4[%c41_87] : memref<101xf32, #tpu.memory_space<smem>>
    %838 = vector.broadcast %837 : f32 to vector<8x128xf32>
    %839 = arith.select %833, %838, %831 : vector<8x128xi1>, vector<8x128xf32>
    %c42_i32 = arith.constant 42 : i32
    %840 = vector.broadcast %c42_i32 : i32 to vector<8x128xi32>
    %841 = arith.cmpi eq, %501, %840 : vector<8x128xi32>
    %c42_88 = arith.constant 42 : index
    %842 = memref.load %arg3[%c42_88] : memref<101xf32, #tpu.memory_space<smem>>
    %843 = vector.broadcast %842 : f32 to vector<8x128xf32>
    %844 = arith.select %841, %843, %836 : vector<8x128xi1>, vector<8x128xf32>
    %c42_89 = arith.constant 42 : index
    %845 = memref.load %arg4[%c42_89] : memref<101xf32, #tpu.memory_space<smem>>
    %846 = vector.broadcast %845 : f32 to vector<8x128xf32>
    %847 = arith.select %841, %846, %839 : vector<8x128xi1>, vector<8x128xf32>
    %c43_i32 = arith.constant 43 : i32
    %848 = vector.broadcast %c43_i32 : i32 to vector<8x128xi32>
    %849 = arith.cmpi eq, %501, %848 : vector<8x128xi32>
    %c43_90 = arith.constant 43 : index
    %850 = memref.load %arg3[%c43_90] : memref<101xf32, #tpu.memory_space<smem>>
    %851 = vector.broadcast %850 : f32 to vector<8x128xf32>
    %852 = arith.select %849, %851, %844 : vector<8x128xi1>, vector<8x128xf32>
    %c43_91 = arith.constant 43 : index
    %853 = memref.load %arg4[%c43_91] : memref<101xf32, #tpu.memory_space<smem>>
    %854 = vector.broadcast %853 : f32 to vector<8x128xf32>
    %855 = arith.select %849, %854, %847 : vector<8x128xi1>, vector<8x128xf32>
    %c44_i32 = arith.constant 44 : i32
    %856 = vector.broadcast %c44_i32 : i32 to vector<8x128xi32>
    %857 = arith.cmpi eq, %501, %856 : vector<8x128xi32>
    %c44_92 = arith.constant 44 : index
    %858 = memref.load %arg3[%c44_92] : memref<101xf32, #tpu.memory_space<smem>>
    %859 = vector.broadcast %858 : f32 to vector<8x128xf32>
    %860 = arith.select %857, %859, %852 : vector<8x128xi1>, vector<8x128xf32>
    %c44_93 = arith.constant 44 : index
    %861 = memref.load %arg4[%c44_93] : memref<101xf32, #tpu.memory_space<smem>>
    %862 = vector.broadcast %861 : f32 to vector<8x128xf32>
    %863 = arith.select %857, %862, %855 : vector<8x128xi1>, vector<8x128xf32>
    %c45_i32 = arith.constant 45 : i32
    %864 = vector.broadcast %c45_i32 : i32 to vector<8x128xi32>
    %865 = arith.cmpi eq, %501, %864 : vector<8x128xi32>
    %c45_94 = arith.constant 45 : index
    %866 = memref.load %arg3[%c45_94] : memref<101xf32, #tpu.memory_space<smem>>
    %867 = vector.broadcast %866 : f32 to vector<8x128xf32>
    %868 = arith.select %865, %867, %860 : vector<8x128xi1>, vector<8x128xf32>
    %c45_95 = arith.constant 45 : index
    %869 = memref.load %arg4[%c45_95] : memref<101xf32, #tpu.memory_space<smem>>
    %870 = vector.broadcast %869 : f32 to vector<8x128xf32>
    %871 = arith.select %865, %870, %863 : vector<8x128xi1>, vector<8x128xf32>
    %c46_i32 = arith.constant 46 : i32
    %872 = vector.broadcast %c46_i32 : i32 to vector<8x128xi32>
    %873 = arith.cmpi eq, %501, %872 : vector<8x128xi32>
    %c46_96 = arith.constant 46 : index
    %874 = memref.load %arg3[%c46_96] : memref<101xf32, #tpu.memory_space<smem>>
    %875 = vector.broadcast %874 : f32 to vector<8x128xf32>
    %876 = arith.select %873, %875, %868 : vector<8x128xi1>, vector<8x128xf32>
    %c46_97 = arith.constant 46 : index
    %877 = memref.load %arg4[%c46_97] : memref<101xf32, #tpu.memory_space<smem>>
    %878 = vector.broadcast %877 : f32 to vector<8x128xf32>
    %879 = arith.select %873, %878, %871 : vector<8x128xi1>, vector<8x128xf32>
    %c47_i32 = arith.constant 47 : i32
    %880 = vector.broadcast %c47_i32 : i32 to vector<8x128xi32>
    %881 = arith.cmpi eq, %501, %880 : vector<8x128xi32>
    %c47_98 = arith.constant 47 : index
    %882 = memref.load %arg3[%c47_98] : memref<101xf32, #tpu.memory_space<smem>>
    %883 = vector.broadcast %882 : f32 to vector<8x128xf32>
    %884 = arith.select %881, %883, %876 : vector<8x128xi1>, vector<8x128xf32>
    %c47_99 = arith.constant 47 : index
    %885 = memref.load %arg4[%c47_99] : memref<101xf32, #tpu.memory_space<smem>>
    %886 = vector.broadcast %885 : f32 to vector<8x128xf32>
    %887 = arith.select %881, %886, %879 : vector<8x128xi1>, vector<8x128xf32>
    %c48_i32 = arith.constant 48 : i32
    %888 = vector.broadcast %c48_i32 : i32 to vector<8x128xi32>
    %889 = arith.cmpi eq, %501, %888 : vector<8x128xi32>
    %c48_100 = arith.constant 48 : index
    %890 = memref.load %arg3[%c48_100] : memref<101xf32, #tpu.memory_space<smem>>
    %891 = vector.broadcast %890 : f32 to vector<8x128xf32>
    %892 = arith.select %889, %891, %884 : vector<8x128xi1>, vector<8x128xf32>
    %c48_101 = arith.constant 48 : index
    %893 = memref.load %arg4[%c48_101] : memref<101xf32, #tpu.memory_space<smem>>
    %894 = vector.broadcast %893 : f32 to vector<8x128xf32>
    %895 = arith.select %889, %894, %887 : vector<8x128xi1>, vector<8x128xf32>
    %c49_i32 = arith.constant 49 : i32
    %896 = vector.broadcast %c49_i32 : i32 to vector<8x128xi32>
    %897 = arith.cmpi eq, %501, %896 : vector<8x128xi32>
    %c49_102 = arith.constant 49 : index
    %898 = memref.load %arg3[%c49_102] : memref<101xf32, #tpu.memory_space<smem>>
    %899 = vector.broadcast %898 : f32 to vector<8x128xf32>
    %900 = arith.select %897, %899, %892 : vector<8x128xi1>, vector<8x128xf32>
    %c49_103 = arith.constant 49 : index
    %901 = memref.load %arg4[%c49_103] : memref<101xf32, #tpu.memory_space<smem>>
    %902 = vector.broadcast %901 : f32 to vector<8x128xf32>
    %903 = arith.select %897, %902, %895 : vector<8x128xi1>, vector<8x128xf32>
    %c50_i32 = arith.constant 50 : i32
    %904 = vector.broadcast %c50_i32 : i32 to vector<8x128xi32>
    %905 = arith.cmpi eq, %501, %904 : vector<8x128xi32>
    %c50_104 = arith.constant 50 : index
    %906 = memref.load %arg3[%c50_104] : memref<101xf32, #tpu.memory_space<smem>>
    %907 = vector.broadcast %906 : f32 to vector<8x128xf32>
    %908 = arith.select %905, %907, %900 : vector<8x128xi1>, vector<8x128xf32>
    %c50_105 = arith.constant 50 : index
    %909 = memref.load %arg4[%c50_105] : memref<101xf32, #tpu.memory_space<smem>>
    %910 = vector.broadcast %909 : f32 to vector<8x128xf32>
    %911 = arith.select %905, %910, %903 : vector<8x128xi1>, vector<8x128xf32>
    %c51_i32 = arith.constant 51 : i32
    %912 = vector.broadcast %c51_i32 : i32 to vector<8x128xi32>
    %913 = arith.cmpi eq, %501, %912 : vector<8x128xi32>
    %c51_106 = arith.constant 51 : index
    %914 = memref.load %arg3[%c51_106] : memref<101xf32, #tpu.memory_space<smem>>
    %915 = vector.broadcast %914 : f32 to vector<8x128xf32>
    %916 = arith.select %913, %915, %908 : vector<8x128xi1>, vector<8x128xf32>
    %c51_107 = arith.constant 51 : index
    %917 = memref.load %arg4[%c51_107] : memref<101xf32, #tpu.memory_space<smem>>
    %918 = vector.broadcast %917 : f32 to vector<8x128xf32>
    %919 = arith.select %913, %918, %911 : vector<8x128xi1>, vector<8x128xf32>
    %c52_i32 = arith.constant 52 : i32
    %920 = vector.broadcast %c52_i32 : i32 to vector<8x128xi32>
    %921 = arith.cmpi eq, %501, %920 : vector<8x128xi32>
    %c52_108 = arith.constant 52 : index
    %922 = memref.load %arg3[%c52_108] : memref<101xf32, #tpu.memory_space<smem>>
    %923 = vector.broadcast %922 : f32 to vector<8x128xf32>
    %924 = arith.select %921, %923, %916 : vector<8x128xi1>, vector<8x128xf32>
    %c52_109 = arith.constant 52 : index
    %925 = memref.load %arg4[%c52_109] : memref<101xf32, #tpu.memory_space<smem>>
    %926 = vector.broadcast %925 : f32 to vector<8x128xf32>
    %927 = arith.select %921, %926, %919 : vector<8x128xi1>, vector<8x128xf32>
    %c53_i32 = arith.constant 53 : i32
    %928 = vector.broadcast %c53_i32 : i32 to vector<8x128xi32>
    %929 = arith.cmpi eq, %501, %928 : vector<8x128xi32>
    %c53_110 = arith.constant 53 : index
    %930 = memref.load %arg3[%c53_110] : memref<101xf32, #tpu.memory_space<smem>>
    %931 = vector.broadcast %930 : f32 to vector<8x128xf32>
    %932 = arith.select %929, %931, %924 : vector<8x128xi1>, vector<8x128xf32>
    %c53_111 = arith.constant 53 : index
    %933 = memref.load %arg4[%c53_111] : memref<101xf32, #tpu.memory_space<smem>>
    %934 = vector.broadcast %933 : f32 to vector<8x128xf32>
    %935 = arith.select %929, %934, %927 : vector<8x128xi1>, vector<8x128xf32>
    %c54_i32 = arith.constant 54 : i32
    %936 = vector.broadcast %c54_i32 : i32 to vector<8x128xi32>
    %937 = arith.cmpi eq, %501, %936 : vector<8x128xi32>
    %c54_112 = arith.constant 54 : index
    %938 = memref.load %arg3[%c54_112] : memref<101xf32, #tpu.memory_space<smem>>
    %939 = vector.broadcast %938 : f32 to vector<8x128xf32>
    %940 = arith.select %937, %939, %932 : vector<8x128xi1>, vector<8x128xf32>
    %c54_113 = arith.constant 54 : index
    %941 = memref.load %arg4[%c54_113] : memref<101xf32, #tpu.memory_space<smem>>
    %942 = vector.broadcast %941 : f32 to vector<8x128xf32>
    %943 = arith.select %937, %942, %935 : vector<8x128xi1>, vector<8x128xf32>
    %c55_i32 = arith.constant 55 : i32
    %944 = vector.broadcast %c55_i32 : i32 to vector<8x128xi32>
    %945 = arith.cmpi eq, %501, %944 : vector<8x128xi32>
    %c55_114 = arith.constant 55 : index
    %946 = memref.load %arg3[%c55_114] : memref<101xf32, #tpu.memory_space<smem>>
    %947 = vector.broadcast %946 : f32 to vector<8x128xf32>
    %948 = arith.select %945, %947, %940 : vector<8x128xi1>, vector<8x128xf32>
    %c55_115 = arith.constant 55 : index
    %949 = memref.load %arg4[%c55_115] : memref<101xf32, #tpu.memory_space<smem>>
    %950 = vector.broadcast %949 : f32 to vector<8x128xf32>
    %951 = arith.select %945, %950, %943 : vector<8x128xi1>, vector<8x128xf32>
    %c56_i32 = arith.constant 56 : i32
    %952 = vector.broadcast %c56_i32 : i32 to vector<8x128xi32>
    %953 = arith.cmpi eq, %501, %952 : vector<8x128xi32>
    %c56_116 = arith.constant 56 : index
    %954 = memref.load %arg3[%c56_116] : memref<101xf32, #tpu.memory_space<smem>>
    %955 = vector.broadcast %954 : f32 to vector<8x128xf32>
    %956 = arith.select %953, %955, %948 : vector<8x128xi1>, vector<8x128xf32>
    %c56_117 = arith.constant 56 : index
    %957 = memref.load %arg4[%c56_117] : memref<101xf32, #tpu.memory_space<smem>>
    %958 = vector.broadcast %957 : f32 to vector<8x128xf32>
    %959 = arith.select %953, %958, %951 : vector<8x128xi1>, vector<8x128xf32>
    %c57_i32 = arith.constant 57 : i32
    %960 = vector.broadcast %c57_i32 : i32 to vector<8x128xi32>
    %961 = arith.cmpi eq, %501, %960 : vector<8x128xi32>
    %c57_118 = arith.constant 57 : index
    %962 = memref.load %arg3[%c57_118] : memref<101xf32, #tpu.memory_space<smem>>
    %963 = vector.broadcast %962 : f32 to vector<8x128xf32>
    %964 = arith.select %961, %963, %956 : vector<8x128xi1>, vector<8x128xf32>
    %c57_119 = arith.constant 57 : index
    %965 = memref.load %arg4[%c57_119] : memref<101xf32, #tpu.memory_space<smem>>
    %966 = vector.broadcast %965 : f32 to vector<8x128xf32>
    %967 = arith.select %961, %966, %959 : vector<8x128xi1>, vector<8x128xf32>
    %c58_i32 = arith.constant 58 : i32
    %968 = vector.broadcast %c58_i32 : i32 to vector<8x128xi32>
    %969 = arith.cmpi eq, %501, %968 : vector<8x128xi32>
    %c58_120 = arith.constant 58 : index
    %970 = memref.load %arg3[%c58_120] : memref<101xf32, #tpu.memory_space<smem>>
    %971 = vector.broadcast %970 : f32 to vector<8x128xf32>
    %972 = arith.select %969, %971, %964 : vector<8x128xi1>, vector<8x128xf32>
    %c58_121 = arith.constant 58 : index
    %973 = memref.load %arg4[%c58_121] : memref<101xf32, #tpu.memory_space<smem>>
    %974 = vector.broadcast %973 : f32 to vector<8x128xf32>
    %975 = arith.select %969, %974, %967 : vector<8x128xi1>, vector<8x128xf32>
    %c59_i32 = arith.constant 59 : i32
    %976 = vector.broadcast %c59_i32 : i32 to vector<8x128xi32>
    %977 = arith.cmpi eq, %501, %976 : vector<8x128xi32>
    %c59_122 = arith.constant 59 : index
    %978 = memref.load %arg3[%c59_122] : memref<101xf32, #tpu.memory_space<smem>>
    %979 = vector.broadcast %978 : f32 to vector<8x128xf32>
    %980 = arith.select %977, %979, %972 : vector<8x128xi1>, vector<8x128xf32>
    %c59_123 = arith.constant 59 : index
    %981 = memref.load %arg4[%c59_123] : memref<101xf32, #tpu.memory_space<smem>>
    %982 = vector.broadcast %981 : f32 to vector<8x128xf32>
    %983 = arith.select %977, %982, %975 : vector<8x128xi1>, vector<8x128xf32>
    %c60_i32 = arith.constant 60 : i32
    %984 = vector.broadcast %c60_i32 : i32 to vector<8x128xi32>
    %985 = arith.cmpi eq, %501, %984 : vector<8x128xi32>
    %c60_124 = arith.constant 60 : index
    %986 = memref.load %arg3[%c60_124] : memref<101xf32, #tpu.memory_space<smem>>
    %987 = vector.broadcast %986 : f32 to vector<8x128xf32>
    %988 = arith.select %985, %987, %980 : vector<8x128xi1>, vector<8x128xf32>
    %c60_125 = arith.constant 60 : index
    %989 = memref.load %arg4[%c60_125] : memref<101xf32, #tpu.memory_space<smem>>
    %990 = vector.broadcast %989 : f32 to vector<8x128xf32>
    %991 = arith.select %985, %990, %983 : vector<8x128xi1>, vector<8x128xf32>
    %c61_i32 = arith.constant 61 : i32
    %992 = vector.broadcast %c61_i32 : i32 to vector<8x128xi32>
    %993 = arith.cmpi eq, %501, %992 : vector<8x128xi32>
    %c61_126 = arith.constant 61 : index
    %994 = memref.load %arg3[%c61_126] : memref<101xf32, #tpu.memory_space<smem>>
    %995 = vector.broadcast %994 : f32 to vector<8x128xf32>
    %996 = arith.select %993, %995, %988 : vector<8x128xi1>, vector<8x128xf32>
    %c61_127 = arith.constant 61 : index
    %997 = memref.load %arg4[%c61_127] : memref<101xf32, #tpu.memory_space<smem>>
    %998 = vector.broadcast %997 : f32 to vector<8x128xf32>
    %999 = arith.select %993, %998, %991 : vector<8x128xi1>, vector<8x128xf32>
    %c62_i32 = arith.constant 62 : i32
    %1000 = vector.broadcast %c62_i32 : i32 to vector<8x128xi32>
    %1001 = arith.cmpi eq, %501, %1000 : vector<8x128xi32>
    %c62_128 = arith.constant 62 : index
    %1002 = memref.load %arg3[%c62_128] : memref<101xf32, #tpu.memory_space<smem>>
    %1003 = vector.broadcast %1002 : f32 to vector<8x128xf32>
    %1004 = arith.select %1001, %1003, %996 : vector<8x128xi1>, vector<8x128xf32>
    %c62_129 = arith.constant 62 : index
    %1005 = memref.load %arg4[%c62_129] : memref<101xf32, #tpu.memory_space<smem>>
    %1006 = vector.broadcast %1005 : f32 to vector<8x128xf32>
    %1007 = arith.select %1001, %1006, %999 : vector<8x128xi1>, vector<8x128xf32>
    %c63_i32 = arith.constant 63 : i32
    %1008 = vector.broadcast %c63_i32 : i32 to vector<8x128xi32>
    %1009 = arith.cmpi eq, %501, %1008 : vector<8x128xi32>
    %c63_130 = arith.constant 63 : index
    %1010 = memref.load %arg3[%c63_130] : memref<101xf32, #tpu.memory_space<smem>>
    %1011 = vector.broadcast %1010 : f32 to vector<8x128xf32>
    %1012 = arith.select %1009, %1011, %1004 : vector<8x128xi1>, vector<8x128xf32>
    %c63_131 = arith.constant 63 : index
    %1013 = memref.load %arg4[%c63_131] : memref<101xf32, #tpu.memory_space<smem>>
    %1014 = vector.broadcast %1013 : f32 to vector<8x128xf32>
    %1015 = arith.select %1009, %1014, %1007 : vector<8x128xi1>, vector<8x128xf32>
    %c64_i32 = arith.constant 64 : i32
    %1016 = vector.broadcast %c64_i32 : i32 to vector<8x128xi32>
    %1017 = arith.cmpi eq, %501, %1016 : vector<8x128xi32>
    %c64_132 = arith.constant 64 : index
    %1018 = memref.load %arg3[%c64_132] : memref<101xf32, #tpu.memory_space<smem>>
    %1019 = vector.broadcast %1018 : f32 to vector<8x128xf32>
    %1020 = arith.select %1017, %1019, %1012 : vector<8x128xi1>, vector<8x128xf32>
    %c64_133 = arith.constant 64 : index
    %1021 = memref.load %arg4[%c64_133] : memref<101xf32, #tpu.memory_space<smem>>
    %1022 = vector.broadcast %1021 : f32 to vector<8x128xf32>
    %1023 = arith.select %1017, %1022, %1015 : vector<8x128xi1>, vector<8x128xf32>
    %c65_i32 = arith.constant 65 : i32
    %1024 = vector.broadcast %c65_i32 : i32 to vector<8x128xi32>
    %1025 = arith.cmpi eq, %501, %1024 : vector<8x128xi32>
    %c65_134 = arith.constant 65 : index
    %1026 = memref.load %arg3[%c65_134] : memref<101xf32, #tpu.memory_space<smem>>
    %1027 = vector.broadcast %1026 : f32 to vector<8x128xf32>
    %1028 = arith.select %1025, %1027, %1020 : vector<8x128xi1>, vector<8x128xf32>
    %c65_135 = arith.constant 65 : index
    %1029 = memref.load %arg4[%c65_135] : memref<101xf32, #tpu.memory_space<smem>>
    %1030 = vector.broadcast %1029 : f32 to vector<8x128xf32>
    %1031 = arith.select %1025, %1030, %1023 : vector<8x128xi1>, vector<8x128xf32>
    %c66_i32 = arith.constant 66 : i32
    %1032 = vector.broadcast %c66_i32 : i32 to vector<8x128xi32>
    %1033 = arith.cmpi eq, %501, %1032 : vector<8x128xi32>
    %c66_136 = arith.constant 66 : index
    %1034 = memref.load %arg3[%c66_136] : memref<101xf32, #tpu.memory_space<smem>>
    %1035 = vector.broadcast %1034 : f32 to vector<8x128xf32>
    %1036 = arith.select %1033, %1035, %1028 : vector<8x128xi1>, vector<8x128xf32>
    %c66_137 = arith.constant 66 : index
    %1037 = memref.load %arg4[%c66_137] : memref<101xf32, #tpu.memory_space<smem>>
    %1038 = vector.broadcast %1037 : f32 to vector<8x128xf32>
    %1039 = arith.select %1033, %1038, %1031 : vector<8x128xi1>, vector<8x128xf32>
    %c67_i32 = arith.constant 67 : i32
    %1040 = vector.broadcast %c67_i32 : i32 to vector<8x128xi32>
    %1041 = arith.cmpi eq, %501, %1040 : vector<8x128xi32>
    %c67_138 = arith.constant 67 : index
    %1042 = memref.load %arg3[%c67_138] : memref<101xf32, #tpu.memory_space<smem>>
    %1043 = vector.broadcast %1042 : f32 to vector<8x128xf32>
    %1044 = arith.select %1041, %1043, %1036 : vector<8x128xi1>, vector<8x128xf32>
    %c67_139 = arith.constant 67 : index
    %1045 = memref.load %arg4[%c67_139] : memref<101xf32, #tpu.memory_space<smem>>
    %1046 = vector.broadcast %1045 : f32 to vector<8x128xf32>
    %1047 = arith.select %1041, %1046, %1039 : vector<8x128xi1>, vector<8x128xf32>
    %c68_i32 = arith.constant 68 : i32
    %1048 = vector.broadcast %c68_i32 : i32 to vector<8x128xi32>
    %1049 = arith.cmpi eq, %501, %1048 : vector<8x128xi32>
    %c68_140 = arith.constant 68 : index
    %1050 = memref.load %arg3[%c68_140] : memref<101xf32, #tpu.memory_space<smem>>
    %1051 = vector.broadcast %1050 : f32 to vector<8x128xf32>
    %1052 = arith.select %1049, %1051, %1044 : vector<8x128xi1>, vector<8x128xf32>
    %c68_141 = arith.constant 68 : index
    %1053 = memref.load %arg4[%c68_141] : memref<101xf32, #tpu.memory_space<smem>>
    %1054 = vector.broadcast %1053 : f32 to vector<8x128xf32>
    %1055 = arith.select %1049, %1054, %1047 : vector<8x128xi1>, vector<8x128xf32>
    %c69_i32 = arith.constant 69 : i32
    %1056 = vector.broadcast %c69_i32 : i32 to vector<8x128xi32>
    %1057 = arith.cmpi eq, %501, %1056 : vector<8x128xi32>
    %c69_142 = arith.constant 69 : index
    %1058 = memref.load %arg3[%c69_142] : memref<101xf32, #tpu.memory_space<smem>>
    %1059 = vector.broadcast %1058 : f32 to vector<8x128xf32>
    %1060 = arith.select %1057, %1059, %1052 : vector<8x128xi1>, vector<8x128xf32>
    %c69_143 = arith.constant 69 : index
    %1061 = memref.load %arg4[%c69_143] : memref<101xf32, #tpu.memory_space<smem>>
    %1062 = vector.broadcast %1061 : f32 to vector<8x128xf32>
    %1063 = arith.select %1057, %1062, %1055 : vector<8x128xi1>, vector<8x128xf32>
    %c70_i32 = arith.constant 70 : i32
    %1064 = vector.broadcast %c70_i32 : i32 to vector<8x128xi32>
    %1065 = arith.cmpi eq, %501, %1064 : vector<8x128xi32>
    %c70_144 = arith.constant 70 : index
    %1066 = memref.load %arg3[%c70_144] : memref<101xf32, #tpu.memory_space<smem>>
    %1067 = vector.broadcast %1066 : f32 to vector<8x128xf32>
    %1068 = arith.select %1065, %1067, %1060 : vector<8x128xi1>, vector<8x128xf32>
    %c70_145 = arith.constant 70 : index
    %1069 = memref.load %arg4[%c70_145] : memref<101xf32, #tpu.memory_space<smem>>
    %1070 = vector.broadcast %1069 : f32 to vector<8x128xf32>
    %1071 = arith.select %1065, %1070, %1063 : vector<8x128xi1>, vector<8x128xf32>
    %c71_i32 = arith.constant 71 : i32
    %1072 = vector.broadcast %c71_i32 : i32 to vector<8x128xi32>
    %1073 = arith.cmpi eq, %501, %1072 : vector<8x128xi32>
    %c71_146 = arith.constant 71 : index
    %1074 = memref.load %arg3[%c71_146] : memref<101xf32, #tpu.memory_space<smem>>
    %1075 = vector.broadcast %1074 : f32 to vector<8x128xf32>
    %1076 = arith.select %1073, %1075, %1068 : vector<8x128xi1>, vector<8x128xf32>
    %c71_147 = arith.constant 71 : index
    %1077 = memref.load %arg4[%c71_147] : memref<101xf32, #tpu.memory_space<smem>>
    %1078 = vector.broadcast %1077 : f32 to vector<8x128xf32>
    %1079 = arith.select %1073, %1078, %1071 : vector<8x128xi1>, vector<8x128xf32>
    %c72_i32 = arith.constant 72 : i32
    %1080 = vector.broadcast %c72_i32 : i32 to vector<8x128xi32>
    %1081 = arith.cmpi eq, %501, %1080 : vector<8x128xi32>
    %c72_148 = arith.constant 72 : index
    %1082 = memref.load %arg3[%c72_148] : memref<101xf32, #tpu.memory_space<smem>>
    %1083 = vector.broadcast %1082 : f32 to vector<8x128xf32>
    %1084 = arith.select %1081, %1083, %1076 : vector<8x128xi1>, vector<8x128xf32>
    %c72_149 = arith.constant 72 : index
    %1085 = memref.load %arg4[%c72_149] : memref<101xf32, #tpu.memory_space<smem>>
    %1086 = vector.broadcast %1085 : f32 to vector<8x128xf32>
    %1087 = arith.select %1081, %1086, %1079 : vector<8x128xi1>, vector<8x128xf32>
    %c73_i32 = arith.constant 73 : i32
    %1088 = vector.broadcast %c73_i32 : i32 to vector<8x128xi32>
    %1089 = arith.cmpi eq, %501, %1088 : vector<8x128xi32>
    %c73_150 = arith.constant 73 : index
    %1090 = memref.load %arg3[%c73_150] : memref<101xf32, #tpu.memory_space<smem>>
    %1091 = vector.broadcast %1090 : f32 to vector<8x128xf32>
    %1092 = arith.select %1089, %1091, %1084 : vector<8x128xi1>, vector<8x128xf32>
    %c73_151 = arith.constant 73 : index
    %1093 = memref.load %arg4[%c73_151] : memref<101xf32, #tpu.memory_space<smem>>
    %1094 = vector.broadcast %1093 : f32 to vector<8x128xf32>
    %1095 = arith.select %1089, %1094, %1087 : vector<8x128xi1>, vector<8x128xf32>
    %c74_i32 = arith.constant 74 : i32
    %1096 = vector.broadcast %c74_i32 : i32 to vector<8x128xi32>
    %1097 = arith.cmpi eq, %501, %1096 : vector<8x128xi32>
    %c74_152 = arith.constant 74 : index
    %1098 = memref.load %arg3[%c74_152] : memref<101xf32, #tpu.memory_space<smem>>
    %1099 = vector.broadcast %1098 : f32 to vector<8x128xf32>
    %1100 = arith.select %1097, %1099, %1092 : vector<8x128xi1>, vector<8x128xf32>
    %c74_153 = arith.constant 74 : index
    %1101 = memref.load %arg4[%c74_153] : memref<101xf32, #tpu.memory_space<smem>>
    %1102 = vector.broadcast %1101 : f32 to vector<8x128xf32>
    %1103 = arith.select %1097, %1102, %1095 : vector<8x128xi1>, vector<8x128xf32>
    %c75_i32 = arith.constant 75 : i32
    %1104 = vector.broadcast %c75_i32 : i32 to vector<8x128xi32>
    %1105 = arith.cmpi eq, %501, %1104 : vector<8x128xi32>
    %c75_154 = arith.constant 75 : index
    %1106 = memref.load %arg3[%c75_154] : memref<101xf32, #tpu.memory_space<smem>>
    %1107 = vector.broadcast %1106 : f32 to vector<8x128xf32>
    %1108 = arith.select %1105, %1107, %1100 : vector<8x128xi1>, vector<8x128xf32>
    %c75_155 = arith.constant 75 : index
    %1109 = memref.load %arg4[%c75_155] : memref<101xf32, #tpu.memory_space<smem>>
    %1110 = vector.broadcast %1109 : f32 to vector<8x128xf32>
    %1111 = arith.select %1105, %1110, %1103 : vector<8x128xi1>, vector<8x128xf32>
    %c76_i32 = arith.constant 76 : i32
    %1112 = vector.broadcast %c76_i32 : i32 to vector<8x128xi32>
    %1113 = arith.cmpi eq, %501, %1112 : vector<8x128xi32>
    %c76_156 = arith.constant 76 : index
    %1114 = memref.load %arg3[%c76_156] : memref<101xf32, #tpu.memory_space<smem>>
    %1115 = vector.broadcast %1114 : f32 to vector<8x128xf32>
    %1116 = arith.select %1113, %1115, %1108 : vector<8x128xi1>, vector<8x128xf32>
    %c76_157 = arith.constant 76 : index
    %1117 = memref.load %arg4[%c76_157] : memref<101xf32, #tpu.memory_space<smem>>
    %1118 = vector.broadcast %1117 : f32 to vector<8x128xf32>
    %1119 = arith.select %1113, %1118, %1111 : vector<8x128xi1>, vector<8x128xf32>
    %c77_i32 = arith.constant 77 : i32
    %1120 = vector.broadcast %c77_i32 : i32 to vector<8x128xi32>
    %1121 = arith.cmpi eq, %501, %1120 : vector<8x128xi32>
    %c77_158 = arith.constant 77 : index
    %1122 = memref.load %arg3[%c77_158] : memref<101xf32, #tpu.memory_space<smem>>
    %1123 = vector.broadcast %1122 : f32 to vector<8x128xf32>
    %1124 = arith.select %1121, %1123, %1116 : vector<8x128xi1>, vector<8x128xf32>
    %c77_159 = arith.constant 77 : index
    %1125 = memref.load %arg4[%c77_159] : memref<101xf32, #tpu.memory_space<smem>>
    %1126 = vector.broadcast %1125 : f32 to vector<8x128xf32>
    %1127 = arith.select %1121, %1126, %1119 : vector<8x128xi1>, vector<8x128xf32>
    %c78_i32 = arith.constant 78 : i32
    %1128 = vector.broadcast %c78_i32 : i32 to vector<8x128xi32>
    %1129 = arith.cmpi eq, %501, %1128 : vector<8x128xi32>
    %c78_160 = arith.constant 78 : index
    %1130 = memref.load %arg3[%c78_160] : memref<101xf32, #tpu.memory_space<smem>>
    %1131 = vector.broadcast %1130 : f32 to vector<8x128xf32>
    %1132 = arith.select %1129, %1131, %1124 : vector<8x128xi1>, vector<8x128xf32>
    %c78_161 = arith.constant 78 : index
    %1133 = memref.load %arg4[%c78_161] : memref<101xf32, #tpu.memory_space<smem>>
    %1134 = vector.broadcast %1133 : f32 to vector<8x128xf32>
    %1135 = arith.select %1129, %1134, %1127 : vector<8x128xi1>, vector<8x128xf32>
    %c79_i32 = arith.constant 79 : i32
    %1136 = vector.broadcast %c79_i32 : i32 to vector<8x128xi32>
    %1137 = arith.cmpi eq, %501, %1136 : vector<8x128xi32>
    %c79_162 = arith.constant 79 : index
    %1138 = memref.load %arg3[%c79_162] : memref<101xf32, #tpu.memory_space<smem>>
    %1139 = vector.broadcast %1138 : f32 to vector<8x128xf32>
    %1140 = arith.select %1137, %1139, %1132 : vector<8x128xi1>, vector<8x128xf32>
    %c79_163 = arith.constant 79 : index
    %1141 = memref.load %arg4[%c79_163] : memref<101xf32, #tpu.memory_space<smem>>
    %1142 = vector.broadcast %1141 : f32 to vector<8x128xf32>
    %1143 = arith.select %1137, %1142, %1135 : vector<8x128xi1>, vector<8x128xf32>
    %c80_i32 = arith.constant 80 : i32
    %1144 = vector.broadcast %c80_i32 : i32 to vector<8x128xi32>
    %1145 = arith.cmpi eq, %501, %1144 : vector<8x128xi32>
    %c80_164 = arith.constant 80 : index
    %1146 = memref.load %arg3[%c80_164] : memref<101xf32, #tpu.memory_space<smem>>
    %1147 = vector.broadcast %1146 : f32 to vector<8x128xf32>
    %1148 = arith.select %1145, %1147, %1140 : vector<8x128xi1>, vector<8x128xf32>
    %c80_165 = arith.constant 80 : index
    %1149 = memref.load %arg4[%c80_165] : memref<101xf32, #tpu.memory_space<smem>>
    %1150 = vector.broadcast %1149 : f32 to vector<8x128xf32>
    %1151 = arith.select %1145, %1150, %1143 : vector<8x128xi1>, vector<8x128xf32>
    %c81_i32 = arith.constant 81 : i32
    %1152 = vector.broadcast %c81_i32 : i32 to vector<8x128xi32>
    %1153 = arith.cmpi eq, %501, %1152 : vector<8x128xi32>
    %c81_166 = arith.constant 81 : index
    %1154 = memref.load %arg3[%c81_166] : memref<101xf32, #tpu.memory_space<smem>>
    %1155 = vector.broadcast %1154 : f32 to vector<8x128xf32>
    %1156 = arith.select %1153, %1155, %1148 : vector<8x128xi1>, vector<8x128xf32>
    %c81_167 = arith.constant 81 : index
    %1157 = memref.load %arg4[%c81_167] : memref<101xf32, #tpu.memory_space<smem>>
    %1158 = vector.broadcast %1157 : f32 to vector<8x128xf32>
    %1159 = arith.select %1153, %1158, %1151 : vector<8x128xi1>, vector<8x128xf32>
    %c82_i32 = arith.constant 82 : i32
    %1160 = vector.broadcast %c82_i32 : i32 to vector<8x128xi32>
    %1161 = arith.cmpi eq, %501, %1160 : vector<8x128xi32>
    %c82_168 = arith.constant 82 : index
    %1162 = memref.load %arg3[%c82_168] : memref<101xf32, #tpu.memory_space<smem>>
    %1163 = vector.broadcast %1162 : f32 to vector<8x128xf32>
    %1164 = arith.select %1161, %1163, %1156 : vector<8x128xi1>, vector<8x128xf32>
    %c82_169 = arith.constant 82 : index
    %1165 = memref.load %arg4[%c82_169] : memref<101xf32, #tpu.memory_space<smem>>
    %1166 = vector.broadcast %1165 : f32 to vector<8x128xf32>
    %1167 = arith.select %1161, %1166, %1159 : vector<8x128xi1>, vector<8x128xf32>
    %c83_i32 = arith.constant 83 : i32
    %1168 = vector.broadcast %c83_i32 : i32 to vector<8x128xi32>
    %1169 = arith.cmpi eq, %501, %1168 : vector<8x128xi32>
    %c83_170 = arith.constant 83 : index
    %1170 = memref.load %arg3[%c83_170] : memref<101xf32, #tpu.memory_space<smem>>
    %1171 = vector.broadcast %1170 : f32 to vector<8x128xf32>
    %1172 = arith.select %1169, %1171, %1164 : vector<8x128xi1>, vector<8x128xf32>
    %c83_171 = arith.constant 83 : index
    %1173 = memref.load %arg4[%c83_171] : memref<101xf32, #tpu.memory_space<smem>>
    %1174 = vector.broadcast %1173 : f32 to vector<8x128xf32>
    %1175 = arith.select %1169, %1174, %1167 : vector<8x128xi1>, vector<8x128xf32>
    %c84_i32 = arith.constant 84 : i32
    %1176 = vector.broadcast %c84_i32 : i32 to vector<8x128xi32>
    %1177 = arith.cmpi eq, %501, %1176 : vector<8x128xi32>
    %c84_172 = arith.constant 84 : index
    %1178 = memref.load %arg3[%c84_172] : memref<101xf32, #tpu.memory_space<smem>>
    %1179 = vector.broadcast %1178 : f32 to vector<8x128xf32>
    %1180 = arith.select %1177, %1179, %1172 : vector<8x128xi1>, vector<8x128xf32>
    %c84_173 = arith.constant 84 : index
    %1181 = memref.load %arg4[%c84_173] : memref<101xf32, #tpu.memory_space<smem>>
    %1182 = vector.broadcast %1181 : f32 to vector<8x128xf32>
    %1183 = arith.select %1177, %1182, %1175 : vector<8x128xi1>, vector<8x128xf32>
    %c85_i32 = arith.constant 85 : i32
    %1184 = vector.broadcast %c85_i32 : i32 to vector<8x128xi32>
    %1185 = arith.cmpi eq, %501, %1184 : vector<8x128xi32>
    %c85_174 = arith.constant 85 : index
    %1186 = memref.load %arg3[%c85_174] : memref<101xf32, #tpu.memory_space<smem>>
    %1187 = vector.broadcast %1186 : f32 to vector<8x128xf32>
    %1188 = arith.select %1185, %1187, %1180 : vector<8x128xi1>, vector<8x128xf32>
    %c85_175 = arith.constant 85 : index
    %1189 = memref.load %arg4[%c85_175] : memref<101xf32, #tpu.memory_space<smem>>
    %1190 = vector.broadcast %1189 : f32 to vector<8x128xf32>
    %1191 = arith.select %1185, %1190, %1183 : vector<8x128xi1>, vector<8x128xf32>
    %c86_i32 = arith.constant 86 : i32
    %1192 = vector.broadcast %c86_i32 : i32 to vector<8x128xi32>
    %1193 = arith.cmpi eq, %501, %1192 : vector<8x128xi32>
    %c86_176 = arith.constant 86 : index
    %1194 = memref.load %arg3[%c86_176] : memref<101xf32, #tpu.memory_space<smem>>
    %1195 = vector.broadcast %1194 : f32 to vector<8x128xf32>
    %1196 = arith.select %1193, %1195, %1188 : vector<8x128xi1>, vector<8x128xf32>
    %c86_177 = arith.constant 86 : index
    %1197 = memref.load %arg4[%c86_177] : memref<101xf32, #tpu.memory_space<smem>>
    %1198 = vector.broadcast %1197 : f32 to vector<8x128xf32>
    %1199 = arith.select %1193, %1198, %1191 : vector<8x128xi1>, vector<8x128xf32>
    %c87_i32 = arith.constant 87 : i32
    %1200 = vector.broadcast %c87_i32 : i32 to vector<8x128xi32>
    %1201 = arith.cmpi eq, %501, %1200 : vector<8x128xi32>
    %c87_178 = arith.constant 87 : index
    %1202 = memref.load %arg3[%c87_178] : memref<101xf32, #tpu.memory_space<smem>>
    %1203 = vector.broadcast %1202 : f32 to vector<8x128xf32>
    %1204 = arith.select %1201, %1203, %1196 : vector<8x128xi1>, vector<8x128xf32>
    %c87_179 = arith.constant 87 : index
    %1205 = memref.load %arg4[%c87_179] : memref<101xf32, #tpu.memory_space<smem>>
    %1206 = vector.broadcast %1205 : f32 to vector<8x128xf32>
    %1207 = arith.select %1201, %1206, %1199 : vector<8x128xi1>, vector<8x128xf32>
    %c88_i32 = arith.constant 88 : i32
    %1208 = vector.broadcast %c88_i32 : i32 to vector<8x128xi32>
    %1209 = arith.cmpi eq, %501, %1208 : vector<8x128xi32>
    %c88_180 = arith.constant 88 : index
    %1210 = memref.load %arg3[%c88_180] : memref<101xf32, #tpu.memory_space<smem>>
    %1211 = vector.broadcast %1210 : f32 to vector<8x128xf32>
    %1212 = arith.select %1209, %1211, %1204 : vector<8x128xi1>, vector<8x128xf32>
    %c88_181 = arith.constant 88 : index
    %1213 = memref.load %arg4[%c88_181] : memref<101xf32, #tpu.memory_space<smem>>
    %1214 = vector.broadcast %1213 : f32 to vector<8x128xf32>
    %1215 = arith.select %1209, %1214, %1207 : vector<8x128xi1>, vector<8x128xf32>
    %c89_i32 = arith.constant 89 : i32
    %1216 = vector.broadcast %c89_i32 : i32 to vector<8x128xi32>
    %1217 = arith.cmpi eq, %501, %1216 : vector<8x128xi32>
    %c89_182 = arith.constant 89 : index
    %1218 = memref.load %arg3[%c89_182] : memref<101xf32, #tpu.memory_space<smem>>
    %1219 = vector.broadcast %1218 : f32 to vector<8x128xf32>
    %1220 = arith.select %1217, %1219, %1212 : vector<8x128xi1>, vector<8x128xf32>
    %c89_183 = arith.constant 89 : index
    %1221 = memref.load %arg4[%c89_183] : memref<101xf32, #tpu.memory_space<smem>>
    %1222 = vector.broadcast %1221 : f32 to vector<8x128xf32>
    %1223 = arith.select %1217, %1222, %1215 : vector<8x128xi1>, vector<8x128xf32>
    %c90_i32 = arith.constant 90 : i32
    %1224 = vector.broadcast %c90_i32 : i32 to vector<8x128xi32>
    %1225 = arith.cmpi eq, %501, %1224 : vector<8x128xi32>
    %c90_184 = arith.constant 90 : index
    %1226 = memref.load %arg3[%c90_184] : memref<101xf32, #tpu.memory_space<smem>>
    %1227 = vector.broadcast %1226 : f32 to vector<8x128xf32>
    %1228 = arith.select %1225, %1227, %1220 : vector<8x128xi1>, vector<8x128xf32>
    %c90_185 = arith.constant 90 : index
    %1229 = memref.load %arg4[%c90_185] : memref<101xf32, #tpu.memory_space<smem>>
    %1230 = vector.broadcast %1229 : f32 to vector<8x128xf32>
    %1231 = arith.select %1225, %1230, %1223 : vector<8x128xi1>, vector<8x128xf32>
    %c91_i32 = arith.constant 91 : i32
    %1232 = vector.broadcast %c91_i32 : i32 to vector<8x128xi32>
    %1233 = arith.cmpi eq, %501, %1232 : vector<8x128xi32>
    %c91_186 = arith.constant 91 : index
    %1234 = memref.load %arg3[%c91_186] : memref<101xf32, #tpu.memory_space<smem>>
    %1235 = vector.broadcast %1234 : f32 to vector<8x128xf32>
    %1236 = arith.select %1233, %1235, %1228 : vector<8x128xi1>, vector<8x128xf32>
    %c91_187 = arith.constant 91 : index
    %1237 = memref.load %arg4[%c91_187] : memref<101xf32, #tpu.memory_space<smem>>
    %1238 = vector.broadcast %1237 : f32 to vector<8x128xf32>
    %1239 = arith.select %1233, %1238, %1231 : vector<8x128xi1>, vector<8x128xf32>
    %c92_i32 = arith.constant 92 : i32
    %1240 = vector.broadcast %c92_i32 : i32 to vector<8x128xi32>
    %1241 = arith.cmpi eq, %501, %1240 : vector<8x128xi32>
    %c92_188 = arith.constant 92 : index
    %1242 = memref.load %arg3[%c92_188] : memref<101xf32, #tpu.memory_space<smem>>
    %1243 = vector.broadcast %1242 : f32 to vector<8x128xf32>
    %1244 = arith.select %1241, %1243, %1236 : vector<8x128xi1>, vector<8x128xf32>
    %c92_189 = arith.constant 92 : index
    %1245 = memref.load %arg4[%c92_189] : memref<101xf32, #tpu.memory_space<smem>>
    %1246 = vector.broadcast %1245 : f32 to vector<8x128xf32>
    %1247 = arith.select %1241, %1246, %1239 : vector<8x128xi1>, vector<8x128xf32>
    %c93_i32 = arith.constant 93 : i32
    %1248 = vector.broadcast %c93_i32 : i32 to vector<8x128xi32>
    %1249 = arith.cmpi eq, %501, %1248 : vector<8x128xi32>
    %c93_190 = arith.constant 93 : index
    %1250 = memref.load %arg3[%c93_190] : memref<101xf32, #tpu.memory_space<smem>>
    %1251 = vector.broadcast %1250 : f32 to vector<8x128xf32>
    %1252 = arith.select %1249, %1251, %1244 : vector<8x128xi1>, vector<8x128xf32>
    %c93_191 = arith.constant 93 : index
    %1253 = memref.load %arg4[%c93_191] : memref<101xf32, #tpu.memory_space<smem>>
    %1254 = vector.broadcast %1253 : f32 to vector<8x128xf32>
    %1255 = arith.select %1249, %1254, %1247 : vector<8x128xi1>, vector<8x128xf32>
    %c94_i32 = arith.constant 94 : i32
    %1256 = vector.broadcast %c94_i32 : i32 to vector<8x128xi32>
    %1257 = arith.cmpi eq, %501, %1256 : vector<8x128xi32>
    %c94_192 = arith.constant 94 : index
    %1258 = memref.load %arg3[%c94_192] : memref<101xf32, #tpu.memory_space<smem>>
    %1259 = vector.broadcast %1258 : f32 to vector<8x128xf32>
    %1260 = arith.select %1257, %1259, %1252 : vector<8x128xi1>, vector<8x128xf32>
    %c94_193 = arith.constant 94 : index
    %1261 = memref.load %arg4[%c94_193] : memref<101xf32, #tpu.memory_space<smem>>
    %1262 = vector.broadcast %1261 : f32 to vector<8x128xf32>
    %1263 = arith.select %1257, %1262, %1255 : vector<8x128xi1>, vector<8x128xf32>
    %c95_i32 = arith.constant 95 : i32
    %1264 = vector.broadcast %c95_i32 : i32 to vector<8x128xi32>
    %1265 = arith.cmpi eq, %501, %1264 : vector<8x128xi32>
    %c95_194 = arith.constant 95 : index
    %1266 = memref.load %arg3[%c95_194] : memref<101xf32, #tpu.memory_space<smem>>
    %1267 = vector.broadcast %1266 : f32 to vector<8x128xf32>
    %1268 = arith.select %1265, %1267, %1260 : vector<8x128xi1>, vector<8x128xf32>
    %c95_195 = arith.constant 95 : index
    %1269 = memref.load %arg4[%c95_195] : memref<101xf32, #tpu.memory_space<smem>>
    %1270 = vector.broadcast %1269 : f32 to vector<8x128xf32>
    %1271 = arith.select %1265, %1270, %1263 : vector<8x128xi1>, vector<8x128xf32>
    %c96_i32 = arith.constant 96 : i32
    %1272 = vector.broadcast %c96_i32 : i32 to vector<8x128xi32>
    %1273 = arith.cmpi eq, %501, %1272 : vector<8x128xi32>
    %c96_196 = arith.constant 96 : index
    %1274 = memref.load %arg3[%c96_196] : memref<101xf32, #tpu.memory_space<smem>>
    %1275 = vector.broadcast %1274 : f32 to vector<8x128xf32>
    %1276 = arith.select %1273, %1275, %1268 : vector<8x128xi1>, vector<8x128xf32>
    %c96_197 = arith.constant 96 : index
    %1277 = memref.load %arg4[%c96_197] : memref<101xf32, #tpu.memory_space<smem>>
    %1278 = vector.broadcast %1277 : f32 to vector<8x128xf32>
    %1279 = arith.select %1273, %1278, %1271 : vector<8x128xi1>, vector<8x128xf32>
    %c97_i32 = arith.constant 97 : i32
    %1280 = vector.broadcast %c97_i32 : i32 to vector<8x128xi32>
    %1281 = arith.cmpi eq, %501, %1280 : vector<8x128xi32>
    %c97_198 = arith.constant 97 : index
    %1282 = memref.load %arg3[%c97_198] : memref<101xf32, #tpu.memory_space<smem>>
    %1283 = vector.broadcast %1282 : f32 to vector<8x128xf32>
    %1284 = arith.select %1281, %1283, %1276 : vector<8x128xi1>, vector<8x128xf32>
    %c97_199 = arith.constant 97 : index
    %1285 = memref.load %arg4[%c97_199] : memref<101xf32, #tpu.memory_space<smem>>
    %1286 = vector.broadcast %1285 : f32 to vector<8x128xf32>
    %1287 = arith.select %1281, %1286, %1279 : vector<8x128xi1>, vector<8x128xf32>
    %c98_i32 = arith.constant 98 : i32
    %1288 = vector.broadcast %c98_i32 : i32 to vector<8x128xi32>
    %1289 = arith.cmpi eq, %501, %1288 : vector<8x128xi32>
    %c98_200 = arith.constant 98 : index
    %1290 = memref.load %arg3[%c98_200] : memref<101xf32, #tpu.memory_space<smem>>
    %1291 = vector.broadcast %1290 : f32 to vector<8x128xf32>
    %1292 = arith.select %1289, %1291, %1284 : vector<8x128xi1>, vector<8x128xf32>
    %c98_201 = arith.constant 98 : index
    %1293 = memref.load %arg4[%c98_201] : memref<101xf32, #tpu.memory_space<smem>>
    %1294 = vector.broadcast %1293 : f32 to vector<8x128xf32>
    %1295 = arith.select %1289, %1294, %1287 : vector<8x128xi1>, vector<8x128xf32>
    %c99_i32 = arith.constant 99 : i32
    %1296 = vector.broadcast %c99_i32 : i32 to vector<8x128xi32>
    %1297 = arith.cmpi eq, %501, %1296 : vector<8x128xi32>
    %c99_202 = arith.constant 99 : index
    %1298 = memref.load %arg3[%c99_202] : memref<101xf32, #tpu.memory_space<smem>>
    %1299 = vector.broadcast %1298 : f32 to vector<8x128xf32>
    %1300 = arith.select %1297, %1299, %1292 : vector<8x128xi1>, vector<8x128xf32>
    %c99_203 = arith.constant 99 : index
    %1301 = memref.load %arg4[%c99_203] : memref<101xf32, #tpu.memory_space<smem>>
    %1302 = vector.broadcast %1301 : f32 to vector<8x128xf32>
    %1303 = arith.select %1297, %1302, %1295 : vector<8x128xi1>, vector<8x128xf32>
    %c100_i32 = arith.constant 100 : i32
    %1304 = vector.broadcast %c100_i32 : i32 to vector<8x128xi32>
    %1305 = arith.cmpi eq, %501, %1304 : vector<8x128xi32>
    %c100 = arith.constant 100 : index
    %1306 = memref.load %arg3[%c100] : memref<101xf32, #tpu.memory_space<smem>>
    %1307 = vector.broadcast %1306 : f32 to vector<8x128xf32>
    %1308 = arith.select %1305, %1307, %1300 : vector<8x128xi1>, vector<8x128xf32>
    %c100_204 = arith.constant 100 : index
    %1309 = memref.load %arg4[%c100_204] : memref<101xf32, #tpu.memory_space<smem>>
    %1310 = vector.broadcast %1309 : f32 to vector<8x128xf32>
    %1311 = arith.select %1305, %1310, %1303 : vector<8x128xi1>, vector<8x128xf32>
    %1312 = arith.mulf %0, %1308 : vector<8x128xf32>
    %1313 = arith.addf %1312, %1311 : vector<8x128xf32>
    %c0_205 = arith.constant 0 : index
    %c0_206 = arith.constant 0 : index
    %1314 = vector.load %arg5[%c0_205, %c0_206] : memref<8x128xf32, #tpu.memory_space<vmem>>, vector<8x128xf32>
    tpu.vector_store %arg5[%c0_205, %c0_206], %1313 {strides = array<i32>} : memref<8x128xf32, #tpu.memory_space<vmem>>, vector<8x128xf32>,
    return
  }
  func.func @transform_0(%arg0: i32) -> (i32, i32) {
    %c0_i32 = arith.constant 0 : i32
    %c0_i32_0 = arith.constant 0 : i32
    return %arg0, %c0_i32 : i32, i32
  }
  func.func @transform_1(%arg0: i32) -> i32 {
    %c0_i32 = arith.constant 0 : i32
    %c0_i32_0 = arith.constant 0 : i32
    return %c0_i32 : i32
  }
  func.func @transform_2(%arg0: i32) -> i32 {
    %c0_i32 = arith.constant 0 : i32
    %c0_i32_0 = arith.constant 0 : i32
    return %c0_i32 : i32
  }
  func.func @transform_3(%arg0: i32) -> i32 {
    %c0_i32 = arith.constant 0 : i32
    %c0_i32_0 = arith.constant 0 : i32
    return %c0_i32 : i32
  }
  func.func @transform_4(%arg0: i32) -> (i32, i32) {
    %c0_i32 = arith.constant 0 : i32
    %c0_i32_0 = arith.constant 0 : i32
    return %arg0, %c0_i32 : i32, i32
  }
}

</mosaic_0001>

<llo_original>
// kernel: tpu_custom_call.1
$region0: #{tpu_custom_call.1}
  #allocation0 [shape = 'u32[]', space=smem, size = 0x4, offset = 0x4, fixed_abs, tag = 'smem constant byte address 0x4 - core index']
  #allocation1 [shape = 'u32[144,128]{1,0:T(1,128)}', space=vmem, size = 0x12000, scoped, tag = 'internal scratch']
  %s0 = inlined_call_operand.hbm [shape: f32[8,128], index: 0, kind: input, shape index: {}]
  %s1 = inlined_call_operand.vmem [shape: f32[100], index: 1, kind: input, shape index: {}]
  %s2 = inlined_call_operand.vmem [shape: f32[101], index: 2, kind: input, shape index: {}]
  %s3 = inlined_call_operand.vmem [shape: f32[101], index: 3, kind: input, shape index: {}]
  %s4 = inlined_call_operand.hbm [shape: f32[8,128], index: 4, kind: output, shape index: {}]
  %s5 = sld [smem:[#allocation0]]
  $region42: #{tpu_custom_call.1} parent=0
    _
  %s7 = ssub.s32 1, %s5
  %s8 = scalar_select 0, %s7, %s5
  $region1: #{tpu_custom_call.1} parent=0
    #allocation2 [shape = 'u8[4096]{0}', space=vmem, size = 0x1000, scoped, tag = 'input window, operand 0, single buffered']
    #allocation3 [shape = 's32[1]{0}', space=sflag, size = 0x4, scoped, tag = 'scoped memory for tpu_custom_call.1']
    #allocation4 [shape = 's32[1]{0}', space=sflag, size = 0x4, scoped, tag = 'scoped memory for tpu_custom_call.1']
    #allocation5 [shape = 's32[1]{0}', space=sflag, size = 0x4, scoped, tag = 'scoped memory for tpu_custom_call.1']
    #allocation6 [shape = 'u8[512]{0}', space=smem, size = 0x200, scoped, tag = 'input window, operand 1, single buffered']
    #allocation7 [shape = 'u8[512]{0}', space=smem, size = 0x200, scoped, tag = 'input window, operand 2, single buffered']
    #allocation8 [shape = 's32[1]{0}', space=sflag, size = 0x4, scoped, tag = 'scoped memory for tpu_custom_call.1']
    #allocation9 [shape = 'u8[512]{0}', space=smem, size = 0x200, scoped, tag = 'input window, operand 3, single buffered']
    #allocation10 [shape = 'u8[4096]{0}', space=vmem, size = 0x1000, scoped, tag = 'output window, operand 0, single buffered']
    %9 = vsyncpa [#allocation3], 0
    %10 = vsyncpa [#allocation5], 0
    %11 = vsyncpa [#allocation8], 0
    %12 = vsyncpa [#allocation4], 0
    // Predicated region
    $region2: #{tpu_custom_call.1} parent=1 // pred_check
      _
    $region3: #{tpu_custom_call.1} parent=1 // pred_check_branch
      %14 = sbr.rel (0) target = $region5
    $region4: #{tpu_custom_call.1} parent=1 // pred_region
      %s16 = ssub.s32 128, 128
      %17 = vsyncadd [#allocation3], %s16
      %s19 = sshll.u32 [#allocation2], 4
      %s20 = int_to_ptr.vmem [resolvable:$true] %s19
      %22 = dma.hbm_to_vmem [thread:$0]  %s0, 128, %s20, [#allocation3]
    $region5: #{tpu_custom_call.1} parent=1 // pred_fallthru
      _
    // Predicated region
    $region6: #{tpu_custom_call.1} parent=1 // pred_check
      _
    $region7: #{tpu_custom_call.1} parent=1 // pred_check_branch
      %24 = sbr.rel (0) target = $region9
    $region8: #{tpu_custom_call.1} parent=1 // pred_region
      %s26 = ssub.s32 16, 16
      %27 = vsyncadd [#allocation5], %s26
      %s29 = sshll.u32 %s1, 4
      %s30 = int_to_ptr.vmem [resolvable:$true] %s29
      %32 = dma.vmem_to_smem %s30, 16, [#allocation6], [#allocation5]
    $region9: #{tpu_custom_call.1} parent=1 // pred_fallthru
      _
    // Predicated region
    $region10: #{tpu_custom_call.1} parent=1 // pred_check
      _
    $region11: #{tpu_custom_call.1} parent=1 // pred_check_branch
      %34 = sbr.rel (0) target = $region13
    $region12: #{tpu_custom_call.1} parent=1 // pred_region
      %s36 = ssub.s32 16, 16
      %37 = vsyncadd [#allocation8], %s36
      %s39 = sshll.u32 %s2, 4
      %s40 = int_to_ptr.vmem [resolvable:$true] %s39
      %42 = dma.vmem_to_smem %s40, 16, [#allocation7], [#allocation8]
    $region13: #{tpu_custom_call.1} parent=1 // pred_fallthru
      _
    // Predicated region
    $region14: #{tpu_custom_call.1} parent=1 // pred_check
      _
    $region15: #{tpu_custom_call.1} parent=1 // pred_check_branch
      %44 = sbr.rel (0) target = $region17
    $region16: #{tpu_custom_call.1} parent=1 // pred_region
      %s46 = ssub.s32 16, 16
      %47 = vsyncadd [#allocation8], %s46
      %s49 = sshll.u32 %s3, 4
      %s50 = int_to_ptr.vmem [resolvable:$true] %s49
      %52 = dma.vmem_to_smem %s50, 16, [#allocation9], [#allocation8]
    $region17: #{tpu_custom_call.1} parent=1 // pred_fallthru
      _
    // Predicated region
    $region18: #{tpu_custom_call.1} parent=1 // pred_check
      _
    $region19: #{tpu_custom_call.1} parent=1 // pred_check_branch
      %54 = sbr.rel (0) target = $region21
    $region20: #{tpu_custom_call.1} parent=1 // pred_region
      %55 = dma.done [#allocation3], 128
    $region21: #{tpu_custom_call.1} parent=1 // pred_fallthru
      _
    // Predicated region
    $region22: #{tpu_custom_call.1} parent=1 // pred_check
      _
    $region23: #{tpu_custom_call.1} parent=1 // pred_check_branch
      %57 = sbr.rel (0) target = $region25
    $region24: #{tpu_custom_call.1} parent=1 // pred_region
      %58 = dma.done [#allocation5], 16
    $region25: #{tpu_custom_call.1} parent=1 // pred_fallthru
      _
    // Predicated region
    $region26: #{tpu_custom_call.1} parent=1 // pred_check
      _
    $region27: #{tpu_custom_call.1} parent=1 // pred_check_branch
      %60 = sbr.rel (0) target = $region29
    $region28: #{tpu_custom_call.1} parent=1 // pred_region
      %61 = dma.done [#allocation8], 16
    $region29: #{tpu_custom_call.1} parent=1 // pred_fallthru
      _
    // Predicated region
    $region30: #{tpu_custom_call.1} parent=1 // pred_check
      _
    $region31: #{tpu_custom_call.1} parent=1 // pred_check_branch
      %63 = sbr.rel (0) target = $region33
    $region32: #{tpu_custom_call.1} parent=1 // pred_region
      %64 = dma.done [#allocation8], 16
    $region33: #{tpu_custom_call.1} parent=1 // pred_fallthru
      _
    %65 = sfence
    %v66 = vld [vmem:[#allocation2] sm:$0xff]
    %s67 = sld [smem:[#allocation6]]
    %v68 = vstv %s67
    %vm69 = vcmp.ge.f32.partialorder %v66, %v68
    %v70 = vsel %vm69, 1, 0
    %s71 = sld [smem:[#allocation6 + $0x1]]
    %v72 = vstv %s71
    %vm73 = vcmp.ge.f32.partialorder %v66, %v72
    %v74 = vsel %vm73, 1, 0
    %v75 = vadd.s32 %v70, %v74
    %s76 = sld [smem:[#allocation6 + $0x2]]
    %v77 = vstv %s76
    %vm78 = vcmp.ge.f32.partialorder %v66, %v77
    %v79 = vsel %vm78, 1, 0
    %v80 = vadd.s32 %v75, %v79
    %s81 = sld [smem:[#allocation6 + $0x3]]
    %v82 = vstv %s81
    %vm83 = vcmp.ge.f32.partialorder %v66, %v82
    %v84 = vsel %vm83, 1, 0
    %v85 = vadd.s32 %v80, %v84
    %s86 = sld [smem:[#allocation6 + $0x4]]
    %v87 = vstv %s86
    %vm88 = vcmp.ge.f32.partialorder %v66, %v87
    %v89 = vsel %vm88, 1, 0
    %v90 = vadd.s32 %v85, %v89
    %s91 = sld [smem:[#allocation6 + $0x5]]
    %v92 = vstv %s91
    %vm93 = vcmp.ge.f32.partialorder %v66, %v92
    %v94 = vsel %vm93, 1, 0
    %v95 = vadd.s32 %v90, %v94
    %s96 = sld [smem:[#allocation6 + $0x6]]
    %v97 = vstv %s96
    %vm98 = vcmp.ge.f32.partialorder %v66, %v97
    %v99 = vsel %vm98, 1, 0
    %v100 = vadd.s32 %v95, %v99
    %s101 = sld [smem:[#allocation6 + $0x7]]
    %v102 = vstv %s101
    %vm103 = vcmp.ge.f32.partialorder %v66, %v102
    %v104 = vsel %vm103, 1, 0
    %v105 = vadd.s32 %v100, %v104
    %s106 = sld [smem:[#allocation6 + $0x8]]
    %v107 = vstv %s106
    %vm108 = vcmp.ge.f32.partialorder %v66, %v107
    %v109 = vsel %vm108, 1, 0
    %v110 = vadd.s32 %v105, %v109
    %s111 = sld [smem:[#allocation6 + $0x9]]
    %v112 = vstv %s111
    %vm113 = vcmp.ge.f32.partialorder %v66, %v112
    %v114 = vsel %vm113, 1, 0
    %v115 = vadd.s32 %v110, %v114
    %s116 = sld [smem:[#allocation6 + $0xa]]
    %v117 = vstv %s116
    %vm118 = vcmp.ge.f32.partialorder %v66, %v117
    %v119 = vsel %vm118, 1, 0
    %v120 = vadd.s32 %v115, %v119
    %s121 = sld [smem:[#allocation6 + $0xb]]
    %v122 = vstv %s121
    %vm123 = vcmp.ge.f32.partialorder %v66, %v122
    %v124 = vsel %vm123, 1, 0
    %v125 = vadd.s32 %v120, %v124
    %s126 = sld [smem:[#allocation6 + $0xc]]
    %v127 = vstv %s126
    %vm128 = vcmp.ge.f32.partialorder %v66, %v127
    %v129 = vsel %vm128, 1, 0
    %v130 = vadd.s32 %v125, %v129
    %s131 = sld [smem:[#allocation6 + $0xd]]
    %v132 = vstv %s131
    %vm133 = vcmp.ge.f32.partialorder %v66, %v132
    %v134 = vsel %vm133, 1, 0
    %v135 = vadd.s32 %v130, %v134
    %s136 = sld [smem:[#allocation6 + $0xe]]
    %v137 = vstv %s136
    %vm138 = vcmp.ge.f32.partialorder %v66, %v137
    %v139 = vsel %vm138, 1, 0
    %v140 = vadd.s32 %v135, %v139
    %s141 = sld [smem:[#allocation6 + $0xf]]
    %v142 = vstv %s141
    %vm143 = vcmp.ge.f32.partialorder %v66, %v142
    %v144 = vsel %vm143, 1, 0
    %v145 = vadd.s32 %v140, %v144
    %s146 = sld [smem:[#allocation6 + $0x10]]
    %v147 = vstv %s146
    %vm148 = vcmp.ge.f32.partialorder %v66, %v147
    %v149 = vsel %vm148, 1, 0
    %v150 = vadd.s32 %v145, %v149
    %s151 = sld [smem:[#allocation6 + $0x11]]
    %v152 = vstv %s151
    %vm153 = vcmp.ge.f32.partialorder %v66, %v152
    %v154 = vsel %vm153, 1, 0
    %v155 = vadd.s32 %v150, %v154
    %s156 = sld [smem:[#allocation6 + $0x12]]
    %v157 = vstv %s156
    %vm158 = vcmp.ge.f32.partialorder %v66, %v157
    %v159 = vsel %vm158, 1, 0
    %v160 = vadd.s32 %v155, %v159
    %s161 = sld [smem:[#allocation6 + $0x13]]
    %v162 = vstv %s161
    %vm163 = vcmp.ge.f32.partialorder %v66, %v162
    %v164 = vsel %vm163, 1, 0
    %v165 = vadd.s32 %v160, %v164
    %s166 = sld [smem:[#allocation6 + $0x14]]
    %v167 = vstv %s166
    %vm168 = vcmp.ge.f32.partialorder %v66, %v167
    %v169 = vsel %vm168, 1, 0
    %v170 = vadd.s32 %v165, %v169
    %s171 = sld [smem:[#allocation6 + $0x15]]
    %v172 = vstv %s171
    %vm173 = vcmp.ge.f32.partialorder %v66, %v172
    %v174 = vsel %vm173, 1, 0
    %v175 = vadd.s32 %v170, %v174
    %s176 = sld [smem:[#allocation6 + $0x16]]
    %v177 = vstv %s176
    %vm178 = vcmp.ge.f32.partialorder %v66, %v177
    %v179 = vsel %vm178, 1, 0
    %v180 = vadd.s32 %v175, %v179
    %s181 = sld [smem:[#allocation6 + $0x17]]
    %v182 = vstv %s181
    %vm183 = vcmp.ge.f32.partialorder %v66, %v182
    %v184 = vsel %vm183, 1, 0
    %v185 = vadd.s32 %v180, %v184
    %s186 = sld [smem:[#allocation6 + $0x18]]
    %v187 = vstv %s186
    %vm188 = vcmp.ge.f32.partialorder %v66, %v187
    %v189 = vsel %vm188, 1, 0
    %v190 = vadd.s32 %v185, %v189
    %s191 = sld [smem:[#allocation6 + $0x19]]
    %v192 = vstv %s191
    %vm193 = vcmp.ge.f32.partialorder %v66, %v192
    %v194 = vsel %vm193, 1, 0
    %v195 = vadd.s32 %v190, %v194
    %s196 = sld [smem:[#allocation6 + $0x1a]]
    %v197 = vstv %s196
    %vm198 = vcmp.ge.f32.partialorder %v66, %v197
    %v199 = vsel %vm198, 1, 0
    %v200 = vadd.s32 %v195, %v199
    %s201 = sld [smem:[#allocation6 + $0x1b]]
    %v202 = vstv %s201
    %vm203 = vcmp.ge.f32.partialorder %v66, %v202
    %v204 = vsel %vm203, 1, 0
    %v205 = vadd.s32 %v200, %v204
    %s206 = sld [smem:[#allocation6 + $0x1c]]
    %v207 = vstv %s206
    %vm208 = vcmp.ge.f32.partialorder %v66, %v207
    %v209 = vsel %vm208, 1, 0
    %v210 = vadd.s32 %v205, %v209
    %s211 = sld [smem:[#allocation6 + $0x1d]]
    %v212 = vstv %s211
    %vm213 = vcmp.ge.f32.partialorder %v66, %v212
    %v214 = vsel %vm213, 1, 0
    %v215 = vadd.s32 %v210, %v214
    %s216 = sld [smem:[#allocation6 + $0x1e]]
    %v217 = vstv %s216
    %vm218 = vcmp.ge.f32.partialorder %v66, %v217
    %v219 = vsel %vm218, 1, 0
    %v220 = vadd.s32 %v215, %v219
    %s221 = sld [smem:[#allocation6 + $0x1f]]
    %v222 = vstv %s221
    %vm223 = vcmp.ge.f32.partialorder %v66, %v222
    %v224 = vsel %vm223, 1, 0
    %v225 = vadd.s32 %v220, %v224
    %s226 = sld [smem:[#allocation6 + $0x20]]
    %v227 = vstv %s226
    %vm228 = vcmp.ge.f32.partialorder %v66, %v227
    %v229 = vsel %vm228, 1, 0
    %v230 = vadd.s32 %v225, %v229
    %s231 = sld [smem:[#allocation6 + $0x21]]
    %v232 = vstv %s231
    %vm233 = vcmp.ge.f32.partialorder %v66, %v232
    %v234 = vsel %vm233, 1, 0
    %v235 = vadd.s32 %v230, %v234
    %s236 = sld [smem:[#allocation6 + $0x22]]
    %v237 = vstv %s236
    %vm238 = vcmp.ge.f32.partialorder %v66, %v237
    %v239 = vsel %vm238, 1, 0
    %v240 = vadd.s32 %v235, %v239
    %s241 = sld [smem:[#allocation6 + $0x23]]
    %v242 = vstv %s241
    %vm243 = vcmp.ge.f32.partialorder %v66, %v242
    %v244 = vsel %vm243, 1, 0
    %v245 = vadd.s32 %v240, %v244
    %s246 = sld [smem:[#allocation6 + $0x24]]
    %v247 = vstv %s246
    %vm248 = vcmp.ge.f32.partialorder %v66, %v247
    %v249 = vsel %vm248, 1, 0
    %v250 = vadd.s32 %v245, %v249
    %s251 = sld [smem:[#allocation6 + $0x25]]
    %v252 = vstv %s251
    %vm253 = vcmp.ge.f32.partialorder %v66, %v252
    %v254 = vsel %vm253, 1, 0
    %v255 = vadd.s32 %v250, %v254
    %s256 = sld [smem:[#allocation6 + $0x26]]
    %v257 = vstv %s256
    %vm258 = vcmp.ge.f32.partialorder %v66, %v257
    %v259 = vsel %vm258, 1, 0
    %v260 = vadd.s32 %v255, %v259
    %s261 = sld [smem:[#allocation6 + $0x27]]
    %v262 = vstv %s261
    %vm263 = vcmp.ge.f32.partialorder %v66, %v262
    %v264 = vsel %vm263, 1, 0
    %v265 = vadd.s32 %v260, %v264
    %s266 = sld [smem:[#allocation6 + $0x28]]
    %v267 = vstv %s266
    %vm268 = vcmp.ge.f32.partialorder %v66, %v267
    %v269 = vsel %vm268, 1, 0
    %v270 = vadd.s32 %v265, %v269
    %s271 = sld [smem:[#allocation6 + $0x29]]
    %v272 = vstv %s271
    %vm273 = vcmp.ge.f32.partialorder %v66, %v272
    %v274 = vsel %vm273, 1, 0
    %v275 = vadd.s32 %v270, %v274
    %s276 = sld [smem:[#allocation6 + $0x2a]]
    %v277 = vstv %s276
    %vm278 = vcmp.ge.f32.partialorder %v66, %v277
    %v279 = vsel %vm278, 1, 0
    %v280 = vadd.s32 %v275, %v279
    %s281 = sld [smem:[#allocation6 + $0x2b]]
    %v282 = vstv %s281
    %vm283 = vcmp.ge.f32.partialorder %v66, %v282
    %v284 = vsel %vm283, 1, 0
    %v285 = vadd.s32 %v280, %v284
    %s286 = sld [smem:[#allocation6 + $0x2c]]
    %v287 = vstv %s286
    %vm288 = vcmp.ge.f32.partialorder %v66, %v287
    %v289 = vsel %vm288, 1, 0
    %v290 = vadd.s32 %v285, %v289
    %s291 = sld [smem:[#allocation6 + $0x2d]]
    %v292 = vstv %s291
    %vm293 = vcmp.ge.f32.partialorder %v66, %v292
    %v294 = vsel %vm293, 1, 0
    %v295 = vadd.s32 %v290, %v294
    %s296 = sld [smem:[#allocation6 + $0x2e]]
    %v297 = vstv %s296
    %vm298 = vcmp.ge.f32.partialorder %v66, %v297
    %v299 = vsel %vm298, 1, 0
    %v300 = vadd.s32 %v295, %v299
    %s301 = sld [smem:[#allocation6 + $0x2f]]
    %v302 = vstv %s301
    %vm303 = vcmp.ge.f32.partialorder %v66, %v302
    %v304 = vsel %vm303, 1, 0
    %v305 = vadd.s32 %v300, %v304
    %s306 = sld [smem:[#allocation6 + $0x30]]
    %v307 = vstv %s306
    %vm308 = vcmp.ge.f32.partialorder %v66, %v307
    %v309 = vsel %vm308, 1, 0
    %v310 = vadd.s32 %v305, %v309
    %s311 = sld [smem:[#allocation6 + $0x31]]
    %v312 = vstv %s311
    %vm313 = vcmp.ge.f32.partialorder %v66, %v312
    %v314 = vsel %vm313, 1, 0
    %v315 = vadd.s32 %v310, %v314
    %s316 = sld [smem:[#allocation6 + $0x32]]
    %v317 = vstv %s316
    %vm318 = vcmp.ge.f32.partialorder %v66, %v317
    %v319 = vsel %vm318, 1, 0
    %v320 = vadd.s32 %v315, %v319
    %s321 = sld [smem:[#allocation6 + $0x33]]
    %v322 = vstv %s321
    %vm323 = vcmp.ge.f32.partialorder %v66, %v322
    %v324 = vsel %vm323, 1, 0
    %v325 = vadd.s32 %v320, %v324
    %s326 = sld [smem:[#allocation6 + $0x34]]
    %v327 = vstv %s326
    %vm328 = vcmp.ge.f32.partialorder %v66, %v327
    %v329 = vsel %vm328, 1, 0
    %v330 = vadd.s32 %v325, %v329
    %s331 = sld [smem:[#allocation6 + $0x35]]
    %v332 = vstv %s331
    %vm333 = vcmp.ge.f32.partialorder %v66, %v332
    %v334 = vsel %vm333, 1, 0
    %v335 = vadd.s32 %v330, %v334
    %s336 = sld [smem:[#allocation6 + $0x36]]
    %v337 = vstv %s336
    %vm338 = vcmp.ge.f32.partialorder %v66, %v337
    %v339 = vsel %vm338, 1, 0
    %v340 = vadd.s32 %v335, %v339
    %s341 = sld [smem:[#allocation6 + $0x37]]
    %v342 = vstv %s341
    %vm343 = vcmp.ge.f32.partialorder %v66, %v342
    %v344 = vsel %vm343, 1, 0
    %v345 = vadd.s32 %v340, %v344
    %s346 = sld [smem:[#allocation6 + $0x38]]
    %v347 = vstv %s346
    %vm348 = vcmp.ge.f32.partialorder %v66, %v347
    %v349 = vsel %vm348, 1, 0
    %v350 = vadd.s32 %v345, %v349
    %s351 = sld [smem:[#allocation6 + $0x39]]
    %v352 = vstv %s351
    %vm353 = vcmp.ge.f32.partialorder %v66, %v352
    %v354 = vsel %vm353, 1, 0
    %v355 = vadd.s32 %v350, %v354
    %s356 = sld [smem:[#allocation6 + $0x3a]]
    %v357 = vstv %s356
    %vm358 = vcmp.ge.f32.partialorder %v66, %v357
    %v359 = vsel %vm358, 1, 0
    %v360 = vadd.s32 %v355, %v359
    %s361 = sld [smem:[#allocation6 + $0x3b]]
    %v362 = vstv %s361
    %vm363 = vcmp.ge.f32.partialorder %v66, %v362
    %v364 = vsel %vm363, 1, 0
    %v365 = vadd.s32 %v360, %v364
    %s366 = sld [smem:[#allocation6 + $0x3c]]
    %v367 = vstv %s366
    %vm368 = vcmp.ge.f32.partialorder %v66, %v367
    %v369 = vsel %vm368, 1, 0
    %v370 = vadd.s32 %v365, %v369
    %s371 = sld [smem:[#allocation6 + $0x3d]]
    %v372 = vstv %s371
    %vm373 = vcmp.ge.f32.partialorder %v66, %v372
    %v374 = vsel %vm373, 1, 0
    %v375 = vadd.s32 %v370, %v374
    %s376 = sld [smem:[#allocation6 + $0x3e]]
    %v377 = vstv %s376
    %vm378 = vcmp.ge.f32.partialorder %v66, %v377
    %v379 = vsel %vm378, 1, 0
    %v380 = vadd.s32 %v375, %v379
    %s381 = sld [smem:[#allocation6 + $0x3f]]
    %v382 = vstv %s381
    %vm383 = vcmp.ge.f32.partialorder %v66, %v382
    %v384 = vsel %vm383, 1, 0
    %v385 = vadd.s32 %v380, %v384
    %s386 = sld [smem:[#allocation6 + $0x40]]
    %v387 = vstv %s386
    %vm388 = vcmp.ge.f32.partialorder %v66, %v387
    %v389 = vsel %vm388, 1, 0
    %v390 = vadd.s32 %v385, %v389
    %s391 = sld [smem:[#allocation6 + $0x41]]
    %v392 = vstv %s391
    %vm393 = vcmp.ge.f32.partialorder %v66, %v392
    %v394 = vsel %vm393, 1, 0
    %v395 = vadd.s32 %v390, %v394
    %s396 = sld [smem:[#allocation6 + $0x42]]
    %v397 = vstv %s396
    %vm398 = vcmp.ge.f32.partialorder %v66, %v397
    %v399 = vsel %vm398, 1, 0
    %v400 = vadd.s32 %v395, %v399
    %s401 = sld [smem:[#allocation6 + $0x43]]
    %v402 = vstv %s401
    %vm403 = vcmp.ge.f32.partialorder %v66, %v402
    %v404 = vsel %vm403, 1, 0
    %v405 = vadd.s32 %v400, %v404
    %s406 = sld [smem:[#allocation6 + $0x44]]
    %v407 = vstv %s406
    %vm408 = vcmp.ge.f32.partialorder %v66, %v407
    %v409 = vsel %vm408, 1, 0
    %v410 = vadd.s32 %v405, %v409
    %s411 = sld [smem:[#allocation6 + $0x45]]
    %v412 = vstv %s411
    %vm413 = vcmp.ge.f32.partialorder %v66, %v412
    %v414 = vsel %vm413, 1, 0
    %v415 = vadd.s32 %v410, %v414
    %s416 = sld [smem:[#allocation6 + $0x46]]
    %v417 = vstv %s416
    %vm418 = vcmp.ge.f32.partialorder %v66, %v417
    %v419 = vsel %vm418, 1, 0
    %v420 = vadd.s32 %v415, %v419
    %s421 = sld [smem:[#allocation6 + $0x47]]
    %v422 = vstv %s421
    %vm423 = vcmp.ge.f32.partialorder %v66, %v422
    %v424 = vsel %vm423, 1, 0
    %v425 = vadd.s32 %v420, %v424
    %s426 = sld [smem:[#allocation6 + $0x48]]
    %v427 = vstv %s426
    %vm428 = vcmp.ge.f32.partialorder %v66, %v427
    %v429 = vsel %vm428, 1, 0
    %v430 = vadd.s32 %v425, %v429
    %s431 = sld [smem:[#allocation6 + $0x49]]
    %v432 = vstv %s431
    %vm433 = vcmp.ge.f32.partialorder %v66, %v432
    %v434 = vsel %vm433, 1, 0
    %v435 = vadd.s32 %v430, %v434
    %s436 = sld [smem:[#allocation6 + $0x4a]]
    %v437 = vstv %s436
    %vm438 = vcmp.ge.f32.partialorder %v66, %v437
    %v439 = vsel %vm438, 1, 0
    %v440 = vadd.s32 %v435, %v439
    %s441 = sld [smem:[#allocation6 + $0x4b]]
    %v442 = vstv %s441
    %vm443 = vcmp.ge.f32.partialorder %v66, %v442
    %v444 = vsel %vm443, 1, 0
    %v445 = vadd.s32 %v440, %v444
    %s446 = sld [smem:[#allocation6 + $0x4c]]
    %v447 = vstv %s446
    %vm448 = vcmp.ge.f32.partialorder %v66, %v447
    %v449 = vsel %vm448, 1, 0
    %v450 = vadd.s32 %v445, %v449
    %s451 = sld [smem:[#allocation6 + $0x4d]]
    %v452 = vstv %s451
    %vm453 = vcmp.ge.f32.partialorder %v66, %v452
    %v454 = vsel %vm453, 1, 0
    %v455 = vadd.s32 %v450, %v454
    %s456 = sld [smem:[#allocation6 + $0x4e]]
    %v457 = vstv %s456
    %vm458 = vcmp.ge.f32.partialorder %v66, %v457
    %v459 = vsel %vm458, 1, 0
    %v460 = vadd.s32 %v455, %v459
    %s461 = sld [smem:[#allocation6 + $0x4f]]
    %v462 = vstv %s461
    %vm463 = vcmp.ge.f32.partialorder %v66, %v462
    %v464 = vsel %vm463, 1, 0
    %v465 = vadd.s32 %v460, %v464
    %s466 = sld [smem:[#allocation6 + $0x50]]
    %v467 = vstv %s466
    %vm468 = vcmp.ge.f32.partialorder %v66, %v467
    %v469 = vsel %vm468, 1, 0
    %v470 = vadd.s32 %v465, %v469
    %s471 = sld [smem:[#allocation6 + $0x51]]
    %v472 = vstv %s471
    %vm473 = vcmp.ge.f32.partialorder %v66, %v472
    %v474 = vsel %vm473, 1, 0
    %v475 = vadd.s32 %v470, %v474
    %s476 = sld [smem:[#allocation6 + $0x52]]
    %v477 = vstv %s476
    %vm478 = vcmp.ge.f32.partialorder %v66, %v477
    %v479 = vsel %vm478, 1, 0
    %v480 = vadd.s32 %v475, %v479
    %s481 = sld [smem:[#allocation6 + $0x53]]
    %v482 = vstv %s481
    %vm483 = vcmp.ge.f32.partialorder %v66, %v482
    %v484 = vsel %vm483, 1, 0
    %v485 = vadd.s32 %v480, %v484
    %s486 = sld [smem:[#allocation6 + $0x54]]
    %v487 = vstv %s486
    %vm488 = vcmp.ge.f32.partialorder %v66, %v487
    %v489 = vsel %vm488, 1, 0
    %v490 = vadd.s32 %v485, %v489
    %s491 = sld [smem:[#allocation6 + $0x55]]
    %v492 = vstv %s491
    %vm493 = vcmp.ge.f32.partialorder %v66, %v492
    %v494 = vsel %vm493, 1, 0
    %v495 = vadd.s32 %v490, %v494
    %s496 = sld [smem:[#allocation6 + $0x56]]
    %v497 = vstv %s496
    %vm498 = vcmp.ge.f32.partialorder %v66, %v497
    %v499 = vsel %vm498, 1, 0
    %v500 = vadd.s32 %v495, %v499
    %s501 = sld [smem:[#allocation6 + $0x57]]
    %v502 = vstv %s501
    %vm503 = vcmp.ge.f32.partialorder %v66, %v502
    %v504 = vsel %vm503, 1, 0
    %v505 = vadd.s32 %v500, %v504
    %s506 = sld [smem:[#allocation6 + $0x58]]
    %v507 = vstv %s506
    %vm508 = vcmp.ge.f32.partialorder %v66, %v507
    %v509 = vsel %vm508, 1, 0
    %v510 = vadd.s32 %v505, %v509
    %s511 = sld [smem:[#allocation6 + $0x59]]
    %v512 = vstv %s511
    %vm513 = vcmp.ge.f32.partialorder %v66, %v512
    %v514 = vsel %vm513, 1, 0
    %v515 = vadd.s32 %v510, %v514
    %s516 = sld [smem:[#allocation6 + $0x5a]]
    %v517 = vstv %s516
    %vm518 = vcmp.ge.f32.partialorder %v66, %v517
    %v519 = vsel %vm518, 1, 0
    %v520 = vadd.s32 %v515, %v519
    %s521 = sld [smem:[#allocation6 + $0x5b]]
    %v522 = vstv %s521
    %vm523 = vcmp.ge.f32.partialorder %v66, %v522
    %v524 = vsel %vm523, 1, 0
    %v525 = vadd.s32 %v520, %v524
    %s526 = sld [smem:[#allocation6 + $0x5c]]
    %v527 = vstv %s526
    %vm528 = vcmp.ge.f32.partialorder %v66, %v527
    %v529 = vsel %vm528, 1, 0
    %v530 = vadd.s32 %v525, %v529
    %s531 = sld [smem:[#allocation6 + $0x5d]]
    %v532 = vstv %s531
    %vm533 = vcmp.ge.f32.partialorder %v66, %v532
    %v534 = vsel %vm533, 1, 0
    %v535 = vadd.s32 %v530, %v534
    %s536 = sld [smem:[#allocation6 + $0x5e]]
    %v537 = vstv %s536
    %vm538 = vcmp.ge.f32.partialorder %v66, %v537
    %v539 = vsel %vm538, 1, 0
    %v540 = vadd.s32 %v535, %v539
    %s541 = sld [smem:[#allocation6 + $0x5f]]
    %v542 = vstv %s541
    %vm543 = vcmp.ge.f32.partialorder %v66, %v542
    %v544 = vsel %vm543, 1, 0
    %v545 = vadd.s32 %v540, %v544
    %s546 = sld [smem:[#allocation6 + $0x60]]
    %v547 = vstv %s546
    %vm548 = vcmp.ge.f32.partialorder %v66, %v547
    %v549 = vsel %vm548, 1, 0
    %v550 = vadd.s32 %v545, %v549
    %s551 = sld [smem:[#allocation6 + $0x61]]
    %v552 = vstv %s551
    %vm553 = vcmp.ge.f32.partialorder %v66, %v552
    %v554 = vsel %vm553, 1, 0
    %v555 = vadd.s32 %v550, %v554
    %s556 = sld [smem:[#allocation6 + $0x62]]
    %v557 = vstv %s556
    %vm558 = vcmp.ge.f32.partialorder %v66, %v557
    %v559 = vsel %vm558, 1, 0
    %v560 = vadd.s32 %v555, %v559
    %s561 = sld [smem:[#allocation6 + $0x63]]
    %v562 = vstv %s561
    %vm563 = vcmp.ge.f32.partialorder %v66, %v562
    %v564 = vsel %vm563, 1, 0
    %v565 = vadd.s32 %v560, %v564
    %vm566 = vcmp.eq.s32.totalorder %v565, 0
    %s567 = sld [smem:[#allocation7]]
    %v568 = vstv %s567
    %v569 = vsel %vm566, %v568, 0.0
    %s570 = sld [smem:[#allocation9]]
    %v571 = vstv %s570
    %v572 = vsel %vm566, %v571, 0.0
    %vm573 = vcmp.eq.s32.totalorder %v565, 1
    %s574 = sld [smem:[#allocation7 + $0x1]]
    %v575 = vstv %s574
    %v576 = vsel %vm573, %v575, %v569
    %s577 = sld [smem:[#allocation9 + $0x1]]
    %v578 = vstv %s577
    %v579 = vsel %vm573, %v578, %v572
    %vm580 = vcmp.eq.s32.totalorder %v565, 2
    %s581 = sld [smem:[#allocation7 + $0x2]]
    %v582 = vstv %s581
    %v583 = vsel %vm580, %v582, %v576
    %s584 = sld [smem:[#allocation9 + $0x2]]
    %v585 = vstv %s584
    %v586 = vsel %vm580, %v585, %v579
    %vm587 = vcmp.eq.s32.totalorder %v565, 3
    %s588 = sld [smem:[#allocation7 + $0x3]]
    %v589 = vstv %s588
    %v590 = vsel %vm587, %v589, %v583
    %s591 = sld [smem:[#allocation9 + $0x3]]
    %v592 = vstv %s591
    %v593 = vsel %vm587, %v592, %v586
    %vm594 = vcmp.eq.s32.totalorder %v565, 4
    %s595 = sld [smem:[#allocation7 + $0x4]]
    %v596 = vstv %s595
    %v597 = vsel %vm594, %v596, %v590
    %s598 = sld [smem:[#allocation9 + $0x4]]
    %v599 = vstv %s598
    %v600 = vsel %vm594, %v599, %v593
    %vm601 = vcmp.eq.s32.totalorder %v565, 5
    %s602 = sld [smem:[#allocation7 + $0x5]]
    %v603 = vstv %s602
    %v604 = vsel %vm601, %v603, %v597
    %s605 = sld [smem:[#allocation9 + $0x5]]
    %v606 = vstv %s605
    %v607 = vsel %vm601, %v606, %v600
    %vm608 = vcmp.eq.s32.totalorder %v565, 6
    %s609 = sld [smem:[#allocation7 + $0x6]]
    %v610 = vstv %s609
    %v611 = vsel %vm608, %v610, %v604
    %s612 = sld [smem:[#allocation9 + $0x6]]
    %v613 = vstv %s612
    %v614 = vsel %vm608, %v613, %v607
    %vm615 = vcmp.eq.s32.totalorder %v565, 7
    %s616 = sld [smem:[#allocation7 + $0x7]]
    %v617 = vstv %s616
    %v618 = vsel %vm615, %v617, %v611
    %s619 = sld [smem:[#allocation9 + $0x7]]
    %v620 = vstv %s619
    %v621 = vsel %vm615, %v620, %v614
    %vm622 = vcmp.eq.s32.totalorder %v565, 8
    %s623 = sld [smem:[#allocation7 + $0x8]]
    %v624 = vstv %s623
    %v625 = vsel %vm622, %v624, %v618
    %s626 = sld [smem:[#allocation9 + $0x8]]
    %v627 = vstv %s626
    %v628 = vsel %vm622, %v627, %v621
    %vm629 = vcmp.eq.s32.totalorder %v565, 9
    %s630 = sld [smem:[#allocation7 + $0x9]]
    %v631 = vstv %s630
    %v632 = vsel %vm629, %v631, %v625
    %s633 = sld [smem:[#allocation9 + $0x9]]
    %v634 = vstv %s633
    %v635 = vsel %vm629, %v634, %v628
    %vm636 = vcmp.eq.s32.totalorder %v565, 10
    %s637 = sld [smem:[#allocation7 + $0xa]]
    %v638 = vstv %s637
    %v639 = vsel %vm636, %v638, %v632
    %s640 = sld [smem:[#allocation9 + $0xa]]
    %v641 = vstv %s640
    %v642 = vsel %vm636, %v641, %v635
    %vm643 = vcmp.eq.s32.totalorder %v565, 11
    %s644 = sld [smem:[#allocation7 + $0xb]]
    %v645 = vstv %s644
    %v646 = vsel %vm643, %v645, %v639
    %s647 = sld [smem:[#allocation9 + $0xb]]
    %v648 = vstv %s647
    %v649 = vsel %vm643, %v648, %v642
    %vm650 = vcmp.eq.s32.totalorder %v565, 12
    %s651 = sld [smem:[#allocation7 + $0xc]]
    %v652 = vstv %s651
    %v653 = vsel %vm650, %v652, %v646
    %s654 = sld [smem:[#allocation9 + $0xc]]
    %v655 = vstv %s654
    %v656 = vsel %vm650, %v655, %v649
    %vm657 = vcmp.eq.s32.totalorder %v565, 13
    %s658 = sld [smem:[#allocation7 + $0xd]]
    %v659 = vstv %s658
    %v660 = vsel %vm657, %v659, %v653
    %s661 = sld [smem:[#allocation9 + $0xd]]
    %v662 = vstv %s661
    %v663 = vsel %vm657, %v662, %v656
    %vm664 = vcmp.eq.s32.totalorder %v565, 14
    %s665 = sld [smem:[#allocation7 + $0xe]]
    %v666 = vstv %s665
    %v667 = vsel %vm664, %v666, %v660
    %s668 = sld [smem:[#allocation9 + $0xe]]
    %v669 = vstv %s668
    %v670 = vsel %vm664, %v669, %v663
    %vm671 = vcmp.eq.s32.totalorder %v565, 15
    %s672 = sld [smem:[#allocation7 + $0xf]]
    %v673 = vstv %s672
    %v674 = vsel %vm671, %v673, %v667
    %s675 = sld [smem:[#allocation9 + $0xf]]
    %v676 = vstv %s675
    %v677 = vsel %vm671, %v676, %v670
    %vm678 = vcmp.eq.s32.totalorder %v565, 16
    %s679 = sld [smem:[#allocation7 + $0x10]]
    %v680 = vstv %s679
    %v681 = vsel %vm678, %v680, %v674
    %s682 = sld [smem:[#allocation9 + $0x10]]
    %v683 = vstv %s682
    %v684 = vsel %vm678, %v683, %v677
    %vm685 = vcmp.eq.s32.totalorder %v565, 17
    %s686 = sld [smem:[#allocation7 + $0x11]]
    %v687 = vstv %s686
    %v688 = vsel %vm685, %v687, %v681
    %s689 = sld [smem:[#allocation9 + $0x11]]
    %v690 = vstv %s689
    %v691 = vsel %vm685, %v690, %v684
    %vm692 = vcmp.eq.s32.totalorder %v565, 18
    %s693 = sld [smem:[#allocation7 + $0x12]]
    %v694 = vstv %s693
    %v695 = vsel %vm692, %v694, %v688
    %s696 = sld [smem:[#allocation9 + $0x12]]
    %v697 = vstv %s696
    %v698 = vsel %vm692, %v697, %v691
    %vm699 = vcmp.eq.s32.totalorder %v565, 19
    %s700 = sld [smem:[#allocation7 + $0x13]]
    %v701 = vstv %s700
    %v702 = vsel %vm699, %v701, %v695
    %s703 = sld [smem:[#allocation9 + $0x13]]
    %v704 = vstv %s703
    %v705 = vsel %vm699, %v704, %v698
    %vm706 = vcmp.eq.s32.totalorder %v565, 20
    %s707 = sld [smem:[#allocation7 + $0x14]]
    %v708 = vstv %s707
    %v709 = vsel %vm706, %v708, %v702
    %s710 = sld [smem:[#allocation9 + $0x14]]
    %v711 = vstv %s710
    %v712 = vsel %vm706, %v711, %v705
    %vm713 = vcmp.eq.s32.totalorder %v565, 21
    %s714 = sld [smem:[#allocation7 + $0x15]]
    %v715 = vstv %s714
    %v716 = vsel %vm713, %v715, %v709
    %s717 = sld [smem:[#allocation9 + $0x15]]
    %v718 = vstv %s717
    %v719 = vsel %vm713, %v718, %v712
    %vm720 = vcmp.eq.s32.totalorder %v565, 22
    %s721 = sld [smem:[#allocation7 + $0x16]]
    %v722 = vstv %s721
    %v723 = vsel %vm720, %v722, %v716
    %s724 = sld [smem:[#allocation9 + $0x16]]
    %v725 = vstv %s724
    %v726 = vsel %vm720, %v725, %v719
    %vm727 = vcmp.eq.s32.totalorder %v565, 23
    %s728 = sld [smem:[#allocation7 + $0x17]]
    %v729 = vstv %s728
    %v730 = vsel %vm727, %v729, %v723
    %s731 = sld [smem:[#allocation9 + $0x17]]
    %v732 = vstv %s731
    %v733 = vsel %vm727, %v732, %v726
    %vm734 = vcmp.eq.s32.totalorder %v565, 24
    %s735 = sld [smem:[#allocation7 + $0x18]]
    %v736 = vstv %s735
    %v737 = vsel %vm734, %v736, %v730
    %s738 = sld [smem:[#allocation9 + $0x18]]
    %v739 = vstv %s738
    %v740 = vsel %vm734, %v739, %v733
    %vm741 = vcmp.eq.s32.totalorder %v565, 25
    %s742 = sld [smem:[#allocation7 + $0x19]]
    %v743 = vstv %s742
    %v744 = vsel %vm741, %v743, %v737
    %s745 = sld [smem:[#allocation9 + $0x19]]
    %v746 = vstv %s745
    %v747 = vsel %vm741, %v746, %v740
    %vm748 = vcmp.eq.s32.totalorder %v565, 26
    %s749 = sld [smem:[#allocation7 + $0x1a]]
    %v750 = vstv %s749
    %v751 = vsel %vm748, %v750, %v744
    %s752 = sld [smem:[#allocation9 + $0x1a]]
    %v753 = vstv %s752
    %v754 = vsel %vm748, %v753, %v747
    %vm755 = vcmp.eq.s32.totalorder %v565, 27
    %s756 = sld [smem:[#allocation7 + $0x1b]]
    %v757 = vstv %s756
    %v758 = vsel %vm755, %v757, %v751
    %s759 = sld [smem:[#allocation9 + $0x1b]]
    %v760 = vstv %s759
    %v761 = vsel %vm755, %v760, %v754
    %vm762 = vcmp.eq.s32.totalorder %v565, 28
    %s763 = sld [smem:[#allocation7 + $0x1c]]
    %v764 = vstv %s763
    %v765 = vsel %vm762, %v764, %v758
    %s766 = sld [smem:[#allocation9 + $0x1c]]
    %v767 = vstv %s766
    %v768 = vsel %vm762, %v767, %v761
    %vm769 = vcmp.eq.s32.totalorder %v565, 29
    %s770 = sld [smem:[#allocation7 + $0x1d]]
    %v771 = vstv %s770
    %v772 = vsel %vm769, %v771, %v765
    %s773 = sld [smem:[#allocation9 + $0x1d]]
    %v774 = vstv %s773
    %v775 = vsel %vm769, %v774, %v768
    %vm776 = vcmp.eq.s32.totalorder %v565, 30
    %s777 = sld [smem:[#allocation7 + $0x1e]]
    %v778 = vstv %s777
    %v779 = vsel %vm776, %v778, %v772
    %s780 = sld [smem:[#allocation9 + $0x1e]]
    %v781 = vstv %s780
    %v782 = vsel %vm776, %v781, %v775
    %vm783 = vcmp.eq.s32.totalorder %v565, 31
    %s784 = sld [smem:[#allocation7 + $0x1f]]
    %v785 = vstv %s784
    %v786 = vsel %vm783, %v785, %v779
    %s787 = sld [smem:[#allocation9 + $0x1f]]
    %v788 = vstv %s787
    %v789 = vsel %vm783, %v788, %v782
    %vm790 = vcmp.eq.s32.totalorder %v565, 32
    %s791 = sld [smem:[#allocation7 + $0x20]]
    %v792 = vstv %s791
    %v793 = vsel %vm790, %v792, %v786
    %s794 = sld [smem:[#allocation9 + $0x20]]
    %v795 = vstv %s794
    %v796 = vsel %vm790, %v795, %v789
    %vm797 = vcmp.eq.s32.totalorder %v565, 33
    %s798 = sld [smem:[#allocation7 + $0x21]]
    %v799 = vstv %s798
    %v800 = vsel %vm797, %v799, %v793
    %s801 = sld [smem:[#allocation9 + $0x21]]
    %v802 = vstv %s801
    %v803 = vsel %vm797, %v802, %v796
    %vm804 = vcmp.eq.s32.totalorder %v565, 34
    %s805 = sld [smem:[#allocation7 + $0x22]]
    %v806 = vstv %s805
    %v807 = vsel %vm804, %v806, %v800
    %s808 = sld [smem:[#allocation9 + $0x22]]
    %v809 = vstv %s808
    %v810 = vsel %vm804, %v809, %v803
    %vm811 = vcmp.eq.s32.totalorder %v565, 35
    %s812 = sld [smem:[#allocation7 + $0x23]]
    %v813 = vstv %s812
    %v814 = vsel %vm811, %v813, %v807
    %s815 = sld [smem:[#allocation9 + $0x23]]
    %v816 = vstv %s815
    %v817 = vsel %vm811, %v816, %v810
    %vm818 = vcmp.eq.s32.totalorder %v565, 36
    %s819 = sld [smem:[#allocation7 + $0x24]]
    %v820 = vstv %s819
    %v821 = vsel %vm818, %v820, %v814
    %s822 = sld [smem:[#allocation9 + $0x24]]
    %v823 = vstv %s822
    %v824 = vsel %vm818, %v823, %v817
    %vm825 = vcmp.eq.s32.totalorder %v565, 37
    %s826 = sld [smem:[#allocation7 + $0x25]]
    %v827 = vstv %s826
    %v828 = vsel %vm825, %v827, %v821
    %s829 = sld [smem:[#allocation9 + $0x25]]
    %v830 = vstv %s829
    %v831 = vsel %vm825, %v830, %v824
    %vm832 = vcmp.eq.s32.totalorder %v565, 38
    %s833 = sld [smem:[#allocation7 + $0x26]]
    %v834 = vstv %s833
    %v835 = vsel %vm832, %v834, %v828
    %s836 = sld [smem:[#allocation9 + $0x26]]
    %v837 = vstv %s836
    %v838 = vsel %vm832, %v837, %v831
    %vm839 = vcmp.eq.s32.totalorder %v565, 39
    %s840 = sld [smem:[#allocation7 + $0x27]]
    %v841 = vstv %s840
    %v842 = vsel %vm839, %v841, %v835
    %s843 = sld [smem:[#allocation9 + $0x27]]
    %v844 = vstv %s843
    %v845 = vsel %vm839, %v844, %v838
    %vm846 = vcmp.eq.s32.totalorder %v565, 40
    %s847 = sld [smem:[#allocation7 + $0x28]]
    %v848 = vstv %s847
    %v849 = vsel %vm846, %v848, %v842
    %s850 = sld [smem:[#allocation9 + $0x28]]
    %v851 = vstv %s850
    %v852 = vsel %vm846, %v851, %v845
    %vm853 = vcmp.eq.s32.totalorder %v565, 41
    %s854 = sld [smem:[#allocation7 + $0x29]]
    %v855 = vstv %s854
    %v856 = vsel %vm853, %v855, %v849
    %s857 = sld [smem:[#allocation9 + $0x29]]
    %v858 = vstv %s857
    %v859 = vsel %vm853, %v858, %v852
    %vm860 = vcmp.eq.s32.totalorder %v565, 42
    %s861 = sld [smem:[#allocation7 + $0x2a]]
    %v862 = vstv %s861
    %v863 = vsel %vm860, %v862, %v856
    %s864 = sld [smem:[#allocation9 + $0x2a]]
    %v865 = vstv %s864
    %v866 = vsel %vm860, %v865, %v859
    %vm867 = vcmp.eq.s32.totalorder %v565, 43
    %s868 = sld [smem:[#allocation7 + $0x2b]]
    %v869 = vstv %s868
    %v870 = vsel %vm867, %v869, %v863
    %s871 = sld [smem:[#allocation9 + $0x2b]]
    %v872 = vstv %s871
    %v873 = vsel %vm867, %v872, %v866
    %vm874 = vcmp.eq.s32.totalorder %v565, 44
    %s875 = sld [smem:[#allocation7 + $0x2c]]
    %v876 = vstv %s875
    %v877 = vsel %vm874, %v876, %v870
    %s878 = sld [smem:[#allocation9 + $0x2c]]
    %v879 = vstv %s878
    %v880 = vsel %vm874, %v879, %v873
    %vm881 = vcmp.eq.s32.totalorder %v565, 45
    %s882 = sld [smem:[#allocation7 + $0x2d]]
    %v883 = vstv %s882
    %v884 = vsel %vm881, %v883, %v877
    %s885 = sld [smem:[#allocation9 + $0x2d]]
    %v886 = vstv %s885
    %v887 = vsel %vm881, %v886, %v880
    %vm888 = vcmp.eq.s32.totalorder %v565, 46
    %s889 = sld [smem:[#allocation7 + $0x2e]]
    %v890 = vstv %s889
    %v891 = vsel %vm888, %v890, %v884
    %s892 = sld [smem:[#allocation9 + $0x2e]]
    %v893 = vstv %s892
    %v894 = vsel %vm888, %v893, %v887
    %vm895 = vcmp.eq.s32.totalorder %v565, 47
    %s896 = sld [smem:[#allocation7 + $0x2f]]
    %v897 = vstv %s896
    %v898 = vsel %vm895, %v897, %v891
    %s899 = sld [smem:[#allocation9 + $0x2f]]
    %v900 = vstv %s899
    %v901 = vsel %vm895, %v900, %v894
    %vm902 = vcmp.eq.s32.totalorder %v565, 48
    %s903 = sld [smem:[#allocation7 + $0x30]]
    %v904 = vstv %s903
    %v905 = vsel %vm902, %v904, %v898
    %s906 = sld [smem:[#allocation9 + $0x30]]
    %v907 = vstv %s906
    %v908 = vsel %vm902, %v907, %v901
    %vm909 = vcmp.eq.s32.totalorder %v565, 49
    %s910 = sld [smem:[#allocation7 + $0x31]]
    %v911 = vstv %s910
    %v912 = vsel %vm909, %v911, %v905
    %s913 = sld [smem:[#allocation9 + $0x31]]
    %v914 = vstv %s913
    %v915 = vsel %vm909, %v914, %v908
    %vm916 = vcmp.eq.s32.totalorder %v565, 50
    %s917 = sld [smem:[#allocation7 + $0x32]]
    %v918 = vstv %s917
    %v919 = vsel %vm916, %v918, %v912
    %s920 = sld [smem:[#allocation9 + $0x32]]
    %v921 = vstv %s920
    %v922 = vsel %vm916, %v921, %v915
    %vm923 = vcmp.eq.s32.totalorder %v565, 51
    %s924 = sld [smem:[#allocation7 + $0x33]]
    %v925 = vstv %s924
    %v926 = vsel %vm923, %v925, %v919
    %s927 = sld [smem:[#allocation9 + $0x33]]
    %v928 = vstv %s927
    %v929 = vsel %vm923, %v928, %v922
    %vm930 = vcmp.eq.s32.totalorder %v565, 52
    %s931 = sld [smem:[#allocation7 + $0x34]]
    %v932 = vstv %s931
    %v933 = vsel %vm930, %v932, %v926
    %s934 = sld [smem:[#allocation9 + $0x34]]
    %v935 = vstv %s934
    %v936 = vsel %vm930, %v935, %v929
    %vm937 = vcmp.eq.s32.totalorder %v565, 53
    %s938 = sld [smem:[#allocation7 + $0x35]]
    %v939 = vstv %s938
    %v940 = vsel %vm937, %v939, %v933
    %s941 = sld [smem:[#allocation9 + $0x35]]
    %v942 = vstv %s941
    %v943 = vsel %vm937, %v942, %v936
    %vm944 = vcmp.eq.s32.totalorder %v565, 54
    %s945 = sld [smem:[#allocation7 + $0x36]]
    %v946 = vstv %s945
    %v947 = vsel %vm944, %v946, %v940
    %s948 = sld [smem:[#allocation9 + $0x36]]
    %v949 = vstv %s948
    %v950 = vsel %vm944, %v949, %v943
    %vm951 = vcmp.eq.s32.totalorder %v565, 55
    %s952 = sld [smem:[#allocation7 + $0x37]]
    %v953 = vstv %s952
    %v954 = vsel %vm951, %v953, %v947
    %s955 = sld [smem:[#allocation9 + $0x37]]
    %v956 = vstv %s955
    %v957 = vsel %vm951, %v956, %v950
    %vm958 = vcmp.eq.s32.totalorder %v565, 56
    %s959 = sld [smem:[#allocation7 + $0x38]]
    %v960 = vstv %s959
    %v961 = vsel %vm958, %v960, %v954
    %s962 = sld [smem:[#allocation9 + $0x38]]
    %v963 = vstv %s962
    %v964 = vsel %vm958, %v963, %v957
    %vm965 = vcmp.eq.s32.totalorder %v565, 57
    %s966 = sld [smem:[#allocation7 + $0x39]]
    %v967 = vstv %s966
    %v968 = vsel %vm965, %v967, %v961
    %s969 = sld [smem:[#allocation9 + $0x39]]
    %v970 = vstv %s969
    %v971 = vsel %vm965, %v970, %v964
    %vm972 = vcmp.eq.s32.totalorder %v565, 58
    %s973 = sld [smem:[#allocation7 + $0x3a]]
    %v974 = vstv %s973
    %v975 = vsel %vm972, %v974, %v968
    %s976 = sld [smem:[#allocation9 + $0x3a]]
    %v977 = vstv %s976
    %v978 = vsel %vm972, %v977, %v971
    %vm979 = vcmp.eq.s32.totalorder %v565, 59
    %s980 = sld [smem:[#allocation7 + $0x3b]]
    %v981 = vstv %s980
    %v982 = vsel %vm979, %v981, %v975
    %s983 = sld [smem:[#allocation9 + $0x3b]]
    %v984 = vstv %s983
    %v985 = vsel %vm979, %v984, %v978
    %vm986 = vcmp.eq.s32.totalorder %v565, 60
    %s987 = sld [smem:[#allocation7 + $0x3c]]
    %v988 = vstv %s987
    %v989 = vsel %vm986, %v988, %v982
    %s990 = sld [smem:[#allocation9 + $0x3c]]
    %v991 = vstv %s990
    %v992 = vsel %vm986, %v991, %v985
    %vm993 = vcmp.eq.s32.totalorder %v565, 61
    %s994 = sld [smem:[#allocation7 + $0x3d]]
    %v995 = vstv %s994
    %v996 = vsel %vm993, %v995, %v989
    %s997 = sld [smem:[#allocation9 + $0x3d]]
    %v998 = vstv %s997
    %v999 = vsel %vm993, %v998, %v992
    %vm1000 = vcmp.eq.s32.totalorder %v565, 62
    %s1001 = sld [smem:[#allocation7 + $0x3e]]
    %v1002 = vstv %s1001
    %v1003 = vsel %vm1000, %v1002, %v996
    %s1004 = sld [smem:[#allocation9 + $0x3e]]
    %v1005 = vstv %s1004
    %v1006 = vsel %vm1000, %v1005, %v999
    %vm1007 = vcmp.eq.s32.totalorder %v565, 63
    %s1008 = sld [smem:[#allocation7 + $0x3f]]
    %v1009 = vstv %s1008
    %v1010 = vsel %vm1007, %v1009, %v1003
    %s1011 = sld [smem:[#allocation9 + $0x3f]]
    %v1012 = vstv %s1011
    %v1013 = vsel %vm1007, %v1012, %v1006
    %vm1014 = vcmp.eq.s32.totalorder %v565, 64
    %s1015 = sld [smem:[#allocation7 + $0x40]]
    %v1016 = vstv %s1015
    %v1017 = vsel %vm1014, %v1016, %v1010
    %s1018 = sld [smem:[#allocation9 + $0x40]]
    %v1019 = vstv %s1018
    %v1020 = vsel %vm1014, %v1019, %v1013
    %vm1021 = vcmp.eq.s32.totalorder %v565, 65
    %s1022 = sld [smem:[#allocation7 + $0x41]]
    %v1023 = vstv %s1022
    %v1024 = vsel %vm1021, %v1023, %v1017
    %s1025 = sld [smem:[#allocation9 + $0x41]]
    %v1026 = vstv %s1025
    %v1027 = vsel %vm1021, %v1026, %v1020
    %vm1028 = vcmp.eq.s32.totalorder %v565, 66
    %s1029 = sld [smem:[#allocation7 + $0x42]]
    %v1030 = vstv %s1029
    %v1031 = vsel %vm1028, %v1030, %v1024
    %s1032 = sld [smem:[#allocation9 + $0x42]]
    %v1033 = vstv %s1032
    %v1034 = vsel %vm1028, %v1033, %v1027
    %vm1035 = vcmp.eq.s32.totalorder %v565, 67
    %s1036 = sld [smem:[#allocation7 + $0x43]]
    %v1037 = vstv %s1036
    %v1038 = vsel %vm1035, %v1037, %v1031
    %s1039 = sld [smem:[#allocation9 + $0x43]]
    %v1040 = vstv %s1039
    %v1041 = vsel %vm1035, %v1040, %v1034
    %vm1042 = vcmp.eq.s32.totalorder %v565, 68
    %s1043 = sld [smem:[#allocation7 + $0x44]]
    %v1044 = vstv %s1043
    %v1045 = vsel %vm1042, %v1044, %v1038
    %s1046 = sld [smem:[#allocation9 + $0x44]]
    %v1047 = vstv %s1046
    %v1048 = vsel %vm1042, %v1047, %v1041
    %vm1049 = vcmp.eq.s32.totalorder %v565, 69
    %s1050 = sld [smem:[#allocation7 + $0x45]]
    %v1051 = vstv %s1050
    %v1052 = vsel %vm1049, %v1051, %v1045
    %s1053 = sld [smem:[#allocation9 + $0x45]]
    %v1054 = vstv %s1053
    %v1055 = vsel %vm1049, %v1054, %v1048
    %vm1056 = vcmp.eq.s32.totalorder %v565, 70
    %s1057 = sld [smem:[#allocation7 + $0x46]]
    %v1058 = vstv %s1057
    %v1059 = vsel %vm1056, %v1058, %v1052
    %s1060 = sld [smem:[#allocation9 + $0x46]]
    %v1061 = vstv %s1060
    %v1062 = vsel %vm1056, %v1061, %v1055
    %vm1063 = vcmp.eq.s32.totalorder %v565, 71
    %s1064 = sld [smem:[#allocation7 + $0x47]]
    %v1065 = vstv %s1064
    %v1066 = vsel %vm1063, %v1065, %v1059
    %s1067 = sld [smem:[#allocation9 + $0x47]]
    %v1068 = vstv %s1067
    %v1069 = vsel %vm1063, %v1068, %v1062
    %vm1070 = vcmp.eq.s32.totalorder %v565, 72
    %s1071 = sld [smem:[#allocation7 + $0x48]]
    %v1072 = vstv %s1071
    %v1073 = vsel %vm1070, %v1072, %v1066
    %s1074 = sld [smem:[#allocation9 + $0x48]]
    %v1075 = vstv %s1074
    %v1076 = vsel %vm1070, %v1075, %v1069
    %vm1077 = vcmp.eq.s32.totalorder %v565, 73
    %s1078 = sld [smem:[#allocation7 + $0x49]]
    %v1079 = vstv %s1078
    %v1080 = vsel %vm1077, %v1079, %v1073
    %s1081 = sld [smem:[#allocation9 + $0x49]]
    %v1082 = vstv %s1081
    %v1083 = vsel %vm1077, %v1082, %v1076
    %vm1084 = vcmp.eq.s32.totalorder %v565, 74
    %s1085 = sld [smem:[#allocation7 + $0x4a]]
    %v1086 = vstv %s1085
    %v1087 = vsel %vm1084, %v1086, %v1080
    %s1088 = sld [smem:[#allocation9 + $0x4a]]
    %v1089 = vstv %s1088
    %v1090 = vsel %vm1084, %v1089, %v1083
    %vm1091 = vcmp.eq.s32.totalorder %v565, 75
    %s1092 = sld [smem:[#allocation7 + $0x4b]]
    %v1093 = vstv %s1092
    %v1094 = vsel %vm1091, %v1093, %v1087
    %s1095 = sld [smem:[#allocation9 + $0x4b]]
    %v1096 = vstv %s1095
    %v1097 = vsel %vm1091, %v1096, %v1090
    %vm1098 = vcmp.eq.s32.totalorder %v565, 76
    %s1099 = sld [smem:[#allocation7 + $0x4c]]
    %v1100 = vstv %s1099
    %v1101 = vsel %vm1098, %v1100, %v1094
    %s1102 = sld [smem:[#allocation9 + $0x4c]]
    %v1103 = vstv %s1102
    %v1104 = vsel %vm1098, %v1103, %v1097
    %vm1105 = vcmp.eq.s32.totalorder %v565, 77
    %s1106 = sld [smem:[#allocation7 + $0x4d]]
    %v1107 = vstv %s1106
    %v1108 = vsel %vm1105, %v1107, %v1101
    %s1109 = sld [smem:[#allocation9 + $0x4d]]
    %v1110 = vstv %s1109
    %v1111 = vsel %vm1105, %v1110, %v1104
    %vm1112 = vcmp.eq.s32.totalorder %v565, 78
    %s1113 = sld [smem:[#allocation7 + $0x4e]]
    %v1114 = vstv %s1113
    %v1115 = vsel %vm1112, %v1114, %v1108
    %s1116 = sld [smem:[#allocation9 + $0x4e]]
    %v1117 = vstv %s1116
    %v1118 = vsel %vm1112, %v1117, %v1111
    %vm1119 = vcmp.eq.s32.totalorder %v565, 79
    %s1120 = sld [smem:[#allocation7 + $0x4f]]
    %v1121 = vstv %s1120
    %v1122 = vsel %vm1119, %v1121, %v1115
    %s1123 = sld [smem:[#allocation9 + $0x4f]]
    %v1124 = vstv %s1123
    %v1125 = vsel %vm1119, %v1124, %v1118
    %vm1126 = vcmp.eq.s32.totalorder %v565, 80
    %s1127 = sld [smem:[#allocation7 + $0x50]]
    %v1128 = vstv %s1127
    %v1129 = vsel %vm1126, %v1128, %v1122
    %s1130 = sld [smem:[#allocation9 + $0x50]]
    %v1131 = vstv %s1130
    %v1132 = vsel %vm1126, %v1131, %v1125
    %vm1133 = vcmp.eq.s32.totalorder %v565, 81
    %s1134 = sld [smem:[#allocation7 + $0x51]]
    %v1135 = vstv %s1134
    %v1136 = vsel %vm1133, %v1135, %v1129
    %s1137 = sld [smem:[#allocation9 + $0x51]]
    %v1138 = vstv %s1137
    %v1139 = vsel %vm1133, %v1138, %v1132
    %vm1140 = vcmp.eq.s32.totalorder %v565, 82
    %s1141 = sld [smem:[#allocation7 + $0x52]]
    %v1142 = vstv %s1141
    %v1143 = vsel %vm1140, %v1142, %v1136
    %s1144 = sld [smem:[#allocation9 + $0x52]]
    %v1145 = vstv %s1144
    %v1146 = vsel %vm1140, %v1145, %v1139
    %vm1147 = vcmp.eq.s32.totalorder %v565, 83
    %s1148 = sld [smem:[#allocation7 + $0x53]]
    %v1149 = vstv %s1148
    %v1150 = vsel %vm1147, %v1149, %v1143
    %s1151 = sld [smem:[#allocation9 + $0x53]]
    %v1152 = vstv %s1151
    %v1153 = vsel %vm1147, %v1152, %v1146
    %vm1154 = vcmp.eq.s32.totalorder %v565, 84
    %s1155 = sld [smem:[#allocation7 + $0x54]]
    %v1156 = vstv %s1155
    %v1157 = vsel %vm1154, %v1156, %v1150
    %s1158 = sld [smem:[#allocation9 + $0x54]]
    %v1159 = vstv %s1158
    %v1160 = vsel %vm1154, %v1159, %v1153
    %vm1161 = vcmp.eq.s32.totalorder %v565, 85
    %s1162 = sld [smem:[#allocation7 + $0x55]]
    %v1163 = vstv %s1162
    %v1164 = vsel %vm1161, %v1163, %v1157
    %s1165 = sld [smem:[#allocation9 + $0x55]]
    %v1166 = vstv %s1165
    %v1167 = vsel %vm1161, %v1166, %v1160
    %vm1168 = vcmp.eq.s32.totalorder %v565, 86
    %s1169 = sld [smem:[#allocation7 + $0x56]]
    %v1170 = vstv %s1169
    %v1171 = vsel %vm1168, %v1170, %v1164
    %s1172 = sld [smem:[#allocation9 + $0x56]]
    %v1173 = vstv %s1172
    %v1174 = vsel %vm1168, %v1173, %v1167
    %vm1175 = vcmp.eq.s32.totalorder %v565, 87
    %s1176 = sld [smem:[#allocation7 + $0x57]]
    %v1177 = vstv %s1176
    %v1178 = vsel %vm1175, %v1177, %v1171
    %s1179 = sld [smem:[#allocation9 + $0x57]]
    %v1180 = vstv %s1179
    %v1181 = vsel %vm1175, %v1180, %v1174
    %vm1182 = vcmp.eq.s32.totalorder %v565, 88
    %s1183 = sld [smem:[#allocation7 + $0x58]]
    %v1184 = vstv %s1183
    %v1185 = vsel %vm1182, %v1184, %v1178
    %s1186 = sld [smem:[#allocation9 + $0x58]]
    %v1187 = vstv %s1186
    %v1188 = vsel %vm1182, %v1187, %v1181
    %vm1189 = vcmp.eq.s32.totalorder %v565, 89
    %s1190 = sld [smem:[#allocation7 + $0x59]]
    %v1191 = vstv %s1190
    %v1192 = vsel %vm1189, %v1191, %v1185
    %s1193 = sld [smem:[#allocation9 + $0x59]]
    %v1194 = vstv %s1193
    %v1195 = vsel %vm1189, %v1194, %v1188
    %vm1196 = vcmp.eq.s32.totalorder %v565, 90
    %s1197 = sld [smem:[#allocation7 + $0x5a]]
    %v1198 = vstv %s1197
    %v1199 = vsel %vm1196, %v1198, %v1192
    %s1200 = sld [smem:[#allocation9 + $0x5a]]
    %v1201 = vstv %s1200
    %v1202 = vsel %vm1196, %v1201, %v1195
    %vm1203 = vcmp.eq.s32.totalorder %v565, 91
    %s1204 = sld [smem:[#allocation7 + $0x5b]]
    %v1205 = vstv %s1204
    %v1206 = vsel %vm1203, %v1205, %v1199
    %s1207 = sld [smem:[#allocation9 + $0x5b]]
    %v1208 = vstv %s1207
    %v1209 = vsel %vm1203, %v1208, %v1202
    %vm1210 = vcmp.eq.s32.totalorder %v565, 92
    %s1211 = sld [smem:[#allocation7 + $0x5c]]
    %v1212 = vstv %s1211
    %v1213 = vsel %vm1210, %v1212, %v1206
    %s1214 = sld [smem:[#allocation9 + $0x5c]]
    %v1215 = vstv %s1214
    %v1216 = vsel %vm1210, %v1215, %v1209
    %vm1217 = vcmp.eq.s32.totalorder %v565, 93
    %s1218 = sld [smem:[#allocation7 + $0x5d]]
    %v1219 = vstv %s1218
    %v1220 = vsel %vm1217, %v1219, %v1213
    %s1221 = sld [smem:[#allocation9 + $0x5d]]
    %v1222 = vstv %s1221
    %v1223 = vsel %vm1217, %v1222, %v1216
    %vm1224 = vcmp.eq.s32.totalorder %v565, 94
    %s1225 = sld [smem:[#allocation7 + $0x5e]]
    %v1226 = vstv %s1225
    %v1227 = vsel %vm1224, %v1226, %v1220
    %s1228 = sld [smem:[#allocation9 + $0x5e]]
    %v1229 = vstv %s1228
    %v1230 = vsel %vm1224, %v1229, %v1223
    %vm1231 = vcmp.eq.s32.totalorder %v565, 95
    %s1232 = sld [smem:[#allocation7 + $0x5f]]
    %v1233 = vstv %s1232
    %v1234 = vsel %vm1231, %v1233, %v1227
    %s1235 = sld [smem:[#allocation9 + $0x5f]]
    %v1236 = vstv %s1235
    %v1237 = vsel %vm1231, %v1236, %v1230
    %vm1238 = vcmp.eq.s32.totalorder %v565, 96
    %s1239 = sld [smem:[#allocation7 + $0x60]]
    %v1240 = vstv %s1239
    %v1241 = vsel %vm1238, %v1240, %v1234
    %s1242 = sld [smem:[#allocation9 + $0x60]]
    %v1243 = vstv %s1242
    %v1244 = vsel %vm1238, %v1243, %v1237
    %vm1245 = vcmp.eq.s32.totalorder %v565, 97
    %s1246 = sld [smem:[#allocation7 + $0x61]]
    %v1247 = vstv %s1246
    %v1248 = vsel %vm1245, %v1247, %v1241
    %s1249 = sld [smem:[#allocation9 + $0x61]]
    %v1250 = vstv %s1249
    %v1251 = vsel %vm1245, %v1250, %v1244
    %vm1252 = vcmp.eq.s32.totalorder %v565, 98
    %s1253 = sld [smem:[#allocation7 + $0x62]]
    %v1254 = vstv %s1253
    %v1255 = vsel %vm1252, %v1254, %v1248
    %s1256 = sld [smem:[#allocation9 + $0x62]]
    %v1257 = vstv %s1256
    %v1258 = vsel %vm1252, %v1257, %v1251
    %vm1259 = vcmp.eq.s32.totalorder %v565, 99
    %s1260 = sld [smem:[#allocation7 + $0x63]]
    %v1261 = vstv %s1260
    %v1262 = vsel %vm1259, %v1261, %v1255
    %s1263 = sld [smem:[#allocation9 + $0x63]]
    %v1264 = vstv %s1263
    %v1265 = vsel %vm1259, %v1264, %v1258
    %vm1266 = vcmp.eq.s32.totalorder %v565, 100
    %s1267 = sld [smem:[#allocation7 + $0x64]]
    %v1268 = vstv %s1267
    %v1269 = vsel %vm1266, %v1268, %v1262
    %s1270 = sld [smem:[#allocation9 + $0x64]]
    %v1271 = vstv %s1270
    %v1272 = vsel %vm1266, %v1271, %v1265
    %v1273 = vmul.f32 %v66, %v1269
    %v1274 = vadd.f32 %v1273, %v1272
    %1275 = vst [vmem:[#allocation10] sm:$0xff] %v1274
    // Predicated region
    $region34: #{tpu_custom_call.1} parent=1 // pred_check
      _
    $region35: #{tpu_custom_call.1} parent=1 // pred_check_branch
      %1277 = sbr.rel (0) target = $region37
    $region36: #{tpu_custom_call.1} parent=1 // pred_region
      %s1279 = ssub.s32 128, 128
      %1280 = vsyncadd [#allocation4], %s1279
      %s1282 = sshll.u32 [#allocation10], 4
      %s1283 = int_to_ptr.vmem [resolvable:$true] %s1282
      %1285 = dma.vmem_to_hbm [thread:$0]  %s1283, 128, %s4, [#allocation4]
    $region37: #{tpu_custom_call.1} parent=1 // pred_fallthru
      _
    // Predicated region
    $region38: #{tpu_custom_call.1} parent=1 // pred_check
      _
    $region39: #{tpu_custom_call.1} parent=1 // pred_check_branch
      %1287 = sbr.rel (0) target = $region41
    $region40: #{tpu_custom_call.1} parent=1 // pred_region
      %1288 = dma.done [#allocation4], 128
    $region41: #{tpu_custom_call.1} parent=1 // pred_fallthru
      _
    %1289 = vsyncpa [#allocation3], 1
    %1290 = vsyncpa [#allocation4], 1
    %1291 = vsyncpa [#allocation5], 1
    %1292 = vsyncpa [#allocation8], 1

</llo_original>
